<compile_context>
chip_gen: v6e
topology: v6e:2x2x1
jax: 0.10.0
libtpu: 0.0.40
codegen_flags: <defaults>
</compile_context>

<pallas_src>
import math
from functools import partial

import jax
import jax.numpy as jnp
from jax import lax
from jax.experimental import pallas as pl
from jax.experimental.pallas import tpu as pltpu


def _local_xattn_kernel(sr_ref, rf_ref,
                        g_sr_ref, b_sr_ref, g_rf_ref, b_rf_ref,
                        wq_ref, bq_ref, wkv_ref, wo_ref, bo_ref,
                        out_ref, o_scr,
                        *, num_heads, compute_dtype):
    TB, S, C = sr_ref.shape
    d = C // num_heads
    R = TB * S

    # Flatten the TB windows into one (TB*S, C) slab (leading-dim collapse is a
    # free relayout) so LayerNorm / cosine / projections run as large ops.
    sr = sr_ref[...].astype(jnp.float32).reshape(R, C)
    rf = rf_ref[...].astype(jnp.float32).reshape(R, C)

    # --- cosine attention map (per token over channels), F.normalize semantics ---
    eps = 1e-8
    srf = jnp.sum(sr * rf, axis=-1, keepdims=True)
    inv_sr = lax.rsqrt(jnp.maximum(jnp.sum(sr * sr, axis=-1, keepdims=True), eps * eps))
    inv_rf = lax.rsqrt(jnp.maximum(jnp.sum(rf * rf, axis=-1, keepdims=True), eps * eps))
    a = (srf * inv_sr * inv_rf + 1.0) * 0.5              # (R, 1)
    # NOTE: default forward has sim_lamuda=1 (an int) -> no clip/scale branch.

    # --- LayerNorm over C (eps = 1e-5), elementwise math stays f32 ---
    def layernorm(x, g, b):
        mu = jnp.mean(x, axis=-1, keepdims=True)
        xc = x - mu
        var = jnp.mean(xc * xc, axis=-1, keepdims=True)
        return xc * lax.rsqrt(var + 1e-5) * g + b

    q_in = layernorm(sr, g_sr_ref[...], b_sr_ref[...]).astype(compute_dtype)
    kv_in = layernorm(rf, g_rf_ref[...], b_rf_ref[...]).astype(compute_dtype)

    # --- head-fused projections (scale folded into wq/bq; bk dropped; bv folded
    #     into bo on the host) ---
    q = (jnp.dot(q_in, wq_ref[...], preferred_element_type=jnp.float32)
         + bq_ref[...]).astype(compute_dtype)                              # (R, C)
    kv = jnp.dot(kv_in, wkv_ref[...],
                 preferred_element_type=jnp.float32).astype(compute_dtype)  # (R, 2C)

    # --- multi-head cross attention, statically unrolled over heads ---
    # Each head is a TB-batched 3-D dot_general; the per-head output goes into a
    # VMEM scratch at a static lane offset so no wide accumulator is carried in
    # vregs across iterations.
    # TODO(synk): a single (TB,H)-batched dot_general (and lane-packing 128//C
    # windows per vreg) needs a lanes->batch 4-D relayout Mosaic doesn't lower
    # reliably; revisit when supported.
    for h in range(num_heads):
        qh = q[:, h * d:(h + 1) * d].reshape(TB, S, d)
        kh = kv[:, h * d:(h + 1) * d].reshape(TB, S, d)
        vh = kv[:, C + h * d:C + (h + 1) * d].reshape(TB, S, d)
        s = lax.dot_general(qh, kh, (((2,), (2,)), ((0,), (0,))),
                            preferred_element_type=jnp.float32)            # (TB,S,S)
        s = s - jnp.max(s, axis=-1, keepdims=True)
        p = jnp.exp(s)
        p = p * pl.reciprocal(jnp.sum(p, axis=-1, keepdims=True), approx=True)
        oh = lax.dot_general(p.astype(compute_dtype), vh,
                             (((2,), (1,)), ((0,), (0,))),
                             preferred_element_type=jnp.float32)            # (TB,S,d)
        o_scr[:, :, h * d:(h + 1) * d] = oh

    # --- single fused output projection + blend ---
    o_all = o_scr[...].reshape(R, C).astype(compute_dtype)
    fused = jnp.dot(o_all, wo_ref[...],
                    preferred_element_type=jnp.float32) + bo_ref[...]       # (R, C)
    out = sr + a * (fused - sr)          # == a*fused + (1-a)*sr, one fewer multiply
    # TODO(synk): pack 128//C windows along the lane axis (block-diagonal weights)
    # so elementwise ops and this store are lane-dense instead of C/128 masked.
    out_ref[...] = out.reshape(TB, S, C).astype(out_ref.dtype)


def _to_windows(x, ws):
    # x: (B, C, H, W) NCHW -> (B*N, ws*ws, C); matches F.unfold(ks=ws, stride=ws)
    # then .transpose(1,2).reshape(B*N, C, ws*ws).permute(0,2,1)
    B, C, H, W = x.shape
    nH, nW = H // ws, W // ws
    x = x.reshape(B, C, nH, ws, nW, ws)
    x = x.transpose(0, 2, 4, 3, 5, 1)          # (B, nH, nW, kh, kw, C)
    return x.reshape(B * nH * nW, ws * ws, C)


def _from_windows(xw, B, C, H, W, ws):
    # inverse of _to_windows (== F.fold for non-overlapping windows)
    nH, nW = H // ws, W // ws
    x = xw.reshape(B, nH, nW, ws, ws, C)
    x = x.transpose(0, 5, 1, 3, 2, 4)          # (B, C, nH, kh, nW, kw)
    return x.reshape(B, C, H, W)


def _vmem_capacity_bytes():
    try:
        return int(pltpu.get_tpu_info().vmem_capacity_bytes)
    except Exception:
        return 64 * 1024 * 1024                # conservative (v7x-sized) fallback


def _pick_block_windows(BN, S, C, itemsize=4):
    # Cap rows so in-kernel live slabs stay near the vreg file (no chronic spills),
    # keep double-buffered window blocks inside a generation-aware VMEM budget, and
    # prefer an even (>=4) number of grid steps so both v7x TensorCores get work.
    rows_cap = max(1, 1024 // S)
    per_window = 6 * S * C * itemsize          # (2 in + 1 out) x double buffering
    budget = max(8 * 1024 * 1024, min(_vmem_capacity_bytes() // 4, 32 * 1024 * 1024))
    cap = max(1, min(rows_cap, budget // per_window, BN))

    def best(min_steps, require_even):
        b = 0
        for tb in range(1, cap + 1):
            if BN % tb:
                continue
            steps = BN // tb
            if steps < min_steps or (require_even and steps % 2):
                continue
            b = tb
        return b

    for min_steps, even in ((4, True), (2, True), (2, False), (1, False)):
        tb = best(min_steps, even)
        if tb:
            return tb
    return 1


def _pack_params(params, num_heads, compute_dtype):
    """Logical params -> kernel layout: head-fused weights, scale/bias folds."""
    (g_sr, b_sr, g_rf, b_rf, wq, wk, wv, bq, bk, bv, wo, bo) = params
    C = wq.shape[0]
    d = C // num_heads
    scale = 1.0 / math.sqrt(d)
    f32 = jnp.float32
    wq_s = (wq.astype(f32) * scale).astype(compute_dtype)          # (C, C), scale folded (f32 fold, then cast)
    bq_s = bq.astype(f32) * scale                                  # (1, C)
    wkv = jnp.concatenate([wk, wv], axis=1).astype(compute_dtype)  # (C, 2C)
    # bk dropped exactly (constant along the key axis -> softmax-invariant);
    # bv folded: softmax rows sum to 1, so (p @ bv) @ wo == bv @ wo.
    bo_eff = bo.astype(f32) + bv.astype(f32) @ wo.astype(f32)      # (1, C)
    wo_c = wo.astype(compute_dtype)
    return (g_sr.astype(f32), b_sr.astype(f32), g_rf.astype(f32), b_rf.astype(f32),
            wq_s, bq_s, wkv, wo_c, bo_eff)


def local_cross_attention(sr, ref, params, window_size=8, num_heads=4,
                          compute_dtype=jnp.bfloat16, block_windows=None,
                          io_dtype=None):
    B, C, H, W = sr.shape
    ws = window_size
    assert H % ws == 0 and W % ws == 0
    assert C % num_heads == 0
    nH, nW = H // ws, W // ws
    S = ws * ws
    BN = B * nH * nW

    # TODO(synk): for v5e, block directly on the NCHW tensors and do the
    # unfold/fold reorder in-kernel to remove this extra HBM round trip.
    srw = _to_windows(sr, ws)
    refw = _to_windows(ref, ws)
    if io_dtype is not None:                 # e.g. bf16 windows on v5e (halves DMA)
        srw = srw.astype(io_dtype)
        refw = refw.astype(io_dtype)
    itemsize = jnp.dtype(srw.dtype).itemsize

    TB = (block_windows if block_windows is not None
          else _pick_block_windows(BN, S, C, itemsize))
    assert BN % TB == 0
    grid = (BN // TB,)

    (g_sr, b_sr, g_rf, b_rf,
     wq_s, bq_s, wkv, wo_c, bo_eff) = _pack_params(params, num_heads, compute_dtype)

    win_spec = pl.BlockSpec((TB, S, C), lambda i: (i, 0, 0))
    vec_spec = pl.BlockSpec((1, C), lambda i: (0, 0))
    wq_spec = pl.BlockSpec((C, C), lambda i: (0, 0))
    wkv_spec = pl.BlockSpec((C, 2 * C), lambda i: (0, 0))
    # TODO(synk): sweep pipeline_mode=pl.Buffered(3) on win_spec if xprof shows
    # exposed per-step DMA after these fixes.

    flops = int(BN * (8 * S * C * C + 4 * S * S * C))
    transcendentals = int(BN * (num_heads * S * S + 4 * S))
    bytes_accessed = int(3 * BN * S * C * itemsize + (3 * C * C + 3 * C) * 4)

    vmem_limit = int(min(max(_vmem_capacity_bytes() * 3 // 4, 32 * 2**20), 96 * 2**20))

    out_w = pl.pallas_call(
        partial(_local_xattn_kernel, num_heads=num_heads, compute_dtype=compute_dtype),
        out_shape=jax.ShapeDtypeStruct((BN, S, C), srw.dtype),
        grid=grid,
        in_specs=[win_spec, win_spec,
                  vec_spec, vec_spec, vec_spec, vec_spec,
                  wq_spec, vec_spec, wkv_spec, wq_spec, vec_spec],
        out_specs=win_spec,
        scratch_shapes=[pltpu.VMEM((TB, S, C), jnp.float32)],
        compiler_params=pltpu.CompilerParams(
            dimension_semantics=("parallel",),
            vmem_limit_bytes=vmem_limit),
        cost_estimate=pl.CostEstimate(flops=flops,
                                      transcendentals=transcendentals,
                                      bytes_accessed=bytes_accessed),
    )(srw, refw, g_sr, b_sr, g_rf, b_rf, wq_s, bq_s, wkv, wo_c, bo_eff)

    out = _from_windows(out_w, B, C, H, W, ws)
    return out.astype(sr.dtype)


def init_params(key, dim):
    # deterministic synthetic init; mirrors nn.MultiheadAttention / nn.LayerNorm shapes
    k0, k1, k2 = jax.random.split(key, 3)
    g_sr = jnp.ones((1, dim), jnp.float32)
    b_sr = jnp.zeros((1, dim), jnp.float32)
    g_rf = jnp.ones((1, dim), jnp.float32)
    b_rf = jnp.zeros((1, dim), jnp.float32)
    in_proj_w = 0.05 * jax.random.normal(k0, (3 * dim, dim), jnp.float32)   # (3C, C)
    in_proj_b = 0.05 * jax.random.normal(k1, (3 * dim,), jnp.float32)
    out_proj_w = 0.05 * jax.random.normal(k2, (dim, dim), jnp.float32)      # (C, C)
    out_proj_b = jnp.zeros((dim,), jnp.float32)
    # pre-transpose so math is x @ W (PyTorch does x @ W^T)
    wq = in_proj_w[:dim].T
    wk = in_proj_w[dim:2 * dim].T
    wv = in_proj_w[2 * dim:].T
    bq = in_proj_b[:dim].reshape(1, dim)
    bk = in_proj_b[dim:2 * dim].reshape(1, dim)
    bv = in_proj_b[2 * dim:].reshape(1, dim)
    wo = out_proj_w.T
    bo = out_proj_b.reshape(1, dim)
    return (g_sr, b_sr, g_rf, b_rf, wq, wk, wv, bq, bk, bv, wo, bo)


def _reference(sr, ref, params, window_size, num_heads):
    # pure-JAX f32 reference of the same math (with un-folded bk/bv) for a sanity check
    B, C, H, W = sr.shape
    ws = window_size
    S = ws * ws
    d = C // num_heads
    (g_sr, b_sr, g_rf, b_rf, wq, wk, wv, bq, bk, bv, wo, bo) = params

    srw = _to_windows(sr, ws).astype(jnp.float32)     # (BN, S, C)
    refw = _to_windows(ref, ws).astype(jnp.float32)

    eps = 1e-8
    srn = srw / jnp.maximum(jnp.linalg.norm(srw, axis=-1, keepdims=True), eps)
    rfn = refw / jnp.maximum(jnp.linalg.norm(refw, axis=-1, keepdims=True), eps)
    a = (jnp.sum(srn * rfn, axis=-1, keepdims=True) + 1.0) * 0.5

    def ln(x, g, b):
        mu = jnp.mean(x, -1, keepdims=True)
        var = jnp.mean((x - mu) ** 2, -1, keepdims=True)
        return (x - mu) / jnp.sqrt(var + 1e-5) * g + b

    q = ln(srw, g_sr[0], b_sr[0]) @ wq + bq[0]
    k = ln(refw, g_rf[0], b_rf[0]) @ wk + bk[0]
    v = ln(refw, g_rf[0], b_rf[0]) @ wv + bv[0]
    BN = q.shape[0]
    qh = q.reshape(BN, S, num_heads, d).transpose(0, 2, 1, 3)
    kh = k.reshape(BN, S, num_heads, d).transpose(0, 2, 1, 3)
    vh = v.reshape(BN, S, num_heads, d).transpose(0, 2, 1, 3)
    s = jnp.einsum('bhqd,bhkd->bhqk', qh, kh) / math.sqrt(d)
    p = jax.nn.softmax(s, axis=-1)
    o = jnp.einsum('bhqk,bhkd->bhqd', p, vh).transpose(0, 2, 1, 3).reshape(BN, S, C)
    fused = o @ wo + bo[0]
    outw = a * fused + (1.0 - a) * srw
    return _from_windows(outw.astype(sr.dtype), B, C, H, W, ws)


if __name__ == "__main__":
    B, C, H, W = 2, 32, 16, 16
    window_size, num_heads = 8, 4

    key = jax.random.PRNGKey(0)
    k_sr, k_ref, k_par = jax.random.split(key, 3)
    sr = jax.random.normal(k_sr, (B, C, H, W), jnp.float32)
    ref = jax.random.normal(k_ref, (B, C, H, W), jnp.float32)
    params = init_params(k_par, C)

    fn = jax.jit(partial(local_cross_attention,
                         window_size=window_size, num_heads=num_heads))
    out = fn(sr, ref, params)
    out = jax.block_until_ready(out)

    ref_out = _reference(sr, ref, params, window_size, num_heads)
    assert out.shape == (B, C, H, W)
    # bf16-at-the-MXU + approx reciprocal softmax -> slightly looser tolerance than
    # pure f32 (accumulation stays f32 so the drift is small).
    assert jnp.allclose(out, ref_out, rtol=1e-2, atol=1e-2), "mismatch vs JAX reference"

    print("KERNEL_OK")
</pallas_src>

<mosaic_0001>
module attributes {stable_mosaic.version = 11 : i64} {
  func.func @_local_xattn_kernel(%arg0: i32, %arg1: memref<2x64x32xf32, #tpu.memory_space<vmem>>, %arg2: memref<2x64x32xf32, #tpu.memory_space<vmem>>, %arg3: memref<1x32xf32, #tpu.memory_space<vmem>>, %arg4: memref<1x32xf32, #tpu.memory_space<vmem>>, %arg5: memref<1x32xf32, #tpu.memory_space<vmem>>, %arg6: memref<1x32xf32, #tpu.memory_space<vmem>>, %arg7: memref<32x32xbf16, #tpu.memory_space<vmem>>, %arg8: memref<1x32xf32, #tpu.memory_space<vmem>>, %arg9: memref<32x64xbf16, #tpu.memory_space<vmem>>, %arg10: memref<32x32xbf16, #tpu.memory_space<vmem>>, %arg11: memref<1x32xf32, #tpu.memory_space<vmem>>, %arg12: memref<2x64x32xf32, #tpu.memory_space<vmem>>, %arg13: memref<2x64x32xf32, #tpu.memory_space<vmem>>) attributes {dimension_semantics = [#tpu.dimension_semantics<parallel>], iteration_bounds = array<i64: 4>, scalar_prefetch = 0 : i64, scratch_operands = 1 : i64, tpu.core_type = #tpu.core_type<tc>, window_params = [{transform_indices = @transform_0, window_bounds = array<i64: 2, 64, 32>}, {transform_indices = @transform_1, window_bounds = array<i64: 2, 64, 32>}, {pipeline_mode = #tpu.pipeline_mode<synchronous>, transform_indices = @transform_2, window_bounds = array<i64: 1, 32>}, {pipeline_mode = #tpu.pipeline_mode<synchronous>, transform_indices = @transform_3, window_bounds = array<i64: 1, 32>}, {pipeline_mode = #tpu.pipeline_mode<synchronous>, transform_indices = @transform_4, window_bounds = array<i64: 1, 32>}, {pipeline_mode = #tpu.pipeline_mode<synchronous>, transform_indices = @transform_5, window_bounds = array<i64: 1, 32>}, {pipeline_mode = #tpu.pipeline_mode<synchronous>, transform_indices = @transform_6, window_bounds = array<i64: 32, 32>}, {pipeline_mode = #tpu.pipeline_mode<synchronous>, transform_indices = @transform_7, window_bounds = array<i64: 1, 32>}, {pipeline_mode = #tpu.pipeline_mode<synchronous>, transform_indices = @transform_8, window_bounds = array<i64: 32, 64>}, {pipeline_mode = #tpu.pipeline_mode<synchronous>, transform_indices = @transform_9, window_bounds = array<i64: 32, 32>}, {pipeline_mode = #tpu.pipeline_mode<synchronous>, transform_indices = @transform_10, window_bounds = array<i64: 1, 32>}, {transform_indices = @transform_11, window_bounds = array<i64: 2, 64, 32>}]} {
    %c0 = arith.constant 0 : index
    %c0_0 = arith.constant 0 : index
    %c0_1 = arith.constant 0 : index
    %0 = vector.load %arg1[%c0, %c0_0, %c0_1] : memref<2x64x32xf32, #tpu.memory_space<vmem>>, vector<2x64x32xf32>
    %1 = vector.shape_cast %0 : vector<2x64x32xf32> to vector<128x32xf32>
    %c0_2 = arith.constant 0 : index
    %c0_3 = arith.constant 0 : index
    %c0_4 = arith.constant 0 : index
    %2 = vector.load %arg2[%c0_2, %c0_3, %c0_4] : memref<2x64x32xf32, #tpu.memory_space<vmem>>, vector<2x64x32xf32>
    %3 = vector.shape_cast %2 : vector<2x64x32xf32> to vector<128x32xf32>
    %4 = arith.mulf %1, %3 : vector<128x32xf32>
    %cst = arith.constant dense<0.000000e+00> : vector<128xf32>
    %5 = vector.multi_reduction <add>, %4, %cst [1] : vector<128x32xf32> to vector<128xf32>
    %6 = vector.shape_cast %5 : vector<128xf32> to vector<128x1xf32>
    %7 = arith.mulf %1, %1 : vector<128x32xf32>
    %cst_5 = arith.constant dense<0.000000e+00> : vector<128xf32>
    %8 = vector.multi_reduction <add>, %7, %cst_5 [1] : vector<128x32xf32> to vector<128xf32>
    %9 = vector.shape_cast %8 : vector<128xf32> to vector<128x1xf32>
    %cst_6 = arith.constant 1.000000e-16 : f32
    %10 = vector.broadcast %cst_6 : f32 to vector<128x1xf32>
    %11 = arith.maximumf %9, %10 : vector<128x1xf32>
    %12 = math.rsqrt %11 : vector<128x1xf32>
    %13 = arith.mulf %3, %3 : vector<128x32xf32>
    %cst_7 = arith.constant dense<0.000000e+00> : vector<128xf32>
    %14 = vector.multi_reduction <add>, %13, %cst_7 [1] : vector<128x32xf32> to vector<128xf32>
    %15 = vector.shape_cast %14 : vector<128xf32> to vector<128x1xf32>
    %cst_8 = arith.constant 1.000000e-16 : f32
    %16 = vector.broadcast %cst_8 : f32 to vector<128x1xf32>
    %17 = arith.maximumf %15, %16 : vector<128x1xf32>
    %18 = math.rsqrt %17 : vector<128x1xf32>
    %19 = arith.mulf %6, %12 : vector<128x1xf32>
    %20 = arith.mulf %19, %18 : vector<128x1xf32>
    %cst_9 = arith.constant 1.000000e+00 : f32
    %21 = vector.broadcast %cst_9 : f32 to vector<128x1xf32>
    %22 = arith.addf %20, %21 : vector<128x1xf32>
    %cst_10 = arith.constant 5.000000e-01 : f32
    %23 = vector.broadcast %cst_10 : f32 to vector<128x1xf32>
    %24 = arith.mulf %22, %23 : vector<128x1xf32>
    %c0_11 = arith.constant 0 : index
    %c0_12 = arith.constant 0 : index
    %25 = vector.load %arg3[%c0_11, %c0_12] : memref<1x32xf32, #tpu.memory_space<vmem>>, vector<1x32xf32>
    %c0_13 = arith.constant 0 : index
    %c0_14 = arith.constant 0 : index
    %26 = vector.load %arg4[%c0_13, %c0_14] : memref<1x32xf32, #tpu.memory_space<vmem>>, vector<1x32xf32>
    %cst_15 = arith.constant dense<0.000000e+00> : vector<128xf32>
    %27 = vector.multi_reduction <add>, %1, %cst_15 [1] : vector<128x32xf32> to vector<128xf32>
    %28 = vector.shape_cast %27 : vector<128xf32> to vector<128x1xf32>
    %cst_16 = arith.constant 3.200000e+01 : f32
    %29 = vector.broadcast %cst_16 : f32 to vector<128x1xf32>
    %30 = arith.divf %28, %29 : vector<128x1xf32>
    %31 = vector.broadcast %30 : vector<128x1xf32> to vector<128x32xf32>
    %32 = arith.subf %1, %31 : vector<128x32xf32>
    %33 = arith.mulf %32, %32 : vector<128x32xf32>
    %cst_17 = arith.constant dense<0.000000e+00> : vector<128xf32>
    %34 = vector.multi_reduction <add>, %33, %cst_17 [1] : vector<128x32xf32> to vector<128xf32>
    %35 = vector.shape_cast %34 : vector<128xf32> to vector<128x1xf32>
    %cst_18 = arith.constant 3.200000e+01 : f32
    %36 = vector.broadcast %cst_18 : f32 to vector<128x1xf32>
    %37 = arith.divf %35, %36 : vector<128x1xf32>
    %cst_19 = arith.constant 9.99999974E-6 : f32
    %38 = vector.broadcast %cst_19 : f32 to vector<128x1xf32>
    %39 = arith.addf %37, %38 : vector<128x1xf32>
    %40 = math.rsqrt %39 : vector<128x1xf32>
    %41 = vector.broadcast %40 : vector<128x1xf32> to vector<128x32xf32>
    %42 = arith.mulf %32, %41 : vector<128x32xf32>
    %43 = vector.broadcast %25 : vector<1x32xf32> to vector<128x32xf32>
    %44 = arith.mulf %42, %43 : vector<128x32xf32>
    %45 = vector.broadcast %26 : vector<1x32xf32> to vector<128x32xf32>
    %46 = arith.addf %44, %45 : vector<128x32xf32>
    %47 = arith.truncf %46 : vector<128x32xf32> to vector<128x32xbf16>
    %c0_20 = arith.constant 0 : index
    %c0_21 = arith.constant 0 : index
    %48 = vector.load %arg5[%c0_20, %c0_21] : memref<1x32xf32, #tpu.memory_space<vmem>>, vector<1x32xf32>
    %c0_22 = arith.constant 0 : index
    %c0_23 = arith.constant 0 : index
    %49 = vector.load %arg6[%c0_22, %c0_23] : memref<1x32xf32, #tpu.memory_space<vmem>>, vector<1x32xf32>
    %cst_24 = arith.constant dense<0.000000e+00> : vector<128xf32>
    %50 = vector.multi_reduction <add>, %3, %cst_24 [1] : vector<128x32xf32> to vector<128xf32>
    %51 = vector.shape_cast %50 : vector<128xf32> to vector<128x1xf32>
    %cst_25 = arith.constant 3.200000e+01 : f32
    %52 = vector.broadcast %cst_25 : f32 to vector<128x1xf32>
    %53 = arith.divf %51, %52 : vector<128x1xf32>
    %54 = vector.broadcast %53 : vector<128x1xf32> to vector<128x32xf32>
    %55 = arith.subf %3, %54 : vector<128x32xf32>
    %56 = arith.mulf %55, %55 : vector<128x32xf32>
    %cst_26 = arith.constant dense<0.000000e+00> : vector<128xf32>
    %57 = vector.multi_reduction <add>, %56, %cst_26 [1] : vector<128x32xf32> to vector<128xf32>
    %58 = vector.shape_cast %57 : vector<128xf32> to vector<128x1xf32>
    %cst_27 = arith.constant 3.200000e+01 : f32
    %59 = vector.broadcast %cst_27 : f32 to vector<128x1xf32>
    %60 = arith.divf %58, %59 : vector<128x1xf32>
    %cst_28 = arith.constant 9.99999974E-6 : f32
    %61 = vector.broadcast %cst_28 : f32 to vector<128x1xf32>
    %62 = arith.addf %60, %61 : vector<128x1xf32>
    %63 = math.rsqrt %62 : vector<128x1xf32>
    %64 = vector.broadcast %63 : vector<128x1xf32> to vector<128x32xf32>
    %65 = arith.mulf %55, %64 : vector<128x32xf32>
    %66 = vector.broadcast %48 : vector<1x32xf32> to vector<128x32xf32>
    %67 = arith.mulf %65, %66 : vector<128x32xf32>
    %68 = vector.broadcast %49 : vector<1x32xf32> to vector<128x32xf32>
    %69 = arith.addf %67, %68 : vector<128x32xf32>
    %70 = arith.truncf %69 : vector<128x32xf32> to vector<128x32xbf16>
    %c0_29 = arith.constant 0 : index
    %c0_30 = arith.constant 0 : index
    %71 = vector.load %arg7[%c0_29, %c0_30] : memref<32x32xbf16, #tpu.memory_space<vmem>>, vector<32x32xbf16>
    %cst_31 = arith.constant dense<0.000000e+00> : vector<128x32xf32>
    %72 = tpu.matmul %47, %71, %cst_31 {dimension_numbers = #tpu.dot_dimension_numbers<[1], [0], [0], [1], [0, 0, 1, 1], [], []>} : vector<128x32xbf16>, vector<32x32xbf16>, vector<128x32xf32> -> vector<128x32xf32>
    %c0_32 = arith.constant 0 : index
    %c0_33 = arith.constant 0 : index
    %73 = vector.load %arg8[%c0_32, %c0_33] : memref<1x32xf32, #tpu.memory_space<vmem>>, vector<1x32xf32>
    %74 = vector.broadcast %73 : vector<1x32xf32> to vector<128x32xf32>
    %75 = arith.addf %72, %74 : vector<128x32xf32>
    %76 = arith.truncf %75 : vector<128x32xf32> to vector<128x32xbf16>
    %c0_34 = arith.constant 0 : index
    %c0_35 = arith.constant 0 : index
    %77 = vector.load %arg9[%c0_34, %c0_35] : memref<32x64xbf16, #tpu.memory_space<vmem>>, vector<32x64xbf16>
    %cst_36 = arith.constant dense<0.000000e+00> : vector<128x64xf32>
    %78 = tpu.matmul %70, %77, %cst_36 {dimension_numbers = #tpu.dot_dimension_numbers<[1], [0], [0], [1], [0, 0, 1, 1], [], []>} : vector<128x32xbf16>, vector<32x64xbf16>, vector<128x64xf32> -> vector<128x64xf32>
    %79 = arith.truncf %78 : vector<128x64xf32> to vector<128x64xbf16>
    %80 = vector.extract_strided_slice %76 {offsets = [0, 0], sizes = [128, 8], strides = [1, 1]} : vector<128x32xbf16> to vector<128x8xbf16>
    %81 = vector.shape_cast %80 : vector<128x8xbf16> to vector<2x64x8xbf16>
    %82 = vector.extract_strided_slice %79 {offsets = [0, 0], sizes = [128, 8], strides = [1, 1]} : vector<128x64xbf16> to vector<128x8xbf16>
    %83 = vector.shape_cast %82 : vector<128x8xbf16> to vector<2x64x8xbf16>
    %84 = vector.extract_strided_slice %79 {offsets = [0, 32], sizes = [128, 8], strides = [1, 1]} : vector<128x64xbf16> to vector<128x8xbf16>
    %85 = vector.shape_cast %84 : vector<128x8xbf16> to vector<2x64x8xbf16>
    %cst_37 = arith.constant dense<0.000000e+00> : vector<2x64x64xf32>
    %86 = tpu.matmul %81, %83, %cst_37 {dimension_numbers = #tpu.dot_dimension_numbers<[2], [2], [1], [1], [0, 0, 0, 1, 1, 1], [0], [0]>} : vector<2x64x8xbf16>, vector<2x64x8xbf16>, vector<2x64x64xf32> -> vector<2x64x64xf32>
    %cst_38 = arith.constant dense<0xFF800000> : vector<2x64xf32>
    %87 = vector.multi_reduction <maximumf>, %86, %cst_38 [2] : vector<2x64x64xf32> to vector<2x64xf32>
    %88 = vector.shape_cast %87 : vector<2x64xf32> to vector<2x64x1xf32>
    %89 = vector.broadcast %88 : vector<2x64x1xf32> to vector<2x64x64xf32>
    %90 = arith.subf %86, %89 : vector<2x64x64xf32>
    %91 = math.exp %90 : vector<2x64x64xf32>
    %cst_39 = arith.constant dense<0.000000e+00> : vector<2x64xf32>
    %92 = vector.multi_reduction <add>, %91, %cst_39 [2] : vector<2x64x64xf32> to vector<2x64xf32>
    %93 = vector.shape_cast %92 : vector<2x64xf32> to vector<2x64x1xf32>
    %94 = tpu.reciprocal %93 {approx = true} : vector<2x64x1xf32> -> vector<2x64x1xf32>
    %95 = vector.broadcast %94 : vector<2x64x1xf32> to vector<2x64x64xf32>
    %96 = arith.mulf %91, %95 : vector<2x64x64xf32>
    %97 = arith.truncf %96 : vector<2x64x64xf32> to vector<2x64x64xbf16>
    %cst_40 = arith.constant dense<0.000000e+00> : vector<2x64x8xf32>
    %98 = tpu.matmul %97, %85, %cst_40 {dimension_numbers = #tpu.dot_dimension_numbers<[2], [1], [1], [2], [0, 0, 0, 1, 1, 2], [0], [0]>} : vector<2x64x64xbf16>, vector<2x64x8xbf16>, vector<2x64x8xf32> -> vector<2x64x8xf32>
    %c0_41 = arith.constant 0 : index
    %c0_42 = arith.constant 0 : index
    %c0_43 = arith.constant 0 : index
    %99 = vector.load %arg13[%c0_41, %c0_42, %c0_43] : memref<2x64x32xf32, #tpu.memory_space<vmem>>, vector<2x64x8xf32>
    tpu.vector_store %arg13[%c0_41, %c0_42, %c0_43], %98 {strides = array<i32>} : memref<2x64x32xf32, #tpu.memory_space<vmem>>, vector<2x64x8xf32>,
    %100 = vector.extract_strided_slice %76 {offsets = [0, 8], sizes = [128, 8], strides = [1, 1]} : vector<128x32xbf16> to vector<128x8xbf16>
    %101 = vector.shape_cast %100 : vector<128x8xbf16> to vector<2x64x8xbf16>
    %102 = vector.extract_strided_slice %79 {offsets = [0, 8], sizes = [128, 8], strides = [1, 1]} : vector<128x64xbf16> to vector<128x8xbf16>
    %103 = vector.shape_cast %102 : vector<128x8xbf16> to vector<2x64x8xbf16>
    %104 = vector.extract_strided_slice %79 {offsets = [0, 40], sizes = [128, 8], strides = [1, 1]} : vector<128x64xbf16> to vector<128x8xbf16>
    %105 = vector.shape_cast %104 : vector<128x8xbf16> to vector<2x64x8xbf16>
    %cst_44 = arith.constant dense<0.000000e+00> : vector<2x64x64xf32>
    %106 = tpu.matmul %101, %103, %cst_44 {dimension_numbers = #tpu.dot_dimension_numbers<[2], [2], [1], [1], [0, 0, 0, 1, 1, 1], [0], [0]>} : vector<2x64x8xbf16>, vector<2x64x8xbf16>, vector<2x64x64xf32> -> vector<2x64x64xf32>
    %cst_45 = arith.constant dense<0xFF800000> : vector<2x64xf32>
    %107 = vector.multi_reduction <maximumf>, %106, %cst_45 [2] : vector<2x64x64xf32> to vector<2x64xf32>
    %108 = vector.shape_cast %107 : vector<2x64xf32> to vector<2x64x1xf32>
    %109 = vector.broadcast %108 : vector<2x64x1xf32> to vector<2x64x64xf32>
    %110 = arith.subf %106, %109 : vector<2x64x64xf32>
    %111 = math.exp %110 : vector<2x64x64xf32>
    %cst_46 = arith.constant dense<0.000000e+00> : vector<2x64xf32>
    %112 = vector.multi_reduction <add>, %111, %cst_46 [2] : vector<2x64x64xf32> to vector<2x64xf32>
    %113 = vector.shape_cast %112 : vector<2x64xf32> to vector<2x64x1xf32>
    %114 = tpu.reciprocal %113 {approx = true} : vector<2x64x1xf32> -> vector<2x64x1xf32>
    %115 = vector.broadcast %114 : vector<2x64x1xf32> to vector<2x64x64xf32>
    %116 = arith.mulf %111, %115 : vector<2x64x64xf32>
    %117 = arith.truncf %116 : vector<2x64x64xf32> to vector<2x64x64xbf16>
    %cst_47 = arith.constant dense<0.000000e+00> : vector<2x64x8xf32>
    %118 = tpu.matmul %117, %105, %cst_47 {dimension_numbers = #tpu.dot_dimension_numbers<[2], [1], [1], [2], [0, 0, 0, 1, 1, 2], [0], [0]>} : vector<2x64x64xbf16>, vector<2x64x8xbf16>, vector<2x64x8xf32> -> vector<2x64x8xf32>
    %c0_48 = arith.constant 0 : index
    %c0_49 = arith.constant 0 : index
    %c8 = arith.constant 8 : index
    %119 = vector.load %arg13[%c0_48, %c0_49, %c8] : memref<2x64x32xf32, #tpu.memory_space<vmem>>, vector<2x64x8xf32>
    tpu.vector_store %arg13[%c0_48, %c0_49, %c8], %118 {strides = array<i32>} : memref<2x64x32xf32, #tpu.memory_space<vmem>>, vector<2x64x8xf32>,
    %120 = vector.extract_strided_slice %76 {offsets = [0, 16], sizes = [128, 8], strides = [1, 1]} : vector<128x32xbf16> to vector<128x8xbf16>
    %121 = vector.shape_cast %120 : vector<128x8xbf16> to vector<2x64x8xbf16>
    %122 = vector.extract_strided_slice %79 {offsets = [0, 16], sizes = [128, 8], strides = [1, 1]} : vector<128x64xbf16> to vector<128x8xbf16>
    %123 = vector.shape_cast %122 : vector<128x8xbf16> to vector<2x64x8xbf16>
    %124 = vector.extract_strided_slice %79 {offsets = [0, 48], sizes = [128, 8], strides = [1, 1]} : vector<128x64xbf16> to vector<128x8xbf16>
    %125 = vector.shape_cast %124 : vector<128x8xbf16> to vector<2x64x8xbf16>
    %cst_50 = arith.constant dense<0.000000e+00> : vector<2x64x64xf32>
    %126 = tpu.matmul %121, %123, %cst_50 {dimension_numbers = #tpu.dot_dimension_numbers<[2], [2], [1], [1], [0, 0, 0, 1, 1, 1], [0], [0]>} : vector<2x64x8xbf16>, vector<2x64x8xbf16>, vector<2x64x64xf32> -> vector<2x64x64xf32>
    %cst_51 = arith.constant dense<0xFF800000> : vector<2x64xf32>
    %127 = vector.multi_reduction <maximumf>, %126, %cst_51 [2] : vector<2x64x64xf32> to vector<2x64xf32>
    %128 = vector.shape_cast %127 : vector<2x64xf32> to vector<2x64x1xf32>
    %129 = vector.broadcast %128 : vector<2x64x1xf32> to vector<2x64x64xf32>
    %130 = arith.subf %126, %129 : vector<2x64x64xf32>
    %131 = math.exp %130 : vector<2x64x64xf32>
    %cst_52 = arith.constant dense<0.000000e+00> : vector<2x64xf32>
    %132 = vector.multi_reduction <add>, %131, %cst_52 [2] : vector<2x64x64xf32> to vector<2x64xf32>
    %133 = vector.shape_cast %132 : vector<2x64xf32> to vector<2x64x1xf32>
    %134 = tpu.reciprocal %133 {approx = true} : vector<2x64x1xf32> -> vector<2x64x1xf32>
    %135 = vector.broadcast %134 : vector<2x64x1xf32> to vector<2x64x64xf32>
    %136 = arith.mulf %131, %135 : vector<2x64x64xf32>
    %137 = arith.truncf %136 : vector<2x64x64xf32> to vector<2x64x64xbf16>
    %cst_53 = arith.constant dense<0.000000e+00> : vector<2x64x8xf32>
    %138 = tpu.matmul %137, %125, %cst_53 {dimension_numbers = #tpu.dot_dimension_numbers<[2], [1], [1], [2], [0, 0, 0, 1, 1, 2], [0], [0]>} : vector<2x64x64xbf16>, vector<2x64x8xbf16>, vector<2x64x8xf32> -> vector<2x64x8xf32>
    %c0_54 = arith.constant 0 : index
    %c0_55 = arith.constant 0 : index
    %c16 = arith.constant 16 : index
    %139 = vector.load %arg13[%c0_54, %c0_55, %c16] : memref<2x64x32xf32, #tpu.memory_space<vmem>>, vector<2x64x8xf32>
    tpu.vector_store %arg13[%c0_54, %c0_55, %c16], %138 {strides = array<i32>} : memref<2x64x32xf32, #tpu.memory_space<vmem>>, vector<2x64x8xf32>,
    %140 = vector.extract_strided_slice %76 {offsets = [0, 24], sizes = [128, 8], strides = [1, 1]} : vector<128x32xbf16> to vector<128x8xbf16>
    %141 = vector.shape_cast %140 : vector<128x8xbf16> to vector<2x64x8xbf16>
    %142 = vector.extract_strided_slice %79 {offsets = [0, 24], sizes = [128, 8], strides = [1, 1]} : vector<128x64xbf16> to vector<128x8xbf16>
    %143 = vector.shape_cast %142 : vector<128x8xbf16> to vector<2x64x8xbf16>
    %144 = vector.extract_strided_slice %79 {offsets = [0, 56], sizes = [128, 8], strides = [1, 1]} : vector<128x64xbf16> to vector<128x8xbf16>
    %145 = vector.shape_cast %144 : vector<128x8xbf16> to vector<2x64x8xbf16>
    %cst_56 = arith.constant dense<0.000000e+00> : vector<2x64x64xf32>
    %146 = tpu.matmul %141, %143, %cst_56 {dimension_numbers = #tpu.dot_dimension_numbers<[2], [2], [1], [1], [0, 0, 0, 1, 1, 1], [0], [0]>} : vector<2x64x8xbf16>, vector<2x64x8xbf16>, vector<2x64x64xf32> -> vector<2x64x64xf32>
    %cst_57 = arith.constant dense<0xFF800000> : vector<2x64xf32>
    %147 = vector.multi_reduction <maximumf>, %146, %cst_57 [2] : vector<2x64x64xf32> to vector<2x64xf32>
    %148 = vector.shape_cast %147 : vector<2x64xf32> to vector<2x64x1xf32>
    %149 = vector.broadcast %148 : vector<2x64x1xf32> to vector<2x64x64xf32>
    %150 = arith.subf %146, %149 : vector<2x64x64xf32>
    %151 = math.exp %150 : vector<2x64x64xf32>
    %cst_58 = arith.constant dense<0.000000e+00> : vector<2x64xf32>
    %152 = vector.multi_reduction <add>, %151, %cst_58 [2] : vector<2x64x64xf32> to vector<2x64xf32>
    %153 = vector.shape_cast %152 : vector<2x64xf32> to vector<2x64x1xf32>
    %154 = tpu.reciprocal %153 {approx = true} : vector<2x64x1xf32> -> vector<2x64x1xf32>
    %155 = vector.broadcast %154 : vector<2x64x1xf32> to vector<2x64x64xf32>
    %156 = arith.mulf %151, %155 : vector<2x64x64xf32>
    %157 = arith.truncf %156 : vector<2x64x64xf32> to vector<2x64x64xbf16>
    %cst_59 = arith.constant dense<0.000000e+00> : vector<2x64x8xf32>
    %158 = tpu.matmul %157, %145, %cst_59 {dimension_numbers = #tpu.dot_dimension_numbers<[2], [1], [1], [2], [0, 0, 0, 1, 1, 2], [0], [0]>} : vector<2x64x64xbf16>, vector<2x64x8xbf16>, vector<2x64x8xf32> -> vector<2x64x8xf32>
    %c0_60 = arith.constant 0 : index
    %c0_61 = arith.constant 0 : index
    %c24 = arith.constant 24 : index
    %159 = vector.load %arg13[%c0_60, %c0_61, %c24] : memref<2x64x32xf32, #tpu.memory_space<vmem>>, vector<2x64x8xf32>
    tpu.vector_store %arg13[%c0_60, %c0_61, %c24], %158 {strides = array<i32>} : memref<2x64x32xf32, #tpu.memory_space<vmem>>, vector<2x64x8xf32>,
    %c0_62 = arith.constant 0 : index
    %c0_63 = arith.constant 0 : index
    %c0_64 = arith.constant 0 : index
    %160 = vector.load %arg13[%c0_62, %c0_63, %c0_64] : memref<2x64x32xf32, #tpu.memory_space<vmem>>, vector<2x64x32xf32>
    %161 = vector.shape_cast %160 : vector<2x64x32xf32> to vector<128x32xf32>
    %162 = arith.truncf %161 : vector<128x32xf32> to vector<128x32xbf16>
    %c0_65 = arith.constant 0 : index
    %c0_66 = arith.constant 0 : index
    %163 = vector.load %arg10[%c0_65, %c0_66] : memref<32x32xbf16, #tpu.memory_space<vmem>>, vector<32x32xbf16>
    %cst_67 = arith.constant dense<0.000000e+00> : vector<128x32xf32>
    %164 = tpu.matmul %162, %163, %cst_67 {dimension_numbers = #tpu.dot_dimension_numbers<[1], [0], [0], [1], [0, 0, 1, 1], [], []>} : vector<128x32xbf16>, vector<32x32xbf16>, vector<128x32xf32> -> vector<128x32xf32>
    %c0_68 = arith.constant 0 : index
    %c0_69 = arith.constant 0 : index
    %165 = vector.load %arg11[%c0_68, %c0_69] : memref<1x32xf32, #tpu.memory_space<vmem>>, vector<1x32xf32>
    %166 = vector.broadcast %165 : vector<1x32xf32> to vector<128x32xf32>
    %167 = arith.addf %164, %166 : vector<128x32xf32>
    %168 = arith.subf %167, %1 : vector<128x32xf32>
    %169 = vector.broadcast %24 : vector<128x1xf32> to vector<128x32xf32>
    %170 = arith.mulf %169, %168 : vector<128x32xf32>
    %171 = arith.addf %1, %170 : vector<128x32xf32>
    %172 = vector.shape_cast %171 : vector<128x32xf32> to vector<2x64x32xf32>
    %c0_70 = arith.constant 0 : index
    %c0_71 = arith.constant 0 : index
    %c0_72 = arith.constant 0 : index
    %173 = vector.load %arg12[%c0_70, %c0_71, %c0_72] : memref<2x64x32xf32, #tpu.memory_space<vmem>>, vector<2x64x32xf32>
    tpu.vector_store %arg12[%c0_70, %c0_71, %c0_72], %172 {strides = array<i32>} : memref<2x64x32xf32, #tpu.memory_space<vmem>>, vector<2x64x32xf32>,
    return
  }
  func.func @transform_0(%arg0: i32) -> (i32, i32, i32) {
    %c0_i32 = arith.constant 0 : i32
    %c0_i32_0 = arith.constant 0 : i32
    %c0_i32_1 = arith.constant 0 : i32
    return %arg0, %c0_i32, %c0_i32_0 : i32, i32, i32
  }
  func.func @transform_1(%arg0: i32) -> (i32, i32, i32) {
    %c0_i32 = arith.constant 0 : i32
    %c0_i32_0 = arith.constant 0 : i32
    %c0_i32_1 = arith.constant 0 : i32
    return %arg0, %c0_i32, %c0_i32_0 : i32, i32, i32
  }
  func.func @transform_2(%arg0: i32) -> (i32, i32) {
    %c0_i32 = arith.constant 0 : i32
    %c0_i32_0 = arith.constant 0 : i32
    %c0_i32_1 = arith.constant 0 : i32
    return %c0_i32, %c0_i32_0 : i32, i32
  }
  func.func @transform_3(%arg0: i32) -> (i32, i32) {
    %c0_i32 = arith.constant 0 : i32
    %c0_i32_0 = arith.constant 0 : i32
    %c0_i32_1 = arith.constant 0 : i32
    return %c0_i32, %c0_i32_0 : i32, i32
  }
  func.func @transform_4(%arg0: i32) -> (i32, i32) {
    %c0_i32 = arith.constant 0 : i32
    %c0_i32_0 = arith.constant 0 : i32
    %c0_i32_1 = arith.constant 0 : i32
    return %c0_i32, %c0_i32_0 : i32, i32
  }
  func.func @transform_5(%arg0: i32) -> (i32, i32) {
    %c0_i32 = arith.constant 0 : i32
    %c0_i32_0 = arith.constant 0 : i32
    %c0_i32_1 = arith.constant 0 : i32
    return %c0_i32, %c0_i32_0 : i32, i32
  }
  func.func @transform_6(%arg0: i32) -> (i32, i32) {
    %c0_i32 = arith.constant 0 : i32
    %c0_i32_0 = arith.constant 0 : i32
    %c0_i32_1 = arith.constant 0 : i32
    return %c0_i32, %c0_i32_0 : i32, i32
  }
  func.func @transform_7(%arg0: i32) -> (i32, i32) {
    %c0_i32 = arith.constant 0 : i32
    %c0_i32_0 = arith.constant 0 : i32
    %c0_i32_1 = arith.constant 0 : i32
    return %c0_i32, %c0_i32_0 : i32, i32
  }
  func.func @transform_8(%arg0: i32) -> (i32, i32) {
    %c0_i32 = arith.constant 0 : i32
    %c0_i32_0 = arith.constant 0 : i32
    %c0_i32_1 = arith.constant 0 : i32
    return %c0_i32, %c0_i32_0 : i32, i32
  }
  func.func @transform_9(%arg0: i32) -> (i32, i32) {
    %c0_i32 = arith.constant 0 : i32
    %c0_i32_0 = arith.constant 0 : i32
    %c0_i32_1 = arith.constant 0 : i32
    return %c0_i32, %c0_i32_0 : i32, i32
  }
  func.func @transform_10(%arg0: i32) -> (i32, i32) {
    %c0_i32 = arith.constant 0 : i32
    %c0_i32_0 = arith.constant 0 : i32
    %c0_i32_1 = arith.constant 0 : i32
    return %c0_i32, %c0_i32_0 : i32, i32
  }
  func.func @transform_11(%arg0: i32) -> (i32, i32, i32) {
    %c0_i32 = arith.constant 0 : i32
    %c0_i32_0 = arith.constant 0 : i32
    %c0_i32_1 = arith.constant 0 : i32
    return %arg0, %c0_i32, %c0_i32_0 : i32, i32, i32
  }
}

</mosaic_0001>

<llo_original>
// kernel: local_cross_attention.1
$region0: #{local_cross_attention.1}
  #allocation0 [shape = 'u32[]', space=smem, size = 0x4, offset = 0x4, fixed_abs, tag = 'smem constant byte address 0x4 - core index']
  #allocation1 [shape = 'u32[144,128]{1,0:T(1,128)}', space=vmem, size = 0x12000, scoped, tag = 'internal scratch']
  #allocation2 [shape = 'f32[2,64,32]{2,1,0:T(8,128)}', space=vmem, size = 0x10000, scoped, tag = 'scratch operand']
  %s0 = inlined_call_operand.vmem [shape: f32[8,64,32], index: 0, kind: input, shape index: {}]
  %s1 = inlined_call_operand.vmem [shape: f32[8,64,32], index: 1, kind: input, shape index: {}]
  %s2 = inlined_call_operand.vmem [shape: f32[1,32], index: 2, kind: input, shape index: {}]
  %s3 = inlined_call_operand.vmem [shape: f32[1,32], index: 3, kind: input, shape index: {}]
  %s4 = inlined_call_operand.vmem [shape: f32[1,32], index: 4, kind: input, shape index: {}]
  %s5 = inlined_call_operand.vmem [shape: f32[1,32], index: 5, kind: input, shape index: {}]
  %s6 = inlined_call_operand.vmem [shape: bf16[32,32], index: 6, kind: input, shape index: {}]
  %s7 = inlined_call_operand.vmem [shape: f32[1,32], index: 7, kind: input, shape index: {}]
  %s8 = inlined_call_operand.vmem [shape: bf16[32,64], index: 8, kind: input, shape index: {}]
  %s9 = inlined_call_operand.vmem [shape: bf16[32,32], index: 9, kind: input, shape index: {}]
  %s10 = inlined_call_operand.vmem [shape: f32[1,32], index: 10, kind: input, shape index: {}]
  %s11 = inlined_call_operand.vmem [shape: f32[8,64,32], index: 11, kind: output, shape index: {}]
  %s12 = sld [smem:[#allocation0]]
  $region77: #{local_cross_attention.1} parent=0
    _
  %s14 = ssub.s32 1, %s12
  %s15 = scalar_select 0, %s14, %s12
  loop: start=0, step=1, limit=6
  $region2: #{local_cross_attention.1} parent=0 // loop_pre_header
    _
  $region3: #{local_cross_attention.1} parent=0 // loop_header
    %s17 = sphi 0, %s21
    %p18 = scmp.ge.s32.totalorder %s17, 6
    %s27 = sphi 0, %s29
    %s30 = sphi 0, %s27
    %s31 = sphi 0, %s30
    %s47 = sphi 0, %s31
    %s53 = sphi 0, %s55
    %s56 = sphi 0, %s53
    %s57 = sphi 0, %s56
    %s73 = sphi 0, %s57
    %s77 = sphi 0, %s77
    %s79 = sphi 0, %s77
    %s80 = sphi 0, %s79
    %s94 = sphi 0, %s80
    %s98 = sphi 0, %s98
    %s100 = sphi 0, %s98
    %s101 = sphi 0, %s100
    %s115 = sphi 0, %s101
    %s119 = sphi 0, %s119
    %s121 = sphi 0, %s119
    %s122 = sphi 0, %s121
    %s136 = sphi 0, %s122
    %s140 = sphi 0, %s140
    %s142 = sphi 0, %s140
    %s143 = sphi 0, %s142
    %s157 = sphi 0, %s143
    %s161 = sphi 0, %s161
    %s163 = sphi 0, %s161
    %s164 = sphi 0, %s163
    %s178 = sphi 0, %s164
    %s182 = sphi 0, %s182
    %s184 = sphi 0, %s182
    %s185 = sphi 0, %s184
    %s199 = sphi 0, %s185
    %s203 = sphi 0, %s203
    %s205 = sphi 0, %s203
    %s206 = sphi 0, %s205
    %s220 = sphi 0, %s206
    %s224 = sphi 0, %s224
    %s226 = sphi 0, %s224
    %s227 = sphi 0, %s226
    %s241 = sphi 0, %s227
    %s245 = sphi 0, %s245
    %s247 = sphi 0, %s245
    %s248 = sphi 0, %s247
    %s262 = sphi 0, %s248
    %s268 = sphi 0, %s270
    %s271 = sphi 0, %s268
    %s272 = sphi 0, %s271
    %s288 = sphi 0, %s272
  $region4: #{local_cross_attention.1} parent=0 // loop_header_branch
    %20 = sbr.rel (%p18) target = $region8
  $region5: #{local_cross_attention.1} parent=0 // loop_body
    %s22 = ssub.s32 %s17, 1
    %s23 = ssub.s32 %s17, 2
    %s24 = sadd.s32 %s17, 1
    %s25 = ssub.s32 %s17, %s24
    %p26 = scmp.eq.s32.totalorder %s25, 0
    %s28 = sadd.s32 %s27, 1
    %s29 = scalar_select %p26, %s27, %s28
    %p32 = pneg %p26
    %p33 = scmp.eq.s32.totalorder %s17, 3
    %p34 = por %p32, %p33
    %p35 = scmp.ne.s32.totalorder %s27, %s30
    %p36 = scmp.eq.s32.totalorder %s17, 0
    %p37 = por %p35, %p36
    %p38 = scmp.ne.s32.totalorder %s27, %s30
    %p39 = scmp.eq.s32.totalorder %s22, 3
    %p40 = por %p38, %p39
    %p41 = scmp.ne.s32.totalorder %s30, %s31
    %p42 = scmp.eq.s32.totalorder %s22, 0
    %p43 = por %p41, %p42
    %p44 = scmp.ne.s32.totalorder %s30, %s31
    %p45 = scmp.eq.s32.totalorder %s23, 3
    %p46 = por %p44, %p45
    %p48 = scmp.ne.s32.totalorder %s31, %s47
    %p49 = scmp.eq.s32.totalorder %s23, 0
    %p50 = por %p48, %p49
    %s51 = ssub.s32 %s17, %s24
    %p52 = scmp.eq.s32.totalorder %s51, 0
    %s54 = sadd.s32 %s53, 1
    %s55 = scalar_select %p52, %s53, %s54
    %p58 = pneg %p52
    %p59 = scmp.eq.s32.totalorder %s17, 3
    %p60 = por %p58, %p59
    %p61 = scmp.ne.s32.totalorder %s53, %s56
    %p62 = scmp.eq.s32.totalorder %s17, 0
    %p63 = por %p61, %p62
    %p64 = scmp.ne.s32.totalorder %s53, %s56
    %p65 = scmp.eq.s32.totalorder %s22, 3
    %p66 = por %p64, %p65
    %p67 = scmp.ne.s32.totalorder %s56, %s57
    %p68 = scmp.eq.s32.totalorder %s22, 0
    %p69 = por %p67, %p68
    %p70 = scmp.ne.s32.totalorder %s56, %s57
    %p71 = scmp.eq.s32.totalorder %s23, 3
    %p72 = por %p70, %p71
    %p74 = scmp.ne.s32.totalorder %s57, %s73
    %p75 = scmp.eq.s32.totalorder %s23, 0
    %p76 = por %p74, %p75
    %s78 = sadd.s32 %s77, 1
    %p81 = scmp.eq.s32.totalorder %s17, 3
    %p82 = scmp.ne.s32.totalorder %s77, %s79
    %p83 = scmp.eq.s32.totalorder %s17, 0
    %p84 = por %p82, %p83
    %p85 = scmp.ne.s32.totalorder %s77, %s79
    %p86 = scmp.eq.s32.totalorder %s22, 3
    %p87 = por %p85, %p86
    %p88 = scmp.ne.s32.totalorder %s79, %s80
    %p89 = scmp.eq.s32.totalorder %s22, 0
    %p90 = por %p88, %p89
    %p91 = scmp.ne.s32.totalorder %s79, %s80
    %p92 = scmp.eq.s32.totalorder %s23, 3
    %p93 = por %p91, %p92
    %p95 = scmp.ne.s32.totalorder %s80, %s94
    %p96 = scmp.eq.s32.totalorder %s23, 0
    %p97 = por %p95, %p96
    %s99 = sadd.s32 %s98, 1
    %p102 = scmp.eq.s32.totalorder %s17, 3
    %p103 = scmp.ne.s32.totalorder %s98, %s100
    %p104 = scmp.eq.s32.totalorder %s17, 0
    %p105 = por %p103, %p104
    %p106 = scmp.ne.s32.totalorder %s98, %s100
    %p107 = scmp.eq.s32.totalorder %s22, 3
    %p108 = por %p106, %p107
    %p109 = scmp.ne.s32.totalorder %s100, %s101
    %p110 = scmp.eq.s32.totalorder %s22, 0
    %p111 = por %p109, %p110
    %p112 = scmp.ne.s32.totalorder %s100, %s101
    %p113 = scmp.eq.s32.totalorder %s23, 3
    %p114 = por %p112, %p113
    %p116 = scmp.ne.s32.totalorder %s101, %s115
    %p117 = scmp.eq.s32.totalorder %s23, 0
    %p118 = por %p116, %p117
    %s120 = sadd.s32 %s119, 1
    %p123 = scmp.eq.s32.totalorder %s17, 3
    %p124 = scmp.ne.s32.totalorder %s119, %s121
    %p125 = scmp.eq.s32.totalorder %s17, 0
    %p126 = por %p124, %p125
    %p127 = scmp.ne.s32.totalorder %s119, %s121
    %p128 = scmp.eq.s32.totalorder %s22, 3
    %p129 = por %p127, %p128
    %p130 = scmp.ne.s32.totalorder %s121, %s122
    %p131 = scmp.eq.s32.totalorder %s22, 0
    %p132 = por %p130, %p131
    %p133 = scmp.ne.s32.totalorder %s121, %s122
    %p134 = scmp.eq.s32.totalorder %s23, 3
    %p135 = por %p133, %p134
    %p137 = scmp.ne.s32.totalorder %s122, %s136
    %p138 = scmp.eq.s32.totalorder %s23, 0
    %p139 = por %p137, %p138
    %s141 = sadd.s32 %s140, 1
    %p144 = scmp.eq.s32.totalorder %s17, 3
    %p145 = scmp.ne.s32.totalorder %s140, %s142
    %p146 = scmp.eq.s32.totalorder %s17, 0
    %p147 = por %p145, %p146
    %p148 = scmp.ne.s32.totalorder %s140, %s142
    %p149 = scmp.eq.s32.totalorder %s22, 3
    %p150 = por %p148, %p149
    %p151 = scmp.ne.s32.totalorder %s142, %s143
    %p152 = scmp.eq.s32.totalorder %s22, 0
    %p153 = por %p151, %p152
    %p154 = scmp.ne.s32.totalorder %s142, %s143
    %p155 = scmp.eq.s32.totalorder %s23, 3
    %p156 = por %p154, %p155
    %p158 = scmp.ne.s32.totalorder %s143, %s157
    %p159 = scmp.eq.s32.totalorder %s23, 0
    %p160 = por %p158, %p159
    %s162 = sadd.s32 %s161, 1
    %p165 = scmp.eq.s32.totalorder %s17, 3
    %p166 = scmp.ne.s32.totalorder %s161, %s163
    %p167 = scmp.eq.s32.totalorder %s17, 0
    %p168 = por %p166, %p167
    %p169 = scmp.ne.s32.totalorder %s161, %s163
    %p170 = scmp.eq.s32.totalorder %s22, 3
    %p171 = por %p169, %p170
    %p172 = scmp.ne.s32.totalorder %s163, %s164
    %p173 = scmp.eq.s32.totalorder %s22, 0
    %p174 = por %p172, %p173
    %p175 = scmp.ne.s32.totalorder %s163, %s164
    %p176 = scmp.eq.s32.totalorder %s23, 3
    %p177 = por %p175, %p176
    %p179 = scmp.ne.s32.totalorder %s164, %s178
    %p180 = scmp.eq.s32.totalorder %s23, 0
    %p181 = por %p179, %p180
    %s183 = sadd.s32 %s182, 1
    %p186 = scmp.eq.s32.totalorder %s17, 3
    %p187 = scmp.ne.s32.totalorder %s182, %s184
    %p188 = scmp.eq.s32.totalorder %s17, 0
    %p189 = por %p187, %p188
    %p190 = scmp.ne.s32.totalorder %s182, %s184
    %p191 = scmp.eq.s32.totalorder %s22, 3
    %p192 = por %p190, %p191
    %p193 = scmp.ne.s32.totalorder %s184, %s185
    %p194 = scmp.eq.s32.totalorder %s22, 0
    %p195 = por %p193, %p194
    %p196 = scmp.ne.s32.totalorder %s184, %s185
    %p197 = scmp.eq.s32.totalorder %s23, 3
    %p198 = por %p196, %p197
    %p200 = scmp.ne.s32.totalorder %s185, %s199
    %p201 = scmp.eq.s32.totalorder %s23, 0
    %p202 = por %p200, %p201
    %s204 = sadd.s32 %s203, 1
    %p207 = scmp.eq.s32.totalorder %s17, 3
    %p208 = scmp.ne.s32.totalorder %s203, %s205
    %p209 = scmp.eq.s32.totalorder %s17, 0
    %p210 = por %p208, %p209
    %p211 = scmp.ne.s32.totalorder %s203, %s205
    %p212 = scmp.eq.s32.totalorder %s22, 3
    %p213 = por %p211, %p212
    %p214 = scmp.ne.s32.totalorder %s205, %s206
    %p215 = scmp.eq.s32.totalorder %s22, 0
    %p216 = por %p214, %p215
    %p217 = scmp.ne.s32.totalorder %s205, %s206
    %p218 = scmp.eq.s32.totalorder %s23, 3
    %p219 = por %p217, %p218
    %p221 = scmp.ne.s32.totalorder %s206, %s220
    %p222 = scmp.eq.s32.totalorder %s23, 0
    %p223 = por %p221, %p222
    %s225 = sadd.s32 %s224, 1
    %p228 = scmp.eq.s32.totalorder %s17, 3
    %p229 = scmp.ne.s32.totalorder %s224, %s226
    %p230 = scmp.eq.s32.totalorder %s17, 0
    %p231 = por %p229, %p230
    %p232 = scmp.ne.s32.totalorder %s224, %s226
    %p233 = scmp.eq.s32.totalorder %s22, 3
    %p234 = por %p232, %p233
    %p235 = scmp.ne.s32.totalorder %s226, %s227
    %p236 = scmp.eq.s32.totalorder %s22, 0
    %p237 = por %p235, %p236
    %p238 = scmp.ne.s32.totalorder %s226, %s227
    %p239 = scmp.eq.s32.totalorder %s23, 3
    %p240 = por %p238, %p239
    %p242 = scmp.ne.s32.totalorder %s227, %s241
    %p243 = scmp.eq.s32.totalorder %s23, 0
    %p244 = por %p242, %p243
    %s246 = sadd.s32 %s245, 1
    %p249 = scmp.eq.s32.totalorder %s17, 3
    %p250 = scmp.ne.s32.totalorder %s245, %s247
    %p251 = scmp.eq.s32.totalorder %s17, 0
    %p252 = por %p250, %p251
    %p253 = scmp.ne.s32.totalorder %s245, %s247
    %p254 = scmp.eq.s32.totalorder %s22, 3
    %p255 = por %p253, %p254
    %p256 = scmp.ne.s32.totalorder %s247, %s248
    %p257 = scmp.eq.s32.totalorder %s22, 0
    %p258 = por %p256, %p257
    %p259 = scmp.ne.s32.totalorder %s247, %s248
    %p260 = scmp.eq.s32.totalorder %s23, 3
    %p261 = por %p259, %p260
    %p263 = scmp.ne.s32.totalorder %s248, %s262
    %p264 = scmp.eq.s32.totalorder %s23, 0
    %p265 = por %p263, %p264
    %s266 = ssub.s32 %s17, %s24
    %p267 = scmp.eq.s32.totalorder %s266, 0
    %s269 = sadd.s32 %s268, 1
    %s270 = scalar_select %p267, %s268, %s269
    %p273 = pneg %p267
    %p274 = scmp.eq.s32.totalorder %s17, 3
    %p275 = por %p273, %p274
    %p276 = scmp.ne.s32.totalorder %s268, %s271
    %p277 = scmp.eq.s32.totalorder %s17, 0
    %p278 = por %p276, %p277
    %p279 = scmp.ne.s32.totalorder %s268, %s271
    %p280 = scmp.eq.s32.totalorder %s22, 3
    %p281 = por %p279, %p280
    %p282 = scmp.ne.s32.totalorder %s271, %s272
    %p283 = scmp.eq.s32.totalorder %s22, 0
    %p284 = por %p282, %p283
    %p285 = scmp.ne.s32.totalorder %s271, %s272
    %p286 = scmp.eq.s32.totalorder %s23, 3
    %p287 = por %p285, %p286
    %p289 = scmp.ne.s32.totalorder %s272, %s288
    %p290 = scmp.eq.s32.totalorder %s23, 0
    %p291 = por %p289, %p290
    %p292 = scmp.le.s32.totalorder 1, %s17
    %p293 = scmp.lt.s32.totalorder %s17, 5
    %p294 = pnand %p292, %p293
    %p295 = pneg %p294
    // Predicated region
    $region9: #{local_cross_attention.1} parent=5 // pred_check
      _
    $region10: #{local_cross_attention.1} parent=5 // pred_check_branch
      %297 = sbr.rel (%p294) target = $region12
    $region11: #{local_cross_attention.1} parent=5 // pred_region
      %s298 = ssub.s32 %s17, 1
      // Predicated region
      $region13: #{local_cross_attention.1} parent=11 // pred_check
        %p299 = pneg %p90
      $region14: #{local_cross_attention.1} parent=11 // pred_check_branch
        %301 = sbr.rel (%p299) target = $region16
      $region15: #{local_cross_attention.1} parent=11 // pred_region
        _
      $region16: #{local_cross_attention.1} parent=11 // pred_fallthru
        _
      // Predicated region
      $region17: #{local_cross_attention.1} parent=11 // pred_check
        %p302 = pneg %p111
      $region18: #{local_cross_attention.1} parent=11 // pred_check_branch
        %304 = sbr.rel (%p302) target = $region20
      $region19: #{local_cross_attention.1} parent=11 // pred_region
        _
      $region20: #{local_cross_attention.1} parent=11 // pred_fallthru
        _
      // Predicated region
      $region21: #{local_cross_attention.1} parent=11 // pred_check
        %p305 = pneg %p132
      $region22: #{local_cross_attention.1} parent=11 // pred_check_branch
        %307 = sbr.rel (%p305) target = $region24
      $region23: #{local_cross_attention.1} parent=11 // pred_region
        _
      $region24: #{local_cross_attention.1} parent=11 // pred_fallthru
        _
      // Predicated region
      $region25: #{local_cross_attention.1} parent=11 // pred_check
        %p308 = pneg %p153
      $region26: #{local_cross_attention.1} parent=11 // pred_check_branch
        %310 = sbr.rel (%p308) target = $region28
      $region27: #{local_cross_attention.1} parent=11 // pred_region
        _
      $region28: #{local_cross_attention.1} parent=11 // pred_fallthru
        _
      // Predicated region
      $region29: #{local_cross_attention.1} parent=11 // pred_check
        %p311 = pneg %p174
      $region30: #{local_cross_attention.1} parent=11 // pred_check_branch
        %313 = sbr.rel (%p311) target = $region32
      $region31: #{local_cross_attention.1} parent=11 // pred_region
        _
      $region32: #{local_cross_attention.1} parent=11 // pred_fallthru
        _
      // Predicated region
      $region33: #{local_cross_attention.1} parent=11 // pred_check
        %p314 = pneg %p195
      $region34: #{local_cross_attention.1} parent=11 // pred_check_branch
        %316 = sbr.rel (%p314) target = $region36
      $region35: #{local_cross_attention.1} parent=11 // pred_region
        _
      $region36: #{local_cross_attention.1} parent=11 // pred_fallthru
        _
      // Predicated region
      $region37: #{local_cross_attention.1} parent=11 // pred_check
        %p317 = pneg %p216
      $region38: #{local_cross_attention.1} parent=11 // pred_check_branch
        %319 = sbr.rel (%p317) target = $region40
      $region39: #{local_cross_attention.1} parent=11 // pred_region
        _
      $region40: #{local_cross_attention.1} parent=11 // pred_fallthru
        _
      // Predicated region
      $region41: #{local_cross_attention.1} parent=11 // pred_check
        %p320 = pneg %p237
      $region42: #{local_cross_attention.1} parent=11 // pred_check_branch
        %322 = sbr.rel (%p320) target = $region44
      $region43: #{local_cross_attention.1} parent=11 // pred_region
        _
      $region44: #{local_cross_attention.1} parent=11 // pred_fallthru
        _
      // Predicated region
      $region45: #{local_cross_attention.1} parent=11 // pred_check
        %p323 = pneg %p258
      $region46: #{local_cross_attention.1} parent=11 // pred_check_branch
        %325 = sbr.rel (%p323) target = $region48
      $region47: #{local_cross_attention.1} parent=11 // pred_region
        _
      $region48: #{local_cross_attention.1} parent=11 // pred_fallthru
        _
    $region12: #{local_cross_attention.1} parent=5 // pred_fallthru
      _
    %p326 = scmp.lt.s32.totalorder %s17, 4
    // Predicated region
    $region49: #{local_cross_attention.1} parent=5 // pred_check
      %p327 = pneg %p326
    $region50: #{local_cross_attention.1} parent=5 // pred_check_branch
      %329 = sbr.rel (%p327) target = $region52
    $region51: #{local_cross_attention.1} parent=5 // pred_region
      // Predicated region
      $region53: #{local_cross_attention.1} parent=51 // pred_check
        %p330 = pneg %p37
      $region54: #{local_cross_attention.1} parent=51 // pred_check_branch
        %332 = sbr.rel (%p330) target = $region56
      $region55: #{local_cross_attention.1} parent=51 // pred_region
        %s333 = smul.u32 2, %s17
        %p334 = scmp.lt.s32.totalorder %s333, 7
        %s335 = scalar_select %p334, %s333, 7
        %s336 = smul.addr %s335, 8
        %s337 = smul.addr %s336, 8
        %s338 = scalar_lea.vmem %s0, %s337
        %s339 = smul.u32 2, %s17
      $region56: #{local_cross_attention.1} parent=51 // pred_fallthru
        _
      // Predicated region
      $region57: #{local_cross_attention.1} parent=51 // pred_check
        %p340 = pneg %p63
      $region58: #{local_cross_attention.1} parent=51 // pred_check_branch
        %342 = sbr.rel (%p340) target = $region60
      $region59: #{local_cross_attention.1} parent=51 // pred_region
        %s343 = smul.u32 2, %s17
        %p344 = scmp.lt.s32.totalorder %s343, 7
        %s345 = scalar_select %p344, %s343, 7
        %s346 = smul.addr %s345, 8
        %s347 = smul.addr %s346, 8
        %s348 = scalar_lea.vmem %s1, %s347
        %s349 = smul.u32 2, %s17
      $region60: #{local_cross_attention.1} parent=51 // pred_fallthru
        _
    $region52: #{local_cross_attention.1} parent=5 // pred_fallthru
      _
    %p350 = scmp.le.s32.totalorder 1, %s17
    %p351 = scmp.lt.s32.totalorder %s17, 5
    %p352 = pnand %p350, %p351
    %p353 = pneg %p352
    // Predicated region
    $region61: #{local_cross_attention.1} parent=5 // pred_check
      _
    $region62: #{local_cross_attention.1} parent=5 // pred_check_branch
      %355 = sbr.rel (%p352) target = $region64
    $region63: #{local_cross_attention.1} parent=5 // pred_region
      %s356 = ssub.s32 %s17, 1
      %s357 = smul.u32 2, %s22
      %p358 = scmp.lt.s32.totalorder %s357, 7
      %s359 = scalar_select %p358, %s357, 7
      %s360 = smul.addr %s359, 8
      %s361 = smul.addr %s360, 8
      %s362 = scalar_lea.vmem %s0, %s361
      %p363 = pneg %p43
      %p364 = pneg %p40
      %s365 = smul.u32 2, %s22
      %p366 = scmp.lt.s32.totalorder %s365, 7
      %s367 = scalar_select %p366, %s365, 7
      %s368 = smul.addr %s367, 8
      %s369 = smul.addr %s368, 8
      %s370 = scalar_lea.vmem %s1, %s369
      %p371 = pneg %p69
      %p372 = pneg %p66
      %p373 = pneg %p90
      %p374 = pneg %p87
      %p375 = pneg %p111
      %p376 = pneg %p108
      %p377 = pneg %p132
      %p378 = pneg %p129
      %p379 = pneg %p153
      %p380 = pneg %p150
      %p381 = pneg %p174
      %p382 = pneg %p171
      %p383 = pneg %p195
      %p384 = pneg %p192
      %p385 = pneg %p216
      %p386 = pneg %p213
      %p387 = pneg %p237
      %p388 = pneg %p234
      %p389 = pneg %p258
      %p390 = pneg %p255
      %p391 = pneg %p284
      %p392 = pneg %p281
      %s393 = smul.u32 2, %s22
      %p394 = scmp.lt.s32.totalorder %s393, 7
      %s395 = scalar_select %p394, %s393, 7
      %s396 = smul.addr %s395, 8
      %s397 = smul.addr %s396, 8
      %s398 = scalar_lea.vmem %s11, %s397
      %s399 = smul.u32 2, %s22
      %p400 = scmp.lt.s32.totalorder %s399, 7
      %s401 = scalar_select %p400, %s399, 7
      %s402 = smul.addr %s401, 8
      %s403 = smul.addr %s402, 8
      %s404 = scalar_lea.vmem %s0, %s403
      %s405 = smul.u32 2, %s22
      %s406 = smul.u32 2, %s22
      %p407 = scmp.lt.s32.totalorder %s406, 7
      %s408 = scalar_select %p407, %s406, 7
      %s409 = smul.addr %s408, 8
      %s410 = smul.addr %s409, 8
      %s411 = scalar_lea.vmem %s1, %s410
      %s412 = smul.u32 2, %s22
      %s413 = smul.u32 2, %s22
      %p414 = scmp.lt.s32.totalorder %s413, 7
      %s415 = scalar_select %p414, %s413, 7
      %s416 = smul.addr %s415, 8
      %s417 = smul.addr %s416, 8
      %s418 = scalar_lea.vmem %s11, %s417
      %s419 = smul.u32 2, %s22
      %v421 = vld [vmem:[%s404] sm:$0xff]
      %v422 = vld [vmem:[%s404 + $0x8] sm:$0xff]
      %v423 = vld [vmem:[%s404 + $0x10] sm:$0xff]
      %v424 = vld [vmem:[%s404 + $0x18] sm:$0xff]
      %v425 = vld [vmem:[%s404 + $0x20] sm:$0xff]
      %v426 = vld [vmem:[%s404 + $0x28] sm:$0xff]
      %v427 = vld [vmem:[%s404 + $0x30] sm:$0xff]
      %v428 = vld [vmem:[%s404 + $0x38] sm:$0xff]
      %v429 = vld [vmem:[%s404 + $0x40] sm:$0xff]
      %v430 = vld [vmem:[%s404 + $0x48] sm:$0xff]
      %v431 = vld [vmem:[%s404 + $0x50] sm:$0xff]
      %v432 = vld [vmem:[%s404 + $0x58] sm:$0xff]
      %v433 = vld [vmem:[%s404 + $0x60] sm:$0xff]
      %v434 = vld [vmem:[%s404 + $0x68] sm:$0xff]
      %v435 = vld [vmem:[%s404 + $0x70] sm:$0xff]
      %v436 = vld [vmem:[%s404 + $0x78] sm:$0xff]
      %v437 = vld [vmem:[%s411] sm:$0xff]
      %v438 = vld [vmem:[%s411 + $0x8] sm:$0xff]
      %v439 = vld [vmem:[%s411 + $0x10] sm:$0xff]
      %v440 = vld [vmem:[%s411 + $0x18] sm:$0xff]
      %v441 = vld [vmem:[%s411 + $0x20] sm:$0xff]
      %v442 = vld [vmem:[%s411 + $0x28] sm:$0xff]
      %v443 = vld [vmem:[%s411 + $0x30] sm:$0xff]
      %v444 = vld [vmem:[%s411 + $0x38] sm:$0xff]
      %v445 = vld [vmem:[%s411 + $0x40] sm:$0xff]
      %v446 = vld [vmem:[%s411 + $0x48] sm:$0xff]
      %v447 = vld [vmem:[%s411 + $0x50] sm:$0xff]
      %v448 = vld [vmem:[%s411 + $0x58] sm:$0xff]
      %v449 = vld [vmem:[%s411 + $0x60] sm:$0xff]
      %v450 = vld [vmem:[%s411 + $0x68] sm:$0xff]
      %v451 = vld [vmem:[%s411 + $0x70] sm:$0xff]
      %v452 = vld [vmem:[%s411 + $0x78] sm:$0xff]
      %v453 = vmul.f32 %v421, %v437
      %v454 = vmul.f32 %v422, %v438
      %v455 = vmul.f32 %v423, %v439
      %v456 = vmul.f32 %v424, %v440
      %v457 = vmul.f32 %v425, %v441
      %v458 = vmul.f32 %v426, %v442
      %v459 = vmul.f32 %v427, %v443
      %v460 = vmul.f32 %v428, %v444
      %v461 = vmul.f32 %v429, %v445
      %v462 = vmul.f32 %v430, %v446
      %v463 = vmul.f32 %v431, %v447
      %v464 = vmul.f32 %v432, %v448
      %v465 = vmul.f32 %v433, %v449
      %v466 = vmul.f32 %v434, %v450
      %v467 = vmul.f32 %v435, %v451
      %v468 = vmul.f32 %v436, %v452
      %vm469 = vcmask 261120
      %v470 = vsel %vm469, %v453, 0.0
      %471 = vadd.xlane.f32.xlu0 %v470
      %v472 = vpop.xlane.xlu0 %471
      %v473 = vsel %vm469, %v454, 0.0
      %474 = vadd.xlane.f32.xlu0 %v473
      %v475 = vpop.xlane.xlu0 %474
      %v476 = vsel %vm469, %v455, 0.0
      %477 = vadd.xlane.f32.xlu0 %v476
      %v478 = vpop.xlane.xlu0 %477
      %v479 = vsel %vm469, %v456, 0.0
      %480 = vadd.xlane.f32.xlu0 %v479
      %v481 = vpop.xlane.xlu0 %480
      %v482 = vsel %vm469, %v457, 0.0
      %483 = vadd.xlane.f32.xlu0 %v482
      %v484 = vpop.xlane.xlu0 %483
      %v485 = vsel %vm469, %v458, 0.0
      %486 = vadd.xlane.f32.xlu0 %v485
      %v487 = vpop.xlane.xlu0 %486
      %v488 = vsel %vm469, %v459, 0.0
      %489 = vadd.xlane.f32.xlu0 %v488
      %v490 = vpop.xlane.xlu0 %489
      %v491 = vsel %vm469, %v460, 0.0
      %492 = vadd.xlane.f32.xlu0 %v491
      %v493 = vpop.xlane.xlu0 %492
      %v494 = vsel %vm469, %v461, 0.0
      %495 = vadd.xlane.f32.xlu0 %v494
      %v496 = vpop.xlane.xlu0 %495
      %v497 = vsel %vm469, %v462, 0.0
      %498 = vadd.xlane.f32.xlu0 %v497
      %v499 = vpop.xlane.xlu0 %498
      %v500 = vsel %vm469, %v463, 0.0
      %501 = vadd.xlane.f32.xlu0 %v500
      %v502 = vpop.xlane.xlu0 %501
      %v503 = vsel %vm469, %v464, 0.0
      %504 = vadd.xlane.f32.xlu0 %v503
      %v505 = vpop.xlane.xlu0 %504
      %v506 = vsel %vm469, %v465, 0.0
      %507 = vadd.xlane.f32.xlu0 %v506
      %v508 = vpop.xlane.xlu0 %507
      %v509 = vsel %vm469, %v466, 0.0
      %510 = vadd.xlane.f32.xlu0 %v509
      %v511 = vpop.xlane.xlu0 %510
      %v512 = vsel %vm469, %v467, 0.0
      %513 = vadd.xlane.f32.xlu0 %v512
      %v514 = vpop.xlane.xlu0 %513
      %v515 = vsel %vm469, %v468, 0.0
      %516 = vadd.xlane.f32.xlu0 %v515
      %v517 = vpop.xlane.xlu0 %516
      %v518 = vmul.f32 %v421, %v421
      %v519 = vmul.f32 %v422, %v422
      %v520 = vmul.f32 %v423, %v423
      %v521 = vmul.f32 %v424, %v424
      %v522 = vmul.f32 %v425, %v425
      %v523 = vmul.f32 %v426, %v426
      %v524 = vmul.f32 %v427, %v427
      %v525 = vmul.f32 %v428, %v428
      %v526 = vmul.f32 %v429, %v429
      %v527 = vmul.f32 %v430, %v430
      %v528 = vmul.f32 %v431, %v431
      %v529 = vmul.f32 %v432, %v432
      %v530 = vmul.f32 %v433, %v433
      %v531 = vmul.f32 %v434, %v434
      %v532 = vmul.f32 %v435, %v435
      %v533 = vmul.f32 %v436, %v436
      %v534 = vsel %vm469, %v518, 0.0
      %535 = vadd.xlane.f32.xlu0 %v534
      %v536 = vpop.xlane.xlu0 %535
      %v537 = vsel %vm469, %v519, 0.0
      %538 = vadd.xlane.f32.xlu0 %v537
      %v539 = vpop.xlane.xlu0 %538
      %v540 = vsel %vm469, %v520, 0.0
      %541 = vadd.xlane.f32.xlu0 %v540
      %v542 = vpop.xlane.xlu0 %541
      %v543 = vsel %vm469, %v521, 0.0
      %544 = vadd.xlane.f32.xlu0 %v543
      %v545 = vpop.xlane.xlu0 %544
      %v546 = vsel %vm469, %v522, 0.0
      %547 = vadd.xlane.f32.xlu0 %v546
      %v548 = vpop.xlane.xlu0 %547
      %v549 = vsel %vm469, %v523, 0.0
      %550 = vadd.xlane.f32.xlu0 %v549
      %v551 = vpop.xlane.xlu0 %550
      %v552 = vsel %vm469, %v524, 0.0
      %553 = vadd.xlane.f32.xlu0 %v552
      %v554 = vpop.xlane.xlu0 %553
      %v555 = vsel %vm469, %v525, 0.0
      %556 = vadd.xlane.f32.xlu0 %v555
      %v557 = vpop.xlane.xlu0 %556
      %v558 = vsel %vm469, %v526, 0.0
      %559 = vadd.xlane.f32.xlu0 %v558
      %v560 = vpop.xlane.xlu0 %559
      %v561 = vsel %vm469, %v527, 0.0
      %562 = vadd.xlane.f32.xlu0 %v561
      %v563 = vpop.xlane.xlu0 %562
      %v564 = vsel %vm469, %v528, 0.0
      %565 = vadd.xlane.f32.xlu0 %v564
      %v566 = vpop.xlane.xlu0 %565
      %v567 = vsel %vm469, %v529, 0.0
      %568 = vadd.xlane.f32.xlu0 %v567
      %v569 = vpop.xlane.xlu0 %568
      %v570 = vsel %vm469, %v530, 0.0
      %571 = vadd.xlane.f32.xlu0 %v570
      %v572 = vpop.xlane.xlu0 %571
      %v573 = vsel %vm469, %v531, 0.0
      %574 = vadd.xlane.f32.xlu0 %v573
      %v575 = vpop.xlane.xlu0 %574
      %v576 = vsel %vm469, %v532, 0.0
      %577 = vadd.xlane.f32.xlu0 %v576
      %v578 = vpop.xlane.xlu0 %577
      %v579 = vsel %vm469, %v533, 0.0
      %580 = vadd.xlane.f32.xlu0 %v579
      %v581 = vpop.xlane.xlu0 %580
      %v582 = vmax.f32 %v536, 1e-16
      %v583 = vmax.f32 %v539, 1e-16
      %v584 = vmax.f32 %v542, 1e-16
      %v585 = vmax.f32 %v545, 1e-16
      %v586 = vmax.f32 %v548, 1e-16
      %v587 = vmax.f32 %v551, 1e-16
      %v588 = vmax.f32 %v554, 1e-16
      %v589 = vmax.f32 %v557, 1e-16
      %v590 = vmax.f32 %v560, 1e-16
      %v591 = vmax.f32 %v563, 1e-16
      %v592 = vmax.f32 %v566, 1e-16
      %v593 = vmax.f32 %v569, 1e-16
      %v594 = vmax.f32 %v572, 1e-16
      %v595 = vmax.f32 %v575, 1e-16
      %v596 = vmax.f32 %v578, 1e-16
      %v597 = vmax.f32 %v581, 1e-16
      %v598 = vrsqrt.pop %v582
      %v599 = vrsqrt.pop %v583
      %v600 = vrsqrt.pop %v584
      %v601 = vrsqrt.pop %v585
      %v602 = vrsqrt.pop %v586
      %v603 = vrsqrt.pop %v587
      %v604 = vrsqrt.pop %v588
      %v605 = vrsqrt.pop %v589
      %v606 = vrsqrt.pop %v590
      %v607 = vrsqrt.pop %v591
      %v608 = vrsqrt.pop %v592
      %v609 = vrsqrt.pop %v593
      %v610 = vrsqrt.pop %v594
      %v611 = vrsqrt.pop %v595
      %v612 = vrsqrt.pop %v596
      %v613 = vrsqrt.pop %v597
      %v614 = vmul.f32 %v437, %v437
      %v615 = vmul.f32 %v438, %v438
      %v616 = vmul.f32 %v439, %v439
      %v617 = vmul.f32 %v440, %v440
      %v618 = vmul.f32 %v441, %v441
      %v619 = vmul.f32 %v442, %v442
      %v620 = vmul.f32 %v443, %v443
      %v621 = vmul.f32 %v444, %v444
      %v622 = vmul.f32 %v445, %v445
      %v623 = vmul.f32 %v446, %v446
      %v624 = vmul.f32 %v447, %v447
      %v625 = vmul.f32 %v448, %v448
      %v626 = vmul.f32 %v449, %v449
      %v627 = vmul.f32 %v450, %v450
      %v628 = vmul.f32 %v451, %v451
      %v629 = vmul.f32 %v452, %v452
      %v630 = vsel %vm469, %v614, 0.0
      %631 = vadd.xlane.f32.xlu0 %v630
      %v632 = vpop.xlane.xlu0 %631
      %v633 = vsel %vm469, %v615, 0.0
      %634 = vadd.xlane.f32.xlu0 %v633
      %v635 = vpop.xlane.xlu0 %634
      %v636 = vsel %vm469, %v616, 0.0
      %637 = vadd.xlane.f32.xlu0 %v636
      %v638 = vpop.xlane.xlu0 %637
      %v639 = vsel %vm469, %v617, 0.0
      %640 = vadd.xlane.f32.xlu0 %v639
      %v641 = vpop.xlane.xlu0 %640
      %v642 = vsel %vm469, %v618, 0.0
      %643 = vadd.xlane.f32.xlu0 %v642
      %v644 = vpop.xlane.xlu0 %643
      %v645 = vsel %vm469, %v619, 0.0
      %646 = vadd.xlane.f32.xlu0 %v645
      %v647 = vpop.xlane.xlu0 %646
      %v648 = vsel %vm469, %v620, 0.0
      %649 = vadd.xlane.f32.xlu0 %v648
      %v650 = vpop.xlane.xlu0 %649
      %v651 = vsel %vm469, %v621, 0.0
      %652 = vadd.xlane.f32.xlu0 %v651
      %v653 = vpop.xlane.xlu0 %652
      %v654 = vsel %vm469, %v622, 0.0
      %655 = vadd.xlane.f32.xlu0 %v654
      %v656 = vpop.xlane.xlu0 %655
      %v657 = vsel %vm469, %v623, 0.0
      %658 = vadd.xlane.f32.xlu0 %v657
      %v659 = vpop.xlane.xlu0 %658
      %v660 = vsel %vm469, %v624, 0.0
      %661 = vadd.xlane.f32.xlu0 %v660
      %v662 = vpop.xlane.xlu0 %661
      %v663 = vsel %vm469, %v625, 0.0
      %664 = vadd.xlane.f32.xlu0 %v663
      %v665 = vpop.xlane.xlu0 %664
      %v666 = vsel %vm469, %v626, 0.0
      %667 = vadd.xlane.f32.xlu0 %v666
      %v668 = vpop.xlane.xlu0 %667
      %v669 = vsel %vm469, %v627, 0.0
      %670 = vadd.xlane.f32.xlu0 %v669
      %v671 = vpop.xlane.xlu0 %670
      %v672 = vsel %vm469, %v628, 0.0
      %673 = vadd.xlane.f32.xlu0 %v672
      %v674 = vpop.xlane.xlu0 %673
      %v675 = vsel %vm469, %v629, 0.0
      %676 = vadd.xlane.f32.xlu0 %v675
      %v677 = vpop.xlane.xlu0 %676
      %v678 = vmax.f32 %v632, 1e-16
      %v679 = vmax.f32 %v635, 1e-16
      %v680 = vmax.f32 %v638, 1e-16
      %v681 = vmax.f32 %v641, 1e-16
      %v682 = vmax.f32 %v644, 1e-16
      %v683 = vmax.f32 %v647, 1e-16
      %v684 = vmax.f32 %v650, 1e-16
      %v685 = vmax.f32 %v653, 1e-16
      %v686 = vmax.f32 %v656, 1e-16
      %v687 = vmax.f32 %v659, 1e-16
      %v688 = vmax.f32 %v662, 1e-16
      %v689 = vmax.f32 %v665, 1e-16
      %v690 = vmax.f32 %v668, 1e-16
      %v691 = vmax.f32 %v671, 1e-16
      %v692 = vmax.f32 %v674, 1e-16
      %v693 = vmax.f32 %v677, 1e-16
      %v694 = vrsqrt.pop %v678
      %v695 = vrsqrt.pop %v679
      %v696 = vrsqrt.pop %v680
      %v697 = vrsqrt.pop %v681
      %v698 = vrsqrt.pop %v682
      %v699 = vrsqrt.pop %v683
      %v700 = vrsqrt.pop %v684
      %v701 = vrsqrt.pop %v685
      %v702 = vrsqrt.pop %v686
      %v703 = vrsqrt.pop %v687
      %v704 = vrsqrt.pop %v688
      %v705 = vrsqrt.pop %v689
      %v706 = vrsqrt.pop %v690
      %v707 = vrsqrt.pop %v691
      %v708 = vrsqrt.pop %v692
      %v709 = vrsqrt.pop %v693
      %v710 = vmul.f32 %v472, %v598
      %v711 = vmul.f32 %v475, %v599
      %v712 = vmul.f32 %v478, %v600
      %v713 = vmul.f32 %v481, %v601
      %v714 = vmul.f32 %v484, %v602
      %v715 = vmul.f32 %v487, %v603
      %v716 = vmul.f32 %v490, %v604
      %v717 = vmul.f32 %v493, %v605
      %v718 = vmul.f32 %v496, %v606
      %v719 = vmul.f32 %v499, %v607
      %v720 = vmul.f32 %v502, %v608
      %v721 = vmul.f32 %v505, %v609
      %v722 = vmul.f32 %v508, %v610
      %v723 = vmul.f32 %v511, %v611
      %v724 = vmul.f32 %v514, %v612
      %v725 = vmul.f32 %v517, %v613
      %v726 = vmul.f32 %v710, %v694
      %v727 = vmul.f32 %v711, %v695
      %v728 = vmul.f32 %v712, %v696
      %v729 = vmul.f32 %v713, %v697
      %v730 = vmul.f32 %v714, %v698
      %v731 = vmul.f32 %v715, %v699
      %v732 = vmul.f32 %v716, %v700
      %v733 = vmul.f32 %v717, %v701
      %v734 = vmul.f32 %v718, %v702
      %v735 = vmul.f32 %v719, %v703
      %v736 = vmul.f32 %v720, %v704
      %v737 = vmul.f32 %v721, %v705
      %v738 = vmul.f32 %v722, %v706
      %v739 = vmul.f32 %v723, %v707
      %v740 = vmul.f32 %v724, %v708
      %v741 = vmul.f32 %v725, %v709
      %v742 = vadd.f32 %v726, 1.0
      %v743 = vadd.f32 %v727, 1.0
      %v744 = vadd.f32 %v728, 1.0
      %v745 = vadd.f32 %v729, 1.0
      %v746 = vadd.f32 %v730, 1.0
      %v747 = vadd.f32 %v731, 1.0
      %v748 = vadd.f32 %v732, 1.0
      %v749 = vadd.f32 %v733, 1.0
      %v750 = vadd.f32 %v734, 1.0
      %v751 = vadd.f32 %v735, 1.0
      %v752 = vadd.f32 %v736, 1.0
      %v753 = vadd.f32 %v737, 1.0
      %v754 = vadd.f32 %v738, 1.0
      %v755 = vadd.f32 %v739, 1.0
      %v756 = vadd.f32 %v740, 1.0
      %v757 = vadd.f32 %v741, 1.0
      %v758 = vmul.f32 %v742, 0.5
      %v759 = vmul.f32 %v743, 0.5
      %v760 = vmul.f32 %v744, 0.5
      %v761 = vmul.f32 %v745, 0.5
      %v762 = vmul.f32 %v746, 0.5
      %v763 = vmul.f32 %v747, 0.5
      %v764 = vmul.f32 %v748, 0.5
      %v765 = vmul.f32 %v749, 0.5
      %v766 = vmul.f32 %v750, 0.5
      %v767 = vmul.f32 %v751, 0.5
      %v768 = vmul.f32 %v752, 0.5
      %v769 = vmul.f32 %v753, 0.5
      %v770 = vmul.f32 %v754, 0.5
      %v771 = vmul.f32 %v755, 0.5
      %v772 = vmul.f32 %v756, 0.5
      %v773 = vmul.f32 %v757, 0.5
      %v774 = vld [vmem:[%s2] sm:$0x1]
      %v775 = vld [vmem:[%s3] sm:$0x1]
      %v776 = vsel %vm469, %v421, 0.0
      %777 = vadd.xlane.f32.xlu0 %v776
      %v778 = vpop.xlane.xlu0 %777
      %v779 = vsel %vm469, %v422, 0.0
      %780 = vadd.xlane.f32.xlu0 %v779
      %v781 = vpop.xlane.xlu0 %780
      %v782 = vsel %vm469, %v423, 0.0
      %783 = vadd.xlane.f32.xlu0 %v782
      %v784 = vpop.xlane.xlu0 %783
      %v785 = vsel %vm469, %v424, 0.0
      %786 = vadd.xlane.f32.xlu0 %v785
      %v787 = vpop.xlane.xlu0 %786
      %v788 = vsel %vm469, %v425, 0.0
      %789 = vadd.xlane.f32.xlu0 %v788
      %v790 = vpop.xlane.xlu0 %789
      %v791 = vsel %vm469, %v426, 0.0
      %792 = vadd.xlane.f32.xlu0 %v791
      %v793 = vpop.xlane.xlu0 %792
      %v794 = vsel %vm469, %v427, 0.0
      %795 = vadd.xlane.f32.xlu0 %v794
      %v796 = vpop.xlane.xlu0 %795
      %v797 = vsel %vm469, %v428, 0.0
      %798 = vadd.xlane.f32.xlu0 %v797
      %v799 = vpop.xlane.xlu0 %798
      %v800 = vsel %vm469, %v429, 0.0
      %801 = vadd.xlane.f32.xlu0 %v800
      %v802 = vpop.xlane.xlu0 %801
      %v803 = vsel %vm469, %v430, 0.0
      %804 = vadd.xlane.f32.xlu0 %v803
      %v805 = vpop.xlane.xlu0 %804
      %v806 = vsel %vm469, %v431, 0.0
      %807 = vadd.xlane.f32.xlu0 %v806
      %v808 = vpop.xlane.xlu0 %807
      %v809 = vsel %vm469, %v432, 0.0
      %810 = vadd.xlane.f32.xlu0 %v809
      %v811 = vpop.xlane.xlu0 %810
      %v812 = vsel %vm469, %v433, 0.0
      %813 = vadd.xlane.f32.xlu0 %v812
      %v814 = vpop.xlane.xlu0 %813
      %v815 = vsel %vm469, %v434, 0.0
      %816 = vadd.xlane.f32.xlu0 %v815
      %v817 = vpop.xlane.xlu0 %816
      %v818 = vsel %vm469, %v435, 0.0
      %819 = vadd.xlane.f32.xlu0 %v818
      %v820 = vpop.xlane.xlu0 %819
      %v821 = vsel %vm469, %v436, 0.0
      %822 = vadd.xlane.f32.xlu0 %v821
      %v823 = vpop.xlane.xlu0 %822
      %v824 = vrcp.pop 32.0
      %v825 = vmul.f32 %v778, %v824
      %v826 = vmul.f32 %v781, %v824
      %v827 = vmul.f32 %v784, %v824
      %v828 = vmul.f32 %v787, %v824
      %v829 = vmul.f32 %v790, %v824
      %v830 = vmul.f32 %v793, %v824
      %v831 = vmul.f32 %v796, %v824
      %v832 = vmul.f32 %v799, %v824
      %v833 = vmul.f32 %v802, %v824
      %v834 = vmul.f32 %v805, %v824
      %v835 = vmul.f32 %v808, %v824
      %v836 = vmul.f32 %v811, %v824
      %v837 = vmul.f32 %v814, %v824
      %v838 = vmul.f32 %v817, %v824
      %v839 = vmul.f32 %v820, %v824
      %v840 = vmul.f32 %v823, %v824
      %v841 = vsub.f32 %v421, %v825
      %v842 = vsub.f32 %v422, %v826
      %v843 = vsub.f32 %v423, %v827
      %v844 = vsub.f32 %v424, %v828
      %v845 = vsub.f32 %v425, %v829
      %v846 = vsub.f32 %v426, %v830
      %v847 = vsub.f32 %v427, %v831
      %v848 = vsub.f32 %v428, %v832
      %v849 = vsub.f32 %v429, %v833
      %v850 = vsub.f32 %v430, %v834
      %v851 = vsub.f32 %v431, %v835
      %v852 = vsub.f32 %v432, %v836
      %v853 = vsub.f32 %v433, %v837
      %v854 = vsub.f32 %v434, %v838
      %v855 = vsub.f32 %v435, %v839
      %v856 = vsub.f32 %v436, %v840
      %v857 = vmul.f32 %v841, %v841
      %v858 = vmul.f32 %v842, %v842
      %v859 = vmul.f32 %v843, %v843
      %v860 = vmul.f32 %v844, %v844
      %v861 = vmul.f32 %v845, %v845
      %v862 = vmul.f32 %v846, %v846
      %v863 = vmul.f32 %v847, %v847
      %v864 = vmul.f32 %v848, %v848
      %v865 = vmul.f32 %v849, %v849
      %v866 = vmul.f32 %v850, %v850
      %v867 = vmul.f32 %v851, %v851
      %v868 = vmul.f32 %v852, %v852
      %v869 = vmul.f32 %v853, %v853
      %v870 = vmul.f32 %v854, %v854
      %v871 = vmul.f32 %v855, %v855
      %v872 = vmul.f32 %v856, %v856
      %v873 = vsel %vm469, %v857, 0.0
      %874 = vadd.xlane.f32.xlu0 %v873
      %v875 = vpop.xlane.xlu0 %874
      %v876 = vsel %vm469, %v858, 0.0
      %877 = vadd.xlane.f32.xlu0 %v876
      %v878 = vpop.xlane.xlu0 %877
      %v879 = vsel %vm469, %v859, 0.0
      %880 = vadd.xlane.f32.xlu0 %v879
      %v881 = vpop.xlane.xlu0 %880
      %v882 = vsel %vm469, %v860, 0.0
      %883 = vadd.xlane.f32.xlu0 %v882
      %v884 = vpop.xlane.xlu0 %883
      %v885 = vsel %vm469, %v861, 0.0
      %886 = vadd.xlane.f32.xlu0 %v885
      %v887 = vpop.xlane.xlu0 %886
      %v888 = vsel %vm469, %v862, 0.0
      %889 = vadd.xlane.f32.xlu0 %v888
      %v890 = vpop.xlane.xlu0 %889
      %v891 = vsel %vm469, %v863, 0.0
      %892 = vadd.xlane.f32.xlu0 %v891
      %v893 = vpop.xlane.xlu0 %892
      %v894 = vsel %vm469, %v864, 0.0
      %895 = vadd.xlane.f32.xlu0 %v894
      %v896 = vpop.xlane.xlu0 %895
      %v897 = vsel %vm469, %v865, 0.0
      %898 = vadd.xlane.f32.xlu0 %v897
      %v899 = vpop.xlane.xlu0 %898
      %v900 = vsel %vm469, %v866, 0.0
      %901 = vadd.xlane.f32.xlu0 %v900
      %v902 = vpop.xlane.xlu0 %901
      %v903 = vsel %vm469, %v867, 0.0
      %904 = vadd.xlane.f32.xlu0 %v903
      %v905 = vpop.xlane.xlu0 %904
      %v906 = vsel %vm469, %v868, 0.0
      %907 = vadd.xlane.f32.xlu0 %v906
      %v908 = vpop.xlane.xlu0 %907
      %v909 = vsel %vm469, %v869, 0.0
      %910 = vadd.xlane.f32.xlu0 %v909
      %v911 = vpop.xlane.xlu0 %910
      %v912 = vsel %vm469, %v870, 0.0
      %913 = vadd.xlane.f32.xlu0 %v912
      %v914 = vpop.xlane.xlu0 %913
      %v915 = vsel %vm469, %v871, 0.0
      %916 = vadd.xlane.f32.xlu0 %v915
      %v917 = vpop.xlane.xlu0 %916
      %v918 = vsel %vm469, %v872, 0.0
      %919 = vadd.xlane.f32.xlu0 %v918
      %v920 = vpop.xlane.xlu0 %919
      %v921 = vmul.f32 %v875, %v824
      %v922 = vmul.f32 %v878, %v824
      %v923 = vmul.f32 %v881, %v824
      %v924 = vmul.f32 %v884, %v824
      %v925 = vmul.f32 %v887, %v824
      %v926 = vmul.f32 %v890, %v824
      %v927 = vmul.f32 %v893, %v824
      %v928 = vmul.f32 %v896, %v824
      %v929 = vmul.f32 %v899, %v824
      %v930 = vmul.f32 %v902, %v824
      %v931 = vmul.f32 %v905, %v824
      %v932 = vmul.f32 %v908, %v824
      %v933 = vmul.f32 %v911, %v824
      %v934 = vmul.f32 %v914, %v824
      %v935 = vmul.f32 %v917, %v824
      %v936 = vmul.f32 %v920, %v824
      %v937 = vadd.f32 %v921, 1e-05
      %v938 = vadd.f32 %v922, 1e-05
      %v939 = vadd.f32 %v923, 1e-05
      %v940 = vadd.f32 %v924, 1e-05
      %v941 = vadd.f32 %v925, 1e-05
      %v942 = vadd.f32 %v926, 1e-05
      %v943 = vadd.f32 %v927, 1e-05
      %v944 = vadd.f32 %v928, 1e-05
      %v945 = vadd.f32 %v929, 1e-05
      %v946 = vadd.f32 %v930, 1e-05
      %v947 = vadd.f32 %v931, 1e-05
      %v948 = vadd.f32 %v932, 1e-05
      %v949 = vadd.f32 %v933, 1e-05
      %v950 = vadd.f32 %v934, 1e-05
      %v951 = vadd.f32 %v935, 1e-05
      %v952 = vadd.f32 %v936, 1e-05
      %v953 = vrsqrt.pop %v937
      %v954 = vrsqrt.pop %v938
      %v955 = vrsqrt.pop %v939
      %v956 = vrsqrt.pop %v940
      %v957 = vrsqrt.pop %v941
      %v958 = vrsqrt.pop %v942
      %v959 = vrsqrt.pop %v943
      %v960 = vrsqrt.pop %v944
      %v961 = vrsqrt.pop %v945
      %v962 = vrsqrt.pop %v946
      %v963 = vrsqrt.pop %v947
      %v964 = vrsqrt.pop %v948
      %v965 = vrsqrt.pop %v949
      %v966 = vrsqrt.pop %v950
      %v967 = vrsqrt.pop %v951
      %v968 = vrsqrt.pop %v952
      %v969 = vmul.f32 %v841, %v953
      %v970 = vmul.f32 %v842, %v954
      %v971 = vmul.f32 %v843, %v955
      %v972 = vmul.f32 %v844, %v956
      %v973 = vmul.f32 %v845, %v957
      %v974 = vmul.f32 %v846, %v958
      %v975 = vmul.f32 %v847, %v959
      %v976 = vmul.f32 %v848, %v960
      %v977 = vmul.f32 %v849, %v961
      %v978 = vmul.f32 %v850, %v962
      %v979 = vmul.f32 %v851, %v963
      %v980 = vmul.f32 %v852, %v964
      %v981 = vmul.f32 %v853, %v965
      %v982 = vmul.f32 %v854, %v966
      %v983 = vmul.f32 %v855, %v967
      %v984 = vmul.f32 %v856, %v968
      %v986 = vlaneseq
      %v987 = vshrl.u32 %v986, 7
      %v988 = vsub.s32 0, %v987
      %v989 = vrot.slane %v774, %v988
      %v991 = vmul.f32 %v969, %v989
      %v992 = vmul.f32 %v970, %v989
      %v993 = vmul.f32 %v971, %v989
      %v994 = vmul.f32 %v972, %v989
      %v995 = vmul.f32 %v973, %v989
      %v996 = vmul.f32 %v974, %v989
      %v997 = vmul.f32 %v975, %v989
      %v998 = vmul.f32 %v976, %v989
      %v999 = vmul.f32 %v977, %v989
      %v1000 = vmul.f32 %v978, %v989
      %v1001 = vmul.f32 %v979, %v989
      %v1002 = vmul.f32 %v980, %v989
      %v1003 = vmul.f32 %v981, %v989
      %v1004 = vmul.f32 %v982, %v989
      %v1005 = vmul.f32 %v983, %v989
      %v1006 = vmul.f32 %v984, %v989
      %v1008 = vlaneseq
      %v1009 = vshrl.u32 %v1008, 7
      %v1010 = vsub.s32 0, %v1009
      %v1011 = vrot.slane %v775, %v1010
      %v1013 = vadd.f32 %v991, %v1011
      %v1014 = vadd.f32 %v992, %v1011
      %v1015 = vadd.f32 %v993, %v1011
      %v1016 = vadd.f32 %v994, %v1011
      %v1017 = vadd.f32 %v995, %v1011
      %v1018 = vadd.f32 %v996, %v1011
      %v1019 = vadd.f32 %v997, %v1011
      %v1020 = vadd.f32 %v998, %v1011
      %v1021 = vadd.f32 %v999, %v1011
      %v1022 = vadd.f32 %v1000, %v1011
      %v1023 = vadd.f32 %v1001, %v1011
      %v1024 = vadd.f32 %v1002, %v1011
      %v1025 = vadd.f32 %v1003, %v1011
      %v1026 = vadd.f32 %v1004, %v1011
      %v1027 = vadd.f32 %v1005, %v1011
      %v1028 = vadd.f32 %v1006, %v1011
      %v1029 = vpack.c.bf16 %v1014, %v1013
      %v1030 = vpack.c.bf16 %v1016, %v1015
      %v1031 = vpack.c.bf16 %v1018, %v1017
      %v1032 = vpack.c.bf16 %v1020, %v1019
      %v1033 = vpack.c.bf16 %v1022, %v1021
      %v1034 = vpack.c.bf16 %v1024, %v1023
      %v1035 = vpack.c.bf16 %v1026, %v1025
      %v1036 = vpack.c.bf16 %v1028, %v1027
      %v1037 = vld [vmem:[%s4] sm:$0x1]
      %v1038 = vld [vmem:[%s5] sm:$0x1]
      %v1039 = vsel %vm469, %v437, 0.0
      %1040 = vadd.xlane.f32.xlu0 %v1039
      %v1041 = vpop.xlane.xlu0 %1040
      %v1042 = vsel %vm469, %v438, 0.0
      %1043 = vadd.xlane.f32.xlu0 %v1042
      %v1044 = vpop.xlane.xlu0 %1043
      %v1045 = vsel %vm469, %v439, 0.0
      %1046 = vadd.xlane.f32.xlu0 %v1045
      %v1047 = vpop.xlane.xlu0 %1046
      %v1048 = vsel %vm469, %v440, 0.0
      %1049 = vadd.xlane.f32.xlu0 %v1048
      %v1050 = vpop.xlane.xlu0 %1049
      %v1051 = vsel %vm469, %v441, 0.0
      %1052 = vadd.xlane.f32.xlu0 %v1051
      %v1053 = vpop.xlane.xlu0 %1052
      %v1054 = vsel %vm469, %v442, 0.0
      %1055 = vadd.xlane.f32.xlu0 %v1054
      %v1056 = vpop.xlane.xlu0 %1055
      %v1057 = vsel %vm469, %v443, 0.0
      %1058 = vadd.xlane.f32.xlu0 %v1057
      %v1059 = vpop.xlane.xlu0 %1058
      %v1060 = vsel %vm469, %v444, 0.0
      %1061 = vadd.xlane.f32.xlu0 %v1060
      %v1062 = vpop.xlane.xlu0 %1061
      %v1063 = vsel %vm469, %v445, 0.0
      %1064 = vadd.xlane.f32.xlu0 %v1063
      %v1065 = vpop.xlane.xlu0 %1064
      %v1066 = vsel %vm469, %v446, 0.0
      %1067 = vadd.xlane.f32.xlu0 %v1066
      %v1068 = vpop.xlane.xlu0 %1067
      %v1069 = vsel %vm469, %v447, 0.0
      %1070 = vadd.xlane.f32.xlu0 %v1069
      %v1071 = vpop.xlane.xlu0 %1070
      %v1072 = vsel %vm469, %v448, 0.0
      %1073 = vadd.xlane.f32.xlu0 %v1072
      %v1074 = vpop.xlane.xlu0 %1073
      %v1075 = vsel %vm469, %v449, 0.0
      %1076 = vadd.xlane.f32.xlu0 %v1075
      %v1077 = vpop.xlane.xlu0 %1076
      %v1078 = vsel %vm469, %v450, 0.0
      %1079 = vadd.xlane.f32.xlu0 %v1078
      %v1080 = vpop.xlane.xlu0 %1079
      %v1081 = vsel %vm469, %v451, 0.0
      %1082 = vadd.xlane.f32.xlu0 %v1081
      %v1083 = vpop.xlane.xlu0 %1082
      %v1084 = vsel %vm469, %v452, 0.0
      %1085 = vadd.xlane.f32.xlu0 %v1084
      %v1086 = vpop.xlane.xlu0 %1085
      %v1087 = vmul.f32 %v1041, %v824
      %v1088 = vmul.f32 %v1044, %v824
      %v1089 = vmul.f32 %v1047, %v824
      %v1090 = vmul.f32 %v1050, %v824
      %v1091 = vmul.f32 %v1053, %v824
      %v1092 = vmul.f32 %v1056, %v824
      %v1093 = vmul.f32 %v1059, %v824
      %v1094 = vmul.f32 %v1062, %v824
      %v1095 = vmul.f32 %v1065, %v824
      %v1096 = vmul.f32 %v1068, %v824
      %v1097 = vmul.f32 %v1071, %v824
      %v1098 = vmul.f32 %v1074, %v824
      %v1099 = vmul.f32 %v1077, %v824
      %v1100 = vmul.f32 %v1080, %v824
      %v1101 = vmul.f32 %v1083, %v824
      %v1102 = vmul.f32 %v1086, %v824
      %v1103 = vsub.f32 %v437, %v1087
      %v1104 = vsub.f32 %v438, %v1088
      %v1105 = vsub.f32 %v439, %v1089
      %v1106 = vsub.f32 %v440, %v1090
      %v1107 = vsub.f32 %v441, %v1091
      %v1108 = vsub.f32 %v442, %v1092
      %v1109 = vsub.f32 %v443, %v1093
      %v1110 = vsub.f32 %v444, %v1094
      %v1111 = vsub.f32 %v445, %v1095
      %v1112 = vsub.f32 %v446, %v1096
      %v1113 = vsub.f32 %v447, %v1097
      %v1114 = vsub.f32 %v448, %v1098
      %v1115 = vsub.f32 %v449, %v1099
      %v1116 = vsub.f32 %v450, %v1100
      %v1117 = vsub.f32 %v451, %v1101
      %v1118 = vsub.f32 %v452, %v1102
      %v1119 = vmul.f32 %v1103, %v1103
      %v1120 = vmul.f32 %v1104, %v1104
      %v1121 = vmul.f32 %v1105, %v1105
      %v1122 = vmul.f32 %v1106, %v1106
      %v1123 = vmul.f32 %v1107, %v1107
      %v1124 = vmul.f32 %v1108, %v1108
      %v1125 = vmul.f32 %v1109, %v1109
      %v1126 = vmul.f32 %v1110, %v1110
      %v1127 = vmul.f32 %v1111, %v1111
      %v1128 = vmul.f32 %v1112, %v1112
      %v1129 = vmul.f32 %v1113, %v1113
      %v1130 = vmul.f32 %v1114, %v1114
      %v1131 = vmul.f32 %v1115, %v1115
      %v1132 = vmul.f32 %v1116, %v1116
      %v1133 = vmul.f32 %v1117, %v1117
      %v1134 = vmul.f32 %v1118, %v1118
      %v1135 = vsel %vm469, %v1119, 0.0
      %1136 = vadd.xlane.f32.xlu0 %v1135
      %v1137 = vpop.xlane.xlu0 %1136
      %v1138 = vsel %vm469, %v1120, 0.0
      %1139 = vadd.xlane.f32.xlu0 %v1138
      %v1140 = vpop.xlane.xlu0 %1139
      %v1141 = vsel %vm469, %v1121, 0.0
      %1142 = vadd.xlane.f32.xlu0 %v1141
      %v1143 = vpop.xlane.xlu0 %1142
      %v1144 = vsel %vm469, %v1122, 0.0
      %1145 = vadd.xlane.f32.xlu0 %v1144
      %v1146 = vpop.xlane.xlu0 %1145
      %v1147 = vsel %vm469, %v1123, 0.0
      %1148 = vadd.xlane.f32.xlu0 %v1147
      %v1149 = vpop.xlane.xlu0 %1148
      %v1150 = vsel %vm469, %v1124, 0.0
      %1151 = vadd.xlane.f32.xlu0 %v1150
      %v1152 = vpop.xlane.xlu0 %1151
      %v1153 = vsel %vm469, %v1125, 0.0
      %1154 = vadd.xlane.f32.xlu0 %v1153
      %v1155 = vpop.xlane.xlu0 %1154
      %v1156 = vsel %vm469, %v1126, 0.0
      %1157 = vadd.xlane.f32.xlu0 %v1156
      %v1158 = vpop.xlane.xlu0 %1157
      %v1159 = vsel %vm469, %v1127, 0.0
      %1160 = vadd.xlane.f32.xlu0 %v1159
      %v1161 = vpop.xlane.xlu0 %1160
      %v1162 = vsel %vm469, %v1128, 0.0
      %1163 = vadd.xlane.f32.xlu0 %v1162
      %v1164 = vpop.xlane.xlu0 %1163
      %v1165 = vsel %vm469, %v1129, 0.0
      %1166 = vadd.xlane.f32.xlu0 %v1165
      %v1167 = vpop.xlane.xlu0 %1166
      %v1168 = vsel %vm469, %v1130, 0.0
      %1169 = vadd.xlane.f32.xlu0 %v1168
      %v1170 = vpop.xlane.xlu0 %1169
      %v1171 = vsel %vm469, %v1131, 0.0
      %1172 = vadd.xlane.f32.xlu0 %v1171
      %v1173 = vpop.xlane.xlu0 %1172
      %v1174 = vsel %vm469, %v1132, 0.0
      %1175 = vadd.xlane.f32.xlu0 %v1174
      %v1176 = vpop.xlane.xlu0 %1175
      %v1177 = vsel %vm469, %v1133, 0.0
      %1178 = vadd.xlane.f32.xlu0 %v1177
      %v1179 = vpop.xlane.xlu0 %1178
      %v1180 = vsel %vm469, %v1134, 0.0
      %1181 = vadd.xlane.f32.xlu0 %v1180
      %v1182 = vpop.xlane.xlu0 %1181
      %v1183 = vmul.f32 %v1137, %v824
      %v1184 = vmul.f32 %v1140, %v824
      %v1185 = vmul.f32 %v1143, %v824
      %v1186 = vmul.f32 %v1146, %v824
      %v1187 = vmul.f32 %v1149, %v824
      %v1188 = vmul.f32 %v1152, %v824
      %v1189 = vmul.f32 %v1155, %v824
      %v1190 = vmul.f32 %v1158, %v824
      %v1191 = vmul.f32 %v1161, %v824
      %v1192 = vmul.f32 %v1164, %v824
      %v1193 = vmul.f32 %v1167, %v824
      %v1194 = vmul.f32 %v1170, %v824
      %v1195 = vmul.f32 %v1173, %v824
      %v1196 = vmul.f32 %v1176, %v824
      %v1197 = vmul.f32 %v1179, %v824
      %v1198 = vmul.f32 %v1182, %v824
      %v1199 = vadd.f32 %v1183, 1e-05
      %v1200 = vadd.f32 %v1184, 1e-05
      %v1201 = vadd.f32 %v1185, 1e-05
      %v1202 = vadd.f32 %v1186, 1e-05
      %v1203 = vadd.f32 %v1187, 1e-05
      %v1204 = vadd.f32 %v1188, 1e-05
      %v1205 = vadd.f32 %v1189, 1e-05
      %v1206 = vadd.f32 %v1190, 1e-05
      %v1207 = vadd.f32 %v1191, 1e-05
      %v1208 = vadd.f32 %v1192, 1e-05
      %v1209 = vadd.f32 %v1193, 1e-05
      %v1210 = vadd.f32 %v1194, 1e-05
      %v1211 = vadd.f32 %v1195, 1e-05
      %v1212 = vadd.f32 %v1196, 1e-05
      %v1213 = vadd.f32 %v1197, 1e-05
      %v1214 = vadd.f32 %v1198, 1e-05
      %v1215 = vrsqrt.pop %v1199
      %v1216 = vrsqrt.pop %v1200
      %v1217 = vrsqrt.pop %v1201
      %v1218 = vrsqrt.pop %v1202
      %v1219 = vrsqrt.pop %v1203
      %v1220 = vrsqrt.pop %v1204
      %v1221 = vrsqrt.pop %v1205
      %v1222 = vrsqrt.pop %v1206
      %v1223 = vrsqrt.pop %v1207
      %v1224 = vrsqrt.pop %v1208
      %v1225 = vrsqrt.pop %v1209
      %v1226 = vrsqrt.pop %v1210
      %v1227 = vrsqrt.pop %v1211
      %v1228 = vrsqrt.pop %v1212
      %v1229 = vrsqrt.pop %v1213
      %v1230 = vrsqrt.pop %v1214
      %v1231 = vmul.f32 %v1103, %v1215
      %v1232 = vmul.f32 %v1104, %v1216
      %v1233 = vmul.f32 %v1105, %v1217
      %v1234 = vmul.f32 %v1106, %v1218
      %v1235 = vmul.f32 %v1107, %v1219
      %v1236 = vmul.f32 %v1108, %v1220
      %v1237 = vmul.f32 %v1109, %v1221
      %v1238 = vmul.f32 %v1110, %v1222
      %v1239 = vmul.f32 %v1111, %v1223
      %v1240 = vmul.f32 %v1112, %v1224
      %v1241 = vmul.f32 %v1113, %v1225
      %v1242 = vmul.f32 %v1114, %v1226
      %v1243 = vmul.f32 %v1115, %v1227
      %v1244 = vmul.f32 %v1116, %v1228
      %v1245 = vmul.f32 %v1117, %v1229
      %v1246 = vmul.f32 %v1118, %v1230
      %v1248 = vlaneseq
      %v1249 = vshrl.u32 %v1248, 7
      %v1250 = vsub.s32 0, %v1249
      %v1251 = vrot.slane %v1037, %v1250
      %v1253 = vmul.f32 %v1231, %v1251
      %v1254 = vmul.f32 %v1232, %v1251
      %v1255 = vmul.f32 %v1233, %v1251
      %v1256 = vmul.f32 %v1234, %v1251
      %v1257 = vmul.f32 %v1235, %v1251
      %v1258 = vmul.f32 %v1236, %v1251
      %v1259 = vmul.f32 %v1237, %v1251
      %v1260 = vmul.f32 %v1238, %v1251
      %v1261 = vmul.f32 %v1239, %v1251
      %v1262 = vmul.f32 %v1240, %v1251
      %v1263 = vmul.f32 %v1241, %v1251
      %v1264 = vmul.f32 %v1242, %v1251
      %v1265 = vmul.f32 %v1243, %v1251
      %v1266 = vmul.f32 %v1244, %v1251
      %v1267 = vmul.f32 %v1245, %v1251
      %v1268 = vmul.f32 %v1246, %v1251
      %v1270 = vlaneseq
      %v1271 = vshrl.u32 %v1270, 7
      %v1272 = vsub.s32 0, %v1271
      %v1273 = vrot.slane %v1038, %v1272
      %v1275 = vadd.f32 %v1253, %v1273
      %v1276 = vadd.f32 %v1254, %v1273
      %v1277 = vadd.f32 %v1255, %v1273
      %v1278 = vadd.f32 %v1256, %v1273
      %v1279 = vadd.f32 %v1257, %v1273
      %v1280 = vadd.f32 %v1258, %v1273
      %v1281 = vadd.f32 %v1259, %v1273
      %v1282 = vadd.f32 %v1260, %v1273
      %v1283 = vadd.f32 %v1261, %v1273
      %v1284 = vadd.f32 %v1262, %v1273
      %v1285 = vadd.f32 %v1263, %v1273
      %v1286 = vadd.f32 %v1264, %v1273
      %v1287 = vadd.f32 %v1265, %v1273
      %v1288 = vadd.f32 %v1266, %v1273
      %v1289 = vadd.f32 %v1267, %v1273
      %v1290 = vadd.f32 %v1268, %v1273
      %v1291 = vpack.c.bf16 %v1276, %v1275
      %v1292 = vpack.c.bf16 %v1278, %v1277
      %v1293 = vpack.c.bf16 %v1280, %v1279
      %v1294 = vpack.c.bf16 %v1282, %v1281
      %v1295 = vpack.c.bf16 %v1284, %v1283
      %v1296 = vpack.c.bf16 %v1286, %v1285
      %v1297 = vpack.c.bf16 %v1288, %v1287
      %v1298 = vpack.c.bf16 %v1290, %v1289
      %v1299 = vld [vmem:[%s6] sm:$0xf]
      %v1300 = vld [vmem:[%s6 + $0x4] sm:$0xf]
      %v1301 = vld [vmem:[%s6 + $0x8] sm:$0xf]
      %v1302 = vld [vmem:[%s6 + $0xc] sm:$0xf]
      %v1303 = vld [vmem:[%s7] sm:$0x1]
      %v1305 = vlaneseq
      %v1306 = vshrl.u32 %v1305, 7
      %v1307 = vsub.s32 0, %v1306
      %v1308 = vrot.slane %v1303, %v1307
      %v1314 = vunpack.c.l.b16 %v1299
      %v1315 = vunpack.c.l.b16 %v1300
      %v1316 = vunpack.c.l.b16 %v1301
      %v1317 = vunpack.c.l.b16 %v1302
      %v1318 = vpack.c.b16 %v1315, %v1314
      %v1319 = vpack.c.b16 %v1317, %v1316
      %v1323 = vsel %vm469, %v1029, 0
      %v1326 = vsel %vm469, %v1030, 0
      %v1329 = vsel %vm469, %v1031, 0
      %v1332 = vsel %vm469, %v1032, 0
      %v1335 = vsel %vm469, %v1033, 0
      %v1338 = vsel %vm469, %v1034, 0
      %v1341 = vsel %vm469, %v1035, 0
      %v1344 = vsel %vm469, %v1036, 0
      %1346 = vmatprep.subr.bf16.mxu0 0
      %1347 = vmatpush1.bf16.msra.mxu0 0
      %1348 = vmatprep.subr.bf16.mxu0 0
      %1349 = vmatpush1.bf16.msra.mxu0 0
      %1350 = vmatprep.subr.bf16.mxu0 0
      %1351 = vmatpush1.bf16.msra.mxu0 0
      %1352 = vmatprep.subr.bf16.mxu0 0
      %1353 = vmatpush1.bf16.msra.mxu0 0
      %1354 = vmatprep.subr.bf16.mxu0 0
      %1355 = vmatpush1.bf16.msra.mxu0 0
      %1356 = vmatprep.subr.bf16.mxu0 0
      %1357 = vmatpush1.bf16.msra.mxu0 0
      %1358 = vmatprep.subr.bf16.mxu0 0
      %1359 = vmatpush1.bf16.msra.mxu0 %v1319
      %1360 = vmatprep.subr.bf16.mxu0 0
      %1361 = vmatpush1.bf16.msra.mxu0 %v1318
      %1362 = vmatprep.subr.bf16.mxu0 0
      %1363 = vmatpush2.bf16.msra.mxu0 0
      %1364 = vmatprep.subr.bf16.mxu0 0
      %1365 = vmatpush2.bf16.msra.mxu0 0
      %1366 = vmatprep.subr.bf16.mxu0 0
      %1367 = vmatpush2.bf16.msra.mxu0 0
      %1368 = vmatprep.subr.bf16.mxu0 0
      %1369 = vmatpush2.bf16.msra.mxu0 0
      %1370 = vmatprep.subr.bf16.mxu0 0
      %1371 = vmatpush2.bf16.msra.mxu0 0
      %1372 = vmatprep.subr.bf16.mxu0 0
      %1373 = vmatpush2.bf16.msra.mxu0 0
      %1374 = vmatprep.subr.bf16.mxu0 0
      %1375 = vmatpush2.bf16.msra.mxu0 0
      %1376 = vmatprep.subr.bf16.mxu0 0
      %1377 = vmatpush2.bf16.msra.mxu0 0
      %1378 = vmatprep.mubr.bf16.mxu0 0
      %1379 = vmatmul.mubr.bf16.gmra.mxu0 %v1323
      %v1380 = vpop.f32.mrf.mxu0
      %v1381 = vadd.f32 %v1308, %v1380
      %v1382 = vpop.f32.mrf.mxu0
      %v1383 = vpop.f32.mrf.mxu0
      %v1384 = vadd.f32 %v1308, %v1383
      %v1385 = vpop.f32.mrf.mxu0
      %1386 = vmatprep.mubr.bf16.mxu0 0
      %1387 = vmatmul.mubr.bf16.gmra.mxu0 %v1326
      %v1388 = vpop.f32.mrf.mxu0
      %v1389 = vadd.f32 %v1308, %v1388
      %v1390 = vpop.f32.mrf.mxu0
      %v1391 = vpop.f32.mrf.mxu0
      %v1392 = vadd.f32 %v1308, %v1391
      %v1393 = vpop.f32.mrf.mxu0
      %1394 = vmatprep.mubr.bf16.mxu0 0
      %1395 = vmatmul.mubr.bf16.gmra.mxu0 %v1329
      %v1396 = vpop.f32.mrf.mxu0
      %v1397 = vadd.f32 %v1308, %v1396
      %v1398 = vpop.f32.mrf.mxu0
      %v1399 = vpop.f32.mrf.mxu0
      %v1400 = vadd.f32 %v1308, %v1399
      %v1401 = vpop.f32.mrf.mxu0
      %1402 = vmatprep.mubr.bf16.mxu0 0
      %1403 = vmatmul.mubr.bf16.gmra.mxu0 %v1332
      %v1404 = vpop.f32.mrf.mxu0
      %v1405 = vadd.f32 %v1308, %v1404
      %v1406 = vpop.f32.mrf.mxu0
      %v1407 = vpop.f32.mrf.mxu0
      %v1408 = vadd.f32 %v1308, %v1407
      %v1409 = vpop.f32.mrf.mxu0
      %1410 = vmatprep.mubr.bf16.mxu0 0
      %1411 = vmatmul.mubr.bf16.gmra.mxu0 %v1335
      %v1412 = vpop.f32.mrf.mxu0
      %v1413 = vadd.f32 %v1308, %v1412
      %v1414 = vpop.f32.mrf.mxu0
      %v1415 = vpop.f32.mrf.mxu0
      %v1416 = vadd.f32 %v1308, %v1415
      %v1417 = vpop.f32.mrf.mxu0
      %1418 = vmatprep.mubr.bf16.mxu0 0
      %1419 = vmatmul.mubr.bf16.gmra.mxu0 %v1338
      %v1420 = vpop.f32.mrf.mxu0
      %v1421 = vadd.f32 %v1308, %v1420
      %v1422 = vpop.f32.mrf.mxu0
      %v1423 = vpop.f32.mrf.mxu0
      %v1424 = vadd.f32 %v1308, %v1423
      %v1425 = vpop.f32.mrf.mxu0
      %1426 = vmatprep.mubr.bf16.mxu0 0
      %1427 = vmatmul.mubr.bf16.gmra.mxu0 %v1341
      %v1428 = vpop.f32.mrf.mxu0
      %v1429 = vadd.f32 %v1308, %v1428
      %v1430 = vpop.f32.mrf.mxu0
      %v1431 = vpop.f32.mrf.mxu0
      %v1432 = vadd.f32 %v1308, %v1431
      %v1433 = vpop.f32.mrf.mxu0
      %1434 = vmatprep.mubr.bf16.mxu0 0
      %1435 = vmatmul.mubr.bf16.gmra.mxu0 %v1344
      %v1436 = vpop.f32.mrf.mxu0
      %v1437 = vadd.f32 %v1308, %v1436
      %v1438 = vpop.f32.mrf.mxu0
      %v1439 = vpop.f32.mrf.mxu0
      %v1440 = vadd.f32 %v1308, %v1439
      %v1441 = vpop.f32.mrf.mxu0
      %1442 = vdwg.mxu0
      %v1443 = vpack.c.bf16 %v1384, %v1381
      %v1444 = vpack.c.bf16 %v1392, %v1389
      %v1445 = vpack.c.bf16 %v1400, %v1397
      %v1446 = vpack.c.bf16 %v1408, %v1405
      %v1447 = vpack.c.bf16 %v1416, %v1413
      %v1448 = vpack.c.bf16 %v1424, %v1421
      %v1449 = vpack.c.bf16 %v1432, %v1429
      %v1450 = vpack.c.bf16 %v1440, %v1437
      %v1451 = vld [vmem:[%s8] sm:$0xf]
      %v1452 = vld [vmem:[%s8 + $0x4] sm:$0xf]
      %v1453 = vld [vmem:[%s8 + $0x8] sm:$0xf]
      %v1454 = vld [vmem:[%s8 + $0xc] sm:$0xf]
      %v1459 = vunpack.c.l.b16 %v1451
      %v1460 = vunpack.c.l.b16 %v1452
      %v1461 = vunpack.c.l.b16 %v1453
      %v1462 = vunpack.c.l.b16 %v1454
      %v1463 = vpack.c.b16 %v1460, %v1459
      %v1464 = vpack.c.b16 %v1462, %v1461
      %v1468 = vsel %vm469, %v1291, 0
      %v1471 = vsel %vm469, %v1292, 0
      %v1474 = vsel %vm469, %v1293, 0
      %v1477 = vsel %vm469, %v1294, 0
      %v1480 = vsel %vm469, %v1295, 0
      %v1483 = vsel %vm469, %v1296, 0
      %v1486 = vsel %vm469, %v1297, 0
      %v1489 = vsel %vm469, %v1298, 0
      %1491 = vmatprep.subr.bf16.mxu0 0
      %1492 = vmatpush1.bf16.msra.mxu0 0
      %1493 = vmatprep.subr.bf16.mxu0 0
      %1494 = vmatpush1.bf16.msra.mxu0 0
      %1495 = vmatprep.subr.bf16.mxu0 0
      %1496 = vmatpush1.bf16.msra.mxu0 0
      %1497 = vmatprep.subr.bf16.mxu0 0
      %1498 = vmatpush1.bf16.msra.mxu0 0
      %1499 = vmatprep.subr.bf16.mxu0 0
      %1500 = vmatpush1.bf16.msra.mxu0 0
      %1501 = vmatprep.subr.bf16.mxu0 0
      %1502 = vmatpush1.bf16.msra.mxu0 0
      %1503 = vmatprep.subr.bf16.mxu0 0
      %1504 = vmatpush1.bf16.msra.mxu0 %v1464
      %1505 = vmatprep.subr.bf16.mxu0 0
      %1506 = vmatpush1.bf16.msra.mxu0 %v1463
      %1507 = vmatprep.subr.bf16.mxu0 0
      %1508 = vmatpush2.bf16.msra.mxu0 0
      %1509 = vmatprep.subr.bf16.mxu0 0
      %1510 = vmatpush2.bf16.msra.mxu0 0
      %1511 = vmatprep.subr.bf16.mxu0 0
      %1512 = vmatpush2.bf16.msra.mxu0 0
      %1513 = vmatprep.subr.bf16.mxu0 0
      %1514 = vmatpush2.bf16.msra.mxu0 0
      %1515 = vmatprep.subr.bf16.mxu0 0
      %1516 = vmatpush2.bf16.msra.mxu0 0
      %1517 = vmatprep.subr.bf16.mxu0 0
      %1518 = vmatpush2.bf16.msra.mxu0 0
      %1519 = vmatprep.subr.bf16.mxu0 0
      %1520 = vmatpush2.bf16.msra.mxu0 0
      %1521 = vmatprep.subr.bf16.mxu0 0
      %1522 = vmatpush2.bf16.msra.mxu0 0
      %1523 = vmatprep.mubr.bf16.mxu0 0
      %1524 = vmatmul.mubr.bf16.gmra.mxu0 %v1468
      %v1525 = vpop.f32.mrf.mxu0
      %v1526 = vadd.f32 0.0, %v1525
      %v1527 = vpop.f32.mrf.mxu0
      %v1528 = vpop.f32.mrf.mxu0
      %v1529 = vadd.f32 0.0, %v1528
      %v1530 = vpop.f32.mrf.mxu0
      %1531 = vmatprep.mubr.bf16.mxu0 0
      %1532 = vmatmul.mubr.bf16.gmra.mxu0 %v1471
      %v1533 = vpop.f32.mrf.mxu0
      %v1534 = vadd.f32 0.0, %v1533
      %v1535 = vpop.f32.mrf.mxu0
      %v1536 = vpop.f32.mrf.mxu0
      %v1537 = vadd.f32 0.0, %v1536
      %v1538 = vpop.f32.mrf.mxu0
      %1539 = vmatprep.mubr.bf16.mxu0 0
      %1540 = vmatmul.mubr.bf16.gmra.mxu0 %v1474
      %v1541 = vpop.f32.mrf.mxu0
      %v1542 = vadd.f32 0.0, %v1541
      %v1543 = vpop.f32.mrf.mxu0
      %v1544 = vpop.f32.mrf.mxu0
      %v1545 = vadd.f32 0.0, %v1544
      %v1546 = vpop.f32.mrf.mxu0
      %1547 = vmatprep.mubr.bf16.mxu0 0
      %1548 = vmatmul.mubr.bf16.gmra.mxu0 %v1477
      %v1549 = vpop.f32.mrf.mxu0
      %v1550 = vadd.f32 0.0, %v1549
      %v1551 = vpop.f32.mrf.mxu0
      %v1552 = vpop.f32.mrf.mxu0
      %v1553 = vadd.f32 0.0, %v1552
      %v1554 = vpop.f32.mrf.mxu0
      %1555 = vmatprep.mubr.bf16.mxu0 0
      %1556 = vmatmul.mubr.bf16.gmra.mxu0 %v1480
      %v1557 = vpop.f32.mrf.mxu0
      %v1558 = vadd.f32 0.0, %v1557
      %v1559 = vpop.f32.mrf.mxu0
      %v1560 = vpop.f32.mrf.mxu0
      %v1561 = vadd.f32 0.0, %v1560
      %v1562 = vpop.f32.mrf.mxu0
      %1563 = vmatprep.mubr.bf16.mxu0 0
      %1564 = vmatmul.mubr.bf16.gmra.mxu0 %v1483
      %v1565 = vpop.f32.mrf.mxu0
      %v1566 = vadd.f32 0.0, %v1565
      %v1567 = vpop.f32.mrf.mxu0
      %v1568 = vpop.f32.mrf.mxu0
      %v1569 = vadd.f32 0.0, %v1568
      %v1570 = vpop.f32.mrf.mxu0
      %1571 = vmatprep.mubr.bf16.mxu0 0
      %1572 = vmatmul.mubr.bf16.gmra.mxu0 %v1486
      %v1573 = vpop.f32.mrf.mxu0
      %v1574 = vadd.f32 0.0, %v1573
      %v1575 = vpop.f32.mrf.mxu0
      %v1576 = vpop.f32.mrf.mxu0
      %v1577 = vadd.f32 0.0, %v1576
      %v1578 = vpop.f32.mrf.mxu0
      %1579 = vmatprep.mubr.bf16.mxu0 0
      %1580 = vmatmul.mubr.bf16.gmra.mxu0 %v1489
      %v1581 = vpop.f32.mrf.mxu0
      %v1582 = vadd.f32 0.0, %v1581
      %v1583 = vpop.f32.mrf.mxu0
      %v1584 = vpop.f32.mrf.mxu0
      %v1585 = vadd.f32 0.0, %v1584
      %v1586 = vpop.f32.mrf.mxu0
      %1587 = vdwg.mxu0
      %v1588 = vpack.c.bf16 %v1529, %v1526
      %v1589 = vpack.c.bf16 %v1537, %v1534
      %v1590 = vpack.c.bf16 %v1545, %v1542
      %v1591 = vpack.c.bf16 %v1553, %v1550
      %v1592 = vpack.c.bf16 %v1561, %v1558
      %v1593 = vpack.c.bf16 %v1569, %v1566
      %v1594 = vpack.c.bf16 %v1577, %v1574
      %v1595 = vpack.c.bf16 %v1585, %v1582
      %vm1596 = vcmask 64512
      %v1598 = vsel %vm1596, %v1443, 0
      %v1601 = vsel %vm1596, %v1444, 0
      %v1604 = vsel %vm1596, %v1445, 0
      %v1607 = vsel %vm1596, %v1446, 0
      %v1610 = vsel %vm1596, %v1588, 0
      %v1613 = vsel %vm1596, %v1589, 0
      %v1616 = vsel %vm1596, %v1590, 0
      %v1619 = vsel %vm1596, %v1591, 0
      %1621 = vmatprep.subr.bf16.mxu0 0
      %1622 = vmatpush1.bf16.xpose.msra.mxu0 0
      %1623 = vmatprep.subr.bf16.mxu0 0
      %1624 = vmatpush1.bf16.xpose.msra.mxu0 0
      %1625 = vmatprep.subr.bf16.mxu0 0
      %1626 = vmatpush1.bf16.xpose.msra.mxu0 0
      %1627 = vmatprep.subr.bf16.mxu0 0
      %1628 = vmatpush1.bf16.xpose.msra.mxu0 0
      %1629 = vmatprep.subr.bf16.mxu0 0
      %1630 = vmatpush1.bf16.xpose.msra.mxu0 %v1619
      %1631 = vmatprep.subr.bf16.mxu0 0
      %1632 = vmatpush1.bf16.xpose.msra.mxu0 %v1616
      %1633 = vmatprep.subr.bf16.mxu0 0
      %1634 = vmatpush1.bf16.xpose.msra.mxu0 %v1613
      %1635 = vmatprep.subr.bf16.mxu0 0
      %1636 = vmatpush1.bf16.xpose.msra.mxu0 %v1610
      %1637 = vmatprep.subr.bf16.mxu0 0
      %1638 = vmatpush2.bf16.xpose.msra.mxu0 0
      %1639 = vmatprep.subr.bf16.mxu0 0
      %1640 = vmatpush2.bf16.xpose.msra.mxu0 0
      %1641 = vmatprep.subr.bf16.mxu0 0
      %1642 = vmatpush2.bf16.xpose.msra.mxu0 0
      %1643 = vmatprep.subr.bf16.mxu0 0
      %1644 = vmatpush2.bf16.xpose.msra.mxu0 0
      %1645 = vmatprep.subr.bf16.mxu0 0
      %1646 = vmatpush2.bf16.xpose.msra.mxu0 0
      %1647 = vmatprep.subr.bf16.mxu0 0
      %1648 = vmatpush2.bf16.xpose.msra.mxu0 0
      %1649 = vmatprep.subr.bf16.mxu0 0
      %1650 = vmatpush2.bf16.xpose.msra.mxu0 0
      %1651 = vmatprep.subr.bf16.mxu0 0
      %1652 = vmatpush2.bf16.xpose.msra.mxu0 0
      %1653 = vmatprep.mubr.bf16.mxu0 0
      %1654 = vmatmul.mubr.bf16.gmra.mxu0 %v1598
      %v1655 = vpop.f32.mrf.mxu0
      %v1656 = vadd.f32 0.0, %v1655
      %v1657 = vpop.f32.mrf.mxu0
      %v1658 = vpop.f32.mrf.mxu0
      %v1659 = vadd.f32 0.0, %v1658
      %v1660 = vpop.f32.mrf.mxu0
      %1661 = vmatprep.mubr.bf16.mxu0 0
      %1662 = vmatmul.mubr.bf16.gmra.mxu0 %v1601
      %v1663 = vpop.f32.mrf.mxu0
      %v1664 = vadd.f32 0.0, %v1663
      %v1665 = vpop.f32.mrf.mxu0
      %v1666 = vpop.f32.mrf.mxu0
      %v1667 = vadd.f32 0.0, %v1666
      %v1668 = vpop.f32.mrf.mxu0
      %1669 = vmatprep.mubr.bf16.mxu0 0
      %1670 = vmatmul.mubr.bf16.gmra.mxu0 %v1604
      %v1671 = vpop.f32.mrf.mxu0
      %v1672 = vadd.f32 0.0, %v1671
      %v1673 = vpop.f32.mrf.mxu0
      %v1674 = vpop.f32.mrf.mxu0
      %v1675 = vadd.f32 0.0, %v1674
      %v1676 = vpop.f32.mrf.mxu0
      %1677 = vmatprep.mubr.bf16.mxu0 0
      %1678 = vmatmul.mubr.bf16.gmra.mxu0 %v1607
      %v1679 = vpop.f32.mrf.mxu0
      %v1680 = vadd.f32 0.0, %v1679
      %v1681 = vpop.f32.mrf.mxu0
      %v1682 = vpop.f32.mrf.mxu0
      %v1683 = vadd.f32 0.0, %v1682
      %v1684 = vpop.f32.mrf.mxu0
      %1685 = vdwg.mxu0
      %v1687 = vsel %vm1596, %v1447, 0
      %v1690 = vsel %vm1596, %v1448, 0
      %v1693 = vsel %vm1596, %v1449, 0
      %v1696 = vsel %vm1596, %v1450, 0
      %v1699 = vsel %vm1596, %v1592, 0
      %v1702 = vsel %vm1596, %v1593, 0
      %v1705 = vsel %vm1596, %v1594, 0
      %v1708 = vsel %vm1596, %v1595, 0
      %1710 = vmatprep.subr.bf16.mxu0 0
      %1711 = vmatpush1.bf16.xpose.msra.mxu0 0
      %1712 = vmatprep.subr.bf16.mxu0 0
      %1713 = vmatpush1.bf16.xpose.msra.mxu0 0
      %1714 = vmatprep.subr.bf16.mxu0 0
      %1715 = vmatpush1.bf16.xpose.msra.mxu0 0
      %1716 = vmatprep.subr.bf16.mxu0 0
      %1717 = vmatpush1.bf16.xpose.msra.mxu0 0
      %1718 = vmatprep.subr.bf16.mxu0 0
      %1719 = vmatpush1.bf16.xpose.msra.mxu0 %v1708
      %1720 = vmatprep.subr.bf16.mxu0 0
      %1721 = vmatpush1.bf16.xpose.msra.mxu0 %v1705
      %1722 = vmatprep.subr.bf16.mxu0 0
      %1723 = vmatpush1.bf16.xpose.msra.mxu0 %v1702
      %1724 = vmatprep.subr.bf16.mxu0 0
      %1725 = vmatpush1.bf16.xpose.msra.mxu0 %v1699
      %1726 = vmatprep.subr.bf16.mxu0 0
      %1727 = vmatpush2.bf16.xpose.msra.mxu0 0
      %1728 = vmatprep.subr.bf16.mxu0 0
      %1729 = vmatpush2.bf16.xpose.msra.mxu0 0
      %1730 = vmatprep.subr.bf16.mxu0 0
      %1731 = vmatpush2.bf16.xpose.msra.mxu0 0
      %1732 = vmatprep.subr.bf16.mxu0 0
      %1733 = vmatpush2.bf16.xpose.msra.mxu0 0
      %1734 = vmatprep.subr.bf16.mxu0 0
      %1735 = vmatpush2.bf16.xpose.msra.mxu0 0
      %1736 = vmatprep.subr.bf16.mxu0 0
      %1737 = vmatpush2.bf16.xpose.msra.mxu0 0
      %1738 = vmatprep.subr.bf16.mxu0 0
      %1739 = vmatpush2.bf16.xpose.msra.mxu0 0
      %1740 = vmatprep.subr.bf16.mxu0 0
      %1741 = vmatpush2.bf16.xpose.msra.mxu0 0
      %1742 = vmatprep.mubr.bf16.mxu0 0
      %1743 = vmatmul.mubr.bf16.gmra.mxu0 %v1687
      %v1744 = vpop.f32.mrf.mxu0
      %v1745 = vadd.f32 0.0, %v1744
      %v1746 = vpop.f32.mrf.mxu0
      %v1747 = vpop.f32.mrf.mxu0
      %v1748 = vadd.f32 0.0, %v1747
      %v1749 = vpop.f32.mrf.mxu0
      %1750 = vmatprep.mubr.bf16.mxu0 0
      %1751 = vmatmul.mubr.bf16.gmra.mxu0 %v1690
      %v1752 = vpop.f32.mrf.mxu0
      %v1753 = vadd.f32 0.0, %v1752
      %v1754 = vpop.f32.mrf.mxu0
      %v1755 = vpop.f32.mrf.mxu0
      %v1756 = vadd.f32 0.0, %v1755
      %v1757 = vpop.f32.mrf.mxu0
      %1758 = vmatprep.mubr.bf16.mxu0 0
      %1759 = vmatmul.mubr.bf16.gmra.mxu0 %v1693
      %v1760 = vpop.f32.mrf.mxu0
      %v1761 = vadd.f32 0.0, %v1760
      %v1762 = vpop.f32.mrf.mxu0
      %v1763 = vpop.f32.mrf.mxu0
      %v1764 = vadd.f32 0.0, %v1763
      %v1765 = vpop.f32.mrf.mxu0
      %1766 = vmatprep.mubr.bf16.mxu0 0
      %1767 = vmatmul.mubr.bf16.gmra.mxu0 %v1696
      %v1768 = vpop.f32.mrf.mxu0
      %v1769 = vadd.f32 0.0, %v1768
      %v1770 = vpop.f32.mrf.mxu0
      %v1771 = vpop.f32.mrf.mxu0
      %v1772 = vadd.f32 0.0, %v1771
      %v1773 = vpop.f32.mrf.mxu0
      %1774 = vdwg.mxu0
      %vm1775 = vcmask 523264
      %v1776 = vsel %vm1775, %v1656, -inf
      %1777 = vmax.xlane.f32.xlu0 %v1776
      %v1778 = vpop.xlane.xlu0 %1777
      %v1779 = vsel %vm1775, %v1659, -inf
      %1780 = vmax.xlane.f32.xlu0 %v1779
      %v1781 = vpop.xlane.xlu0 %1780
      %v1782 = vsel %vm1775, %v1664, -inf
      %1783 = vmax.xlane.f32.xlu0 %v1782
      %v1784 = vpop.xlane.xlu0 %1783
      %v1785 = vsel %vm1775, %v1667, -inf
      %1786 = vmax.xlane.f32.xlu0 %v1785
      %v1787 = vpop.xlane.xlu0 %1786
      %v1788 = vsel %vm1775, %v1672, -inf
      %1789 = vmax.xlane.f32.xlu0 %v1788
      %v1790 = vpop.xlane.xlu0 %1789
      %v1791 = vsel %vm1775, %v1675, -inf
      %1792 = vmax.xlane.f32.xlu0 %v1791
      %v1793 = vpop.xlane.xlu0 %1792
      %v1794 = vsel %vm1775, %v1680, -inf
      %1795 = vmax.xlane.f32.xlu0 %v1794
      %v1796 = vpop.xlane.xlu0 %1795
      %v1797 = vsel %vm1775, %v1683, -inf
      %1798 = vmax.xlane.f32.xlu0 %v1797
      %v1799 = vpop.xlane.xlu0 %1798
      %v1800 = vsel %vm1775, %v1745, -inf
      %1801 = vmax.xlane.f32.xlu0 %v1800
      %v1802 = vpop.xlane.xlu0 %1801
      %v1803 = vsel %vm1775, %v1748, -inf
      %1804 = vmax.xlane.f32.xlu0 %v1803
      %v1805 = vpop.xlane.xlu0 %1804
      %v1806 = vsel %vm1775, %v1753, -inf
      %1807 = vmax.xlane.f32.xlu0 %v1806
      %v1808 = vpop.xlane.xlu0 %1807
      %v1809 = vsel %vm1775, %v1756, -inf
      %1810 = vmax.xlane.f32.xlu0 %v1809
      %v1811 = vpop.xlane.xlu0 %1810
      %v1812 = vsel %vm1775, %v1761, -inf
      %1813 = vmax.xlane.f32.xlu0 %v1812
      %v1814 = vpop.xlane.xlu0 %1813
      %v1815 = vsel %vm1775, %v1764, -inf
      %1816 = vmax.xlane.f32.xlu0 %v1815
      %v1817 = vpop.xlane.xlu0 %1816
      %v1818 = vsel %vm1775, %v1769, -inf
      %1819 = vmax.xlane.f32.xlu0 %v1818
      %v1820 = vpop.xlane.xlu0 %1819
      %v1821 = vsel %vm1775, %v1772, -inf
      %1822 = vmax.xlane.f32.xlu0 %v1821
      %v1823 = vpop.xlane.xlu0 %1822
      %v1824 = vsub.f32 %v1656, %v1778
      %v1825 = vsub.f32 %v1659, %v1781
      %v1826 = vsub.f32 %v1664, %v1784
      %v1827 = vsub.f32 %v1667, %v1787
      %v1828 = vsub.f32 %v1672, %v1790
      %v1829 = vsub.f32 %v1675, %v1793
      %v1830 = vsub.f32 %v1680, %v1796
      %v1831 = vsub.f32 %v1683, %v1799
      %v1832 = vsub.f32 %v1745, %v1802
      %v1833 = vsub.f32 %v1748, %v1805
      %v1834 = vsub.f32 %v1753, %v1808
      %v1835 = vsub.f32 %v1756, %v1811
      %v1836 = vsub.f32 %v1761, %v1814
      %v1837 = vsub.f32 %v1764, %v1817
      %v1838 = vsub.f32 %v1769, %v1820
      %v1839 = vsub.f32 %v1772, %v1823
      %v1840 = vmul.f32 %v1824, 1.442695
      %v1841 = vpow.pop %v1840
      %v1842 = vmul.f32 %v1825, 1.442695
      %v1843 = vpow.pop %v1842
      %v1844 = vmul.f32 %v1826, 1.442695
      %v1845 = vpow.pop %v1844
      %v1846 = vmul.f32 %v1827, 1.442695
      %v1847 = vpow.pop %v1846
      %v1848 = vmul.f32 %v1828, 1.442695
      %v1849 = vpow.pop %v1848
      %v1850 = vmul.f32 %v1829, 1.442695
      %v1851 = vpow.pop %v1850
      %v1852 = vmul.f32 %v1830, 1.442695
      %v1853 = vpow.pop %v1852
      %v1854 = vmul.f32 %v1831, 1.442695
      %v1855 = vpow.pop %v1854
      %v1856 = vmul.f32 %v1832, 1.442695
      %v1857 = vpow.pop %v1856
      %v1858 = vmul.f32 %v1833, 1.442695
      %v1859 = vpow.pop %v1858
      %v1860 = vmul.f32 %v1834, 1.442695
      %v1861 = vpow.pop %v1860
      %v1862 = vmul.f32 %v1835, 1.442695
      %v1863 = vpow.pop %v1862
      %v1864 = vmul.f32 %v1836, 1.442695
      %v1865 = vpow.pop %v1864
      %v1866 = vmul.f32 %v1837, 1.442695
      %v1867 = vpow.pop %v1866
      %v1868 = vmul.f32 %v1838, 1.442695
      %v1869 = vpow.pop %v1868
      %v1870 = vmul.f32 %v1839, 1.442695
      %v1871 = vpow.pop %v1870
      %v1872 = vsel %vm1775, %v1841, 0.0
      %1873 = vadd.xlane.f32.xlu0 %v1872
      %v1874 = vpop.xlane.xlu0 %1873
      %v1875 = vsel %vm1775, %v1843, 0.0
      %1876 = vadd.xlane.f32.xlu0 %v1875
      %v1877 = vpop.xlane.xlu0 %1876
      %v1878 = vsel %vm1775, %v1845, 0.0
      %1879 = vadd.xlane.f32.xlu0 %v1878
      %v1880 = vpop.xlane.xlu0 %1879
      %v1881 = vsel %vm1775, %v1847, 0.0
      %1882 = vadd.xlane.f32.xlu0 %v1881
      %v1883 = vpop.xlane.xlu0 %1882
      %v1884 = vsel %vm1775, %v1849, 0.0
      %1885 = vadd.xlane.f32.xlu0 %v1884
      %v1886 = vpop.xlane.xlu0 %1885
      %v1887 = vsel %vm1775, %v1851, 0.0
      %1888 = vadd.xlane.f32.xlu0 %v1887
      %v1889 = vpop.xlane.xlu0 %1888
      %v1890 = vsel %vm1775, %v1853, 0.0
      %1891 = vadd.xlane.f32.xlu0 %v1890
      %v1892 = vpop.xlane.xlu0 %1891
      %v1893 = vsel %vm1775, %v1855, 0.0
      %1894 = vadd.xlane.f32.xlu0 %v1893
      %v1895 = vpop.xlane.xlu0 %1894
      %v1896 = vsel %vm1775, %v1857, 0.0
      %1897 = vadd.xlane.f32.xlu0 %v1896
      %v1898 = vpop.xlane.xlu0 %1897
      %v1899 = vsel %vm1775, %v1859, 0.0
      %1900 = vadd.xlane.f32.xlu0 %v1899
      %v1901 = vpop.xlane.xlu0 %1900
      %v1902 = vsel %vm1775, %v1861, 0.0
      %1903 = vadd.xlane.f32.xlu0 %v1902
      %v1904 = vpop.xlane.xlu0 %1903
      %v1905 = vsel %vm1775, %v1863, 0.0
      %1906 = vadd.xlane.f32.xlu0 %v1905
      %v1907 = vpop.xlane.xlu0 %1906
      %v1908 = vsel %vm1775, %v1865, 0.0
      %1909 = vadd.xlane.f32.xlu0 %v1908
      %v1910 = vpop.xlane.xlu0 %1909
      %v1911 = vsel %vm1775, %v1867, 0.0
      %1912 = vadd.xlane.f32.xlu0 %v1911
      %v1913 = vpop.xlane.xlu0 %1912
      %v1914 = vsel %vm1775, %v1869, 0.0
      %1915 = vadd.xlane.f32.xlu0 %v1914
      %v1916 = vpop.xlane.xlu0 %1915
      %v1917 = vsel %vm1775, %v1871, 0.0
      %1918 = vadd.xlane.f32.xlu0 %v1917
      %v1919 = vpop.xlane.xlu0 %1918
      %v1920 = vrcp.pop %v1874
      %v1921 = vrcp.pop %v1877
      %v1922 = vrcp.pop %v1880
      %v1923 = vrcp.pop %v1883
      %v1924 = vrcp.pop %v1886
      %v1925 = vrcp.pop %v1889
      %v1926 = vrcp.pop %v1892
      %v1927 = vrcp.pop %v1895
      %v1928 = vrcp.pop %v1898
      %v1929 = vrcp.pop %v1901
      %v1930 = vrcp.pop %v1904
      %v1931 = vrcp.pop %v1907
      %v1932 = vrcp.pop %v1910
      %v1933 = vrcp.pop %v1913
      %v1934 = vrcp.pop %v1916
      %v1935 = vrcp.pop %v1919
      %v1936 = vmul.f32 %v1841, %v1920
      %v1937 = vmul.f32 %v1843, %v1921
      %v1938 = vmul.f32 %v1845, %v1922
      %v1939 = vmul.f32 %v1847, %v1923
      %v1940 = vmul.f32 %v1849, %v1924
      %v1941 = vmul.f32 %v1851, %v1925
      %v1942 = vmul.f32 %v1853, %v1926
      %v1943 = vmul.f32 %v1855, %v1927
      %v1944 = vmul.f32 %v1857, %v1928
      %v1945 = vmul.f32 %v1859, %v1929
      %v1946 = vmul.f32 %v1861, %v1930
      %v1947 = vmul.f32 %v1863, %v1931
      %v1948 = vmul.f32 %v1865, %v1932
      %v1949 = vmul.f32 %v1867, %v1933
      %v1950 = vmul.f32 %v1869, %v1934
      %v1951 = vmul.f32 %v1871, %v1935
      %v1952 = vpack.c.bf16 %v1937, %v1936
      %v1953 = vpack.c.bf16 %v1939, %v1938
      %v1954 = vpack.c.bf16 %v1941, %v1940
      %v1955 = vpack.c.bf16 %v1943, %v1942
      %v1956 = vpack.c.bf16 %v1945, %v1944
      %v1957 = vpack.c.bf16 %v1947, %v1946
      %v1958 = vpack.c.bf16 %v1949, %v1948
      %v1959 = vpack.c.bf16 %v1951, %v1950
      %1964 = vrot.lane.b32.xlu0 %v1588, 96
      %v1965 = vpop.permute.xlu0 %1964
      %1966 = vrot.lane.b32.xlu0 %v1589, 96
      %v1967 = vpop.permute.xlu0 %1966
      %1968 = vrot.lane.b32.xlu0 %v1590, 96
      %v1969 = vpop.permute.xlu0 %1968
      %1970 = vrot.lane.b32.xlu0 %v1591, 96
      %v1971 = vpop.permute.xlu0 %1970
      %v1977 = vsel %vm1775, %v1952, 0
      %v1980 = vsel %vm1775, %v1953, 0
      %v1983 = vsel %vm1775, %v1954, 0
      %v1986 = vsel %vm1775, %v1955, 0
      %1988 = vmatprep.subr.bf16.mxu0 0
      %1989 = vmatpush1.bf16.msra.mxu0 0
      %1990 = vmatprep.subr.bf16.mxu0 0
      %1991 = vmatpush1.bf16.msra.mxu0 0
      %1992 = vmatprep.subr.bf16.mxu0 0
      %1993 = vmatpush1.bf16.msra.mxu0 0
      %1994 = vmatprep.subr.bf16.mxu0 0
      %1995 = vmatpush1.bf16.msra.mxu0 0
      %1996 = vmatprep.subr.bf16.mxu0 0
      %1997 = vmatpush1.bf16.msra.mxu0 %v1971
      %1998 = vmatprep.subr.bf16.mxu0 0
      %1999 = vmatpush1.bf16.msra.mxu0 %v1969
      %2000 = vmatprep.subr.bf16.mxu0 0
      %2001 = vmatpush1.bf16.msra.mxu0 %v1967
      %2002 = vmatprep.subr.bf16.mxu0 0
      %2003 = vmatpush1.bf16.msra.mxu0 %v1965
      %2004 = vmatprep.subr.bf16.mxu0 0
      %2005 = vmatpush2.bf16.msra.mxu0 0
      %2006 = vmatprep.subr.bf16.mxu0 0
      %2007 = vmatpush2.bf16.msra.mxu0 0
      %2008 = vmatprep.subr.bf16.mxu0 0
      %2009 = vmatpush2.bf16.msra.mxu0 0
      %2010 = vmatprep.subr.bf16.mxu0 0
      %2011 = vmatpush2.bf16.msra.mxu0 0
      %2012 = vmatprep.subr.bf16.mxu0 0
      %2013 = vmatpush2.bf16.msra.mxu0 0
      %2014 = vmatprep.subr.bf16.mxu0 0
      %2015 = vmatpush2.bf16.msra.mxu0 0
      %2016 = vmatprep.subr.bf16.mxu0 0
      %2017 = vmatpush2.bf16.msra.mxu0 0
      %2018 = vmatprep.subr.bf16.mxu0 0
      %2019 = vmatpush2.bf16.msra.mxu0 0
      %2020 = vmatprep.mubr.bf16.mxu0 0
      %2021 = vmatmul.mubr.bf16.gmra.mxu0 %v1977
      %v2022 = vpop.f32.mrf.mxu0
      %v2023 = vadd.f32 0.0, %v2022
      %v2024 = vpop.f32.mrf.mxu0
      %v2025 = vpop.f32.mrf.mxu0
      %v2026 = vadd.f32 0.0, %v2025
      %v2027 = vpop.f32.mrf.mxu0
      %2028 = vmatprep.mubr.bf16.mxu0 0
      %2029 = vmatmul.mubr.bf16.gmra.mxu0 %v1980
      %v2030 = vpop.f32.mrf.mxu0
      %v2031 = vadd.f32 0.0, %v2030
      %v2032 = vpop.f32.mrf.mxu0
      %v2033 = vpop.f32.mrf.mxu0
      %v2034 = vadd.f32 0.0, %v2033
      %v2035 = vpop.f32.mrf.mxu0
      %2036 = vmatprep.mubr.bf16.mxu0 0
      %2037 = vmatmul.mubr.bf16.gmra.mxu0 %v1983
      %v2038 = vpop.f32.mrf.mxu0
      %v2039 = vadd.f32 0.0, %v2038
      %v2040 = vpop.f32.mrf.mxu0
      %v2041 = vpop.f32.mrf.mxu0
      %v2042 = vadd.f32 0.0, %v2041
      %v2043 = vpop.f32.mrf.mxu0
      %2044 = vmatprep.mubr.bf16.mxu0 0
      %2045 = vmatmul.mubr.bf16.gmra.mxu0 %v1986
      %v2046 = vpop.f32.mrf.mxu0
      %v2047 = vadd.f32 0.0, %v2046
      %v2048 = vpop.f32.mrf.mxu0
      %v2049 = vpop.f32.mrf.mxu0
      %v2050 = vadd.f32 0.0, %v2049
      %v2051 = vpop.f32.mrf.mxu0
      %2052 = vdwg.mxu0
      %2057 = vrot.lane.b32.xlu0 %v1592, 96
      %v2058 = vpop.permute.xlu0 %2057
      %2059 = vrot.lane.b32.xlu0 %v1593, 96
      %v2060 = vpop.permute.xlu0 %2059
      %2061 = vrot.lane.b32.xlu0 %v1594, 96
      %v2062 = vpop.permute.xlu0 %2061
      %2063 = vrot.lane.b32.xlu0 %v1595, 96
      %v2064 = vpop.permute.xlu0 %2063
      %v2070 = vsel %vm1775, %v1956, 0
      %v2073 = vsel %vm1775, %v1957, 0
      %v2076 = vsel %vm1775, %v1958, 0
      %v2079 = vsel %vm1775, %v1959, 0
      %2081 = vmatprep.subr.bf16.mxu0 0
      %2082 = vmatpush1.bf16.msra.mxu0 0
      %2083 = vmatprep.subr.bf16.mxu0 0
      %2084 = vmatpush1.bf16.msra.mxu0 0
      %2085 = vmatprep.subr.bf16.mxu0 0
      %2086 = vmatpush1.bf16.msra.mxu0 0
      %2087 = vmatprep.subr.bf16.mxu0 0
      %2088 = vmatpush1.bf16.msra.mxu0 0
      %2089 = vmatprep.subr.bf16.mxu0 0
      %2090 = vmatpush1.bf16.msra.mxu0 %v2064
      %2091 = vmatprep.subr.bf16.mxu0 0
      %2092 = vmatpush1.bf16.msra.mxu0 %v2062
      %2093 = vmatprep.subr.bf16.mxu0 0
      %2094 = vmatpush1.bf16.msra.mxu0 %v2060
      %2095 = vmatprep.subr.bf16.mxu0 0
      %2096 = vmatpush1.bf16.msra.mxu0 %v2058
      %2097 = vmatprep.subr.bf16.mxu0 0
      %2098 = vmatpush2.bf16.msra.mxu0 0
      %2099 = vmatprep.subr.bf16.mxu0 0
      %2100 = vmatpush2.bf16.msra.mxu0 0
      %2101 = vmatprep.subr.bf16.mxu0 0
      %2102 = vmatpush2.bf16.msra.mxu0 0
      %2103 = vmatprep.subr.bf16.mxu0 0
      %2104 = vmatpush2.bf16.msra.mxu0 0
      %2105 = vmatprep.subr.bf16.mxu0 0
      %2106 = vmatpush2.bf16.msra.mxu0 0
      %2107 = vmatprep.subr.bf16.mxu0 0
      %2108 = vmatpush2.bf16.msra.mxu0 0
      %2109 = vmatprep.subr.bf16.mxu0 0
      %2110 = vmatpush2.bf16.msra.mxu0 0
      %2111 = vmatprep.subr.bf16.mxu0 0
      %2112 = vmatpush2.bf16.msra.mxu0 0
      %2113 = vmatprep.mubr.bf16.mxu0 0
      %2114 = vmatmul.mubr.bf16.gmra.mxu0 %v2070
      %v2115 = vpop.f32.mrf.mxu0
      %v2116 = vadd.f32 0.0, %v2115
      %v2117 = vpop.f32.mrf.mxu0
      %v2118 = vpop.f32.mrf.mxu0
      %v2119 = vadd.f32 0.0, %v2118
      %v2120 = vpop.f32.mrf.mxu0
      %2121 = vmatprep.mubr.bf16.mxu0 0
      %2122 = vmatmul.mubr.bf16.gmra.mxu0 %v2073
      %v2123 = vpop.f32.mrf.mxu0
      %v2124 = vadd.f32 0.0, %v2123
      %v2125 = vpop.f32.mrf.mxu0
      %v2126 = vpop.f32.mrf.mxu0
      %v2127 = vadd.f32 0.0, %v2126
      %v2128 = vpop.f32.mrf.mxu0
      %2129 = vmatprep.mubr.bf16.mxu0 0
      %2130 = vmatmul.mubr.bf16.gmra.mxu0 %v2076
      %v2131 = vpop.f32.mrf.mxu0
      %v2132 = vadd.f32 0.0, %v2131
      %v2133 = vpop.f32.mrf.mxu0
      %v2134 = vpop.f32.mrf.mxu0
      %v2135 = vadd.f32 0.0, %v2134
      %v2136 = vpop.f32.mrf.mxu0
      %2137 = vmatprep.mubr.bf16.mxu0 0
      %2138 = vmatmul.mubr.bf16.gmra.mxu0 %v2079
      %v2139 = vpop.f32.mrf.mxu0
      %v2140 = vadd.f32 0.0, %v2139
      %v2141 = vpop.f32.mrf.mxu0
      %v2142 = vpop.f32.mrf.mxu0
      %v2143 = vadd.f32 0.0, %v2142
      %v2144 = vpop.f32.mrf.mxu0
      %2145 = vdwg.mxu0
      %2146 = vst.msk [vmem:[#allocation2] sm:$0xff] %vm1596, %v2023
      %2147 = vst.msk [vmem:[#allocation2 + $0x8] sm:$0xff] %vm1596, %v2026
      %2148 = vst.msk [vmem:[#allocation2 + $0x10] sm:$0xff] %vm1596, %v2031
      %2149 = vst.msk [vmem:[#allocation2 + $0x18] sm:$0xff] %vm1596, %v2034
      %2150 = vst.msk [vmem:[#allocation2 + $0x20] sm:$0xff] %vm1596, %v2039
      %2151 = vst.msk [vmem:[#allocation2 + $0x28] sm:$0xff] %vm1596, %v2042
      %2152 = vst.msk [vmem:[#allocation2 + $0x30] sm:$0xff] %vm1596, %v2047
      %2153 = vst.msk [vmem:[#allocation2 + $0x38] sm:$0xff] %vm1596, %v2050
      %2154 = vst.msk [vmem:[#allocation2 + $0x40] sm:$0xff] %vm1596, %v2116
      %2155 = vst.msk [vmem:[#allocation2 + $0x48] sm:$0xff] %vm1596, %v2119
      %2156 = vst.msk [vmem:[#allocation2 + $0x50] sm:$0xff] %vm1596, %v2124
      %2157 = vst.msk [vmem:[#allocation2 + $0x58] sm:$0xff] %vm1596, %v2127
      %2158 = vst.msk [vmem:[#allocation2 + $0x60] sm:$0xff] %vm1596, %v2132
      %2159 = vst.msk [vmem:[#allocation2 + $0x68] sm:$0xff] %vm1596, %v2135
      %2160 = vst.msk [vmem:[#allocation2 + $0x70] sm:$0xff] %vm1596, %v2140
      %2161 = vst.msk [vmem:[#allocation2 + $0x78] sm:$0xff] %vm1596, %v2143
      %2166 = vrot.lane.b32.xlu0 %v1443, 120
      %v2167 = vpop.permute.xlu0 %2166
      %2168 = vrot.lane.b32.xlu0 %v1444, 120
      %v2169 = vpop.permute.xlu0 %2168
      %2170 = vrot.lane.b32.xlu0 %v1445, 120
      %v2171 = vpop.permute.xlu0 %2170
      %2172 = vrot.lane.b32.xlu0 %v1446, 120
      %v2173 = vpop.permute.xlu0 %2172
      %2174 = vrot.lane.b32.xlu0 %v1588, 120
      %v2175 = vpop.permute.xlu0 %2174
      %2176 = vrot.lane.b32.xlu0 %v1589, 120
      %v2177 = vpop.permute.xlu0 %2176
      %2178 = vrot.lane.b32.xlu0 %v1590, 120
      %v2179 = vpop.permute.xlu0 %2178
      %2180 = vrot.lane.b32.xlu0 %v1591, 120
      %v2181 = vpop.permute.xlu0 %2180
      %v2183 = vsel %vm1596, %v2167, 0
      %v2186 = vsel %vm1596, %v2169, 0
      %v2189 = vsel %vm1596, %v2171, 0
      %v2192 = vsel %vm1596, %v2173, 0
      %v2195 = vsel %vm1596, %v2175, 0
      %v2198 = vsel %vm1596, %v2177, 0
      %v2201 = vsel %vm1596, %v2179, 0
      %v2204 = vsel %vm1596, %v2181, 0
      %2206 = vmatprep.subr.bf16.mxu0 0
      %2207 = vmatpush1.bf16.xpose.msra.mxu0 0
      %2208 = vmatprep.subr.bf16.mxu0 0
      %2209 = vmatpush1.bf16.xpose.msra.mxu0 0
      %2210 = vmatprep.subr.bf16.mxu0 0
      %2211 = vmatpush1.bf16.xpose.msra.mxu0 0
      %2212 = vmatprep.subr.bf16.mxu0 0
      %2213 = vmatpush1.bf16.xpose.msra.mxu0 0
      %2214 = vmatprep.subr.bf16.mxu0 0
      %2215 = vmatpush1.bf16.xpose.msra.mxu0 %v2204
      %2216 = vmatprep.subr.bf16.mxu0 0
      %2217 = vmatpush1.bf16.xpose.msra.mxu0 %v2201
      %2218 = vmatprep.subr.bf16.mxu0 0
      %2219 = vmatpush1.bf16.xpose.msra.mxu0 %v2198
      %2220 = vmatprep.subr.bf16.mxu0 0
      %2221 = vmatpush1.bf16.xpose.msra.mxu0 %v2195
      %2222 = vmatprep.subr.bf16.mxu0 0
      %2223 = vmatpush2.bf16.xpose.msra.mxu0 0
      %2224 = vmatprep.subr.bf16.mxu0 0
      %2225 = vmatpush2.bf16.xpose.msra.mxu0 0
      %2226 = vmatprep.subr.bf16.mxu0 0
      %2227 = vmatpush2.bf16.xpose.msra.mxu0 0
      %2228 = vmatprep.subr.bf16.mxu0 0
      %2229 = vmatpush2.bf16.xpose.msra.mxu0 0
      %2230 = vmatprep.subr.bf16.mxu0 0
      %2231 = vmatpush2.bf16.xpose.msra.mxu0 0
      %2232 = vmatprep.subr.bf16.mxu0 0
      %2233 = vmatpush2.bf16.xpose.msra.mxu0 0
      %2234 = vmatprep.subr.bf16.mxu0 0
      %2235 = vmatpush2.bf16.xpose.msra.mxu0 0
      %2236 = vmatprep.subr.bf16.mxu0 0
      %2237 = vmatpush2.bf16.xpose.msra.mxu0 0
      %2238 = vmatprep.mubr.bf16.mxu0 0
      %2239 = vmatmul.mubr.bf16.gmra.mxu0 %v2183
      %v2240 = vpop.f32.mrf.mxu0
      %v2241 = vadd.f32 0.0, %v2240
      %v2242 = vpop.f32.mrf.mxu0
      %v2243 = vpop.f32.mrf.mxu0
      %v2244 = vadd.f32 0.0, %v2243
      %v2245 = vpop.f32.mrf.mxu0
      %2246 = vmatprep.mubr.bf16.mxu0 0
      %2247 = vmatmul.mubr.bf16.gmra.mxu0 %v2186
      %v2248 = vpop.f32.mrf.mxu0
      %v2249 = vadd.f32 0.0, %v2248
      %v2250 = vpop.f32.mrf.mxu0
      %v2251 = vpop.f32.mrf.mxu0
      %v2252 = vadd.f32 0.0, %v2251
      %v2253 = vpop.f32.mrf.mxu0
      %2254 = vmatprep.mubr.bf16.mxu0 0
      %2255 = vmatmul.mubr.bf16.gmra.mxu0 %v2189
      %v2256 = vpop.f32.mrf.mxu0
      %v2257 = vadd.f32 0.0, %v2256
      %v2258 = vpop.f32.mrf.mxu0
      %v2259 = vpop.f32.mrf.mxu0
      %v2260 = vadd.f32 0.0, %v2259
      %v2261 = vpop.f32.mrf.mxu0
      %2262 = vmatprep.mubr.bf16.mxu0 0
      %2263 = vmatmul.mubr.bf16.gmra.mxu0 %v2192
      %v2264 = vpop.f32.mrf.mxu0
      %v2265 = vadd.f32 0.0, %v2264
      %v2266 = vpop.f32.mrf.mxu0
      %v2267 = vpop.f32.mrf.mxu0
      %v2268 = vadd.f32 0.0, %v2267
      %v2269 = vpop.f32.mrf.mxu0
      %2270 = vdwg.mxu0
      %2275 = vrot.lane.b32.xlu0 %v1447, 120
      %v2276 = vpop.permute.xlu0 %2275
      %2277 = vrot.lane.b32.xlu0 %v1448, 120
      %v2278 = vpop.permute.xlu0 %2277
      %2279 = vrot.lane.b32.xlu0 %v1449, 120
      %v2280 = vpop.permute.xlu0 %2279
      %2281 = vrot.lane.b32.xlu0 %v1450, 120
      %v2282 = vpop.permute.xlu0 %2281
      %2283 = vrot.lane.b32.xlu0 %v1592, 120
      %v2284 = vpop.permute.xlu0 %2283
      %2285 = vrot.lane.b32.xlu0 %v1593, 120
      %v2286 = vpop.permute.xlu0 %2285
      %2287 = vrot.lane.b32.xlu0 %v1594, 120
      %v2288 = vpop.permute.xlu0 %2287
      %2289 = vrot.lane.b32.xlu0 %v1595, 120
      %v2290 = vpop.permute.xlu0 %2289
      %v2292 = vsel %vm1596, %v2276, 0
      %v2295 = vsel %vm1596, %v2278, 0
      %v2298 = vsel %vm1596, %v2280, 0
      %v2301 = vsel %vm1596, %v2282, 0
      %v2304 = vsel %vm1596, %v2284, 0
      %v2307 = vsel %vm1596, %v2286, 0
      %v2310 = vsel %vm1596, %v2288, 0
      %v2313 = vsel %vm1596, %v2290, 0
      %2315 = vmatprep.subr.bf16.mxu0 0
      %2316 = vmatpush1.bf16.xpose.msra.mxu0 0
      %2317 = vmatprep.subr.bf16.mxu0 0
      %2318 = vmatpush1.bf16.xpose.msra.mxu0 0
      %2319 = vmatprep.subr.bf16.mxu0 0
      %2320 = vmatpush1.bf16.xpose.msra.mxu0 0
      %2321 = vmatprep.subr.bf16.mxu0 0
      %2322 = vmatpush1.bf16.xpose.msra.mxu0 0
      %2323 = vmatprep.subr.bf16.mxu0 0
      %2324 = vmatpush1.bf16.xpose.msra.mxu0 %v2313
      %2325 = vmatprep.subr.bf16.mxu0 0
      %2326 = vmatpush1.bf16.xpose.msra.mxu0 %v2310
      %2327 = vmatprep.subr.bf16.mxu0 0
      %2328 = vmatpush1.bf16.xpose.msra.mxu0 %v2307
      %2329 = vmatprep.subr.bf16.mxu0 0
      %2330 = vmatpush1.bf16.xpose.msra.mxu0 %v2304
      %2331 = vmatprep.subr.bf16.mxu0 0
      %2332 = vmatpush2.bf16.xpose.msra.mxu0 0
      %2333 = vmatprep.subr.bf16.mxu0 0
      %2334 = vmatpush2.bf16.xpose.msra.mxu0 0
      %2335 = vmatprep.subr.bf16.mxu0 0
      %2336 = vmatpush2.bf16.xpose.msra.mxu0 0
      %2337 = vmatprep.subr.bf16.mxu0 0
      %2338 = vmatpush2.bf16.xpose.msra.mxu0 0
      %2339 = vmatprep.subr.bf16.mxu0 0
      %2340 = vmatpush2.bf16.xpose.msra.mxu0 0
      %2341 = vmatprep.subr.bf16.mxu0 0
      %2342 = vmatpush2.bf16.xpose.msra.mxu0 0
      %2343 = vmatprep.subr.bf16.mxu0 0
      %2344 = vmatpush2.bf16.xpose.msra.mxu0 0
      %2345 = vmatprep.subr.bf16.mxu0 0
      %2346 = vmatpush2.bf16.xpose.msra.mxu0 0
      %2347 = vmatprep.mubr.bf16.mxu0 0
      %2348 = vmatmul.mubr.bf16.gmra.mxu0 %v2292
      %v2349 = vpop.f32.mrf.mxu0
      %v2350 = vadd.f32 0.0, %v2349
      %v2351 = vpop.f32.mrf.mxu0
      %v2352 = vpop.f32.mrf.mxu0
      %v2353 = vadd.f32 0.0, %v2352
      %v2354 = vpop.f32.mrf.mxu0
      %2355 = vmatprep.mubr.bf16.mxu0 0
      %2356 = vmatmul.mubr.bf16.gmra.mxu0 %v2295
      %v2357 = vpop.f32.mrf.mxu0
      %v2358 = vadd.f32 0.0, %v2357
      %v2359 = vpop.f32.mrf.mxu0
      %v2360 = vpop.f32.mrf.mxu0
      %v2361 = vadd.f32 0.0, %v2360
      %v2362 = vpop.f32.mrf.mxu0
      %2363 = vmatprep.mubr.bf16.mxu0 0
      %2364 = vmatmul.mubr.bf16.gmra.mxu0 %v2298
      %v2365 = vpop.f32.mrf.mxu0
      %v2366 = vadd.f32 0.0, %v2365
      %v2367 = vpop.f32.mrf.mxu0
      %v2368 = vpop.f32.mrf.mxu0
      %v2369 = vadd.f32 0.0, %v2368
      %v2370 = vpop.f32.mrf.mxu0
      %2371 = vmatprep.mubr.bf16.mxu0 0
      %2372 = vmatmul.mubr.bf16.gmra.mxu0 %v2301
      %v2373 = vpop.f32.mrf.mxu0
      %v2374 = vadd.f32 0.0, %v2373
      %v2375 = vpop.f32.mrf.mxu0
      %v2376 = vpop.f32.mrf.mxu0
      %v2377 = vadd.f32 0.0, %v2376
      %v2378 = vpop.f32.mrf.mxu0
      %2379 = vdwg.mxu0
      %v2380 = vsel %vm1775, %v2241, -inf
      %2381 = vmax.xlane.f32.xlu0 %v2380
      %v2382 = vpop.xlane.xlu0 %2381
      %v2383 = vsel %vm1775, %v2244, -inf
      %2384 = vmax.xlane.f32.xlu0 %v2383
      %v2385 = vpop.xlane.xlu0 %2384
      %v2386 = vsel %vm1775, %v2249, -inf
      %2387 = vmax.xlane.f32.xlu0 %v2386
      %v2388 = vpop.xlane.xlu0 %2387
      %v2389 = vsel %vm1775, %v2252, -inf
      %2390 = vmax.xlane.f32.xlu0 %v2389
      %v2391 = vpop.xlane.xlu0 %2390
      %v2392 = vsel %vm1775, %v2257, -inf
      %2393 = vmax.xlane.f32.xlu0 %v2392
      %v2394 = vpop.xlane.xlu0 %2393
      %v2395 = vsel %vm1775, %v2260, -inf
      %2396 = vmax.xlane.f32.xlu0 %v2395
      %v2397 = vpop.xlane.xlu0 %2396
      %v2398 = vsel %vm1775, %v2265, -inf
      %2399 = vmax.xlane.f32.xlu0 %v2398
      %v2400 = vpop.xlane.xlu0 %2399
      %v2401 = vsel %vm1775, %v2268, -inf
      %2402 = vmax.xlane.f32.xlu0 %v2401
      %v2403 = vpop.xlane.xlu0 %2402
      %v2404 = vsel %vm1775, %v2350, -inf
      %2405 = vmax.xlane.f32.xlu0 %v2404
      %v2406 = vpop.xlane.xlu0 %2405
      %v2407 = vsel %vm1775, %v2353, -inf
      %2408 = vmax.xlane.f32.xlu0 %v2407
      %v2409 = vpop.xlane.xlu0 %2408
      %v2410 = vsel %vm1775, %v2358, -inf
      %2411 = vmax.xlane.f32.xlu0 %v2410
      %v2412 = vpop.xlane.xlu0 %2411
      %v2413 = vsel %vm1775, %v2361, -inf
      %2414 = vmax.xlane.f32.xlu0 %v2413
      %v2415 = vpop.xlane.xlu0 %2414
      %v2416 = vsel %vm1775, %v2366, -inf
      %2417 = vmax.xlane.f32.xlu0 %v2416
      %v2418 = vpop.xlane.xlu0 %2417
      %v2419 = vsel %vm1775, %v2369, -inf
      %2420 = vmax.xlane.f32.xlu0 %v2419
      %v2421 = vpop.xlane.xlu0 %2420
      %v2422 = vsel %vm1775, %v2374, -inf
      %2423 = vmax.xlane.f32.xlu0 %v2422
      %v2424 = vpop.xlane.xlu0 %2423
      %v2425 = vsel %vm1775, %v2377, -inf
      %2426 = vmax.xlane.f32.xlu0 %v2425
      %v2427 = vpop.xlane.xlu0 %2426
      %v2428 = vsub.f32 %v2241, %v2382
      %v2429 = vsub.f32 %v2244, %v2385
      %v2430 = vsub.f32 %v2249, %v2388
      %v2431 = vsub.f32 %v2252, %v2391
      %v2432 = vsub.f32 %v2257, %v2394
      %v2433 = vsub.f32 %v2260, %v2397
      %v2434 = vsub.f32 %v2265, %v2400
      %v2435 = vsub.f32 %v2268, %v2403
      %v2436 = vsub.f32 %v2350, %v2406
      %v2437 = vsub.f32 %v2353, %v2409
      %v2438 = vsub.f32 %v2358, %v2412
      %v2439 = vsub.f32 %v2361, %v2415
      %v2440 = vsub.f32 %v2366, %v2418
      %v2441 = vsub.f32 %v2369, %v2421
      %v2442 = vsub.f32 %v2374, %v2424
      %v2443 = vsub.f32 %v2377, %v2427
      %v2444 = vmul.f32 %v2428, 1.442695
      %v2445 = vpow.pop %v2444
      %v2446 = vmul.f32 %v2429, 1.442695
      %v2447 = vpow.pop %v2446
      %v2448 = vmul.f32 %v2430, 1.442695
      %v2449 = vpow.pop %v2448
      %v2450 = vmul.f32 %v2431, 1.442695
      %v2451 = vpow.pop %v2450
      %v2452 = vmul.f32 %v2432, 1.442695
      %v2453 = vpow.pop %v2452
      %v2454 = vmul.f32 %v2433, 1.442695
      %v2455 = vpow.pop %v2454
      %v2456 = vmul.f32 %v2434, 1.442695
      %v2457 = vpow.pop %v2456
      %v2458 = vmul.f32 %v2435, 1.442695
      %v2459 = vpow.pop %v2458
      %v2460 = vmul.f32 %v2436, 1.442695
      %v2461 = vpow.pop %v2460
      %v2462 = vmul.f32 %v2437, 1.442695
      %v2463 = vpow.pop %v2462
      %v2464 = vmul.f32 %v2438, 1.442695
      %v2465 = vpow.pop %v2464
      %v2466 = vmul.f32 %v2439, 1.442695
      %v2467 = vpow.pop %v2466
      %v2468 = vmul.f32 %v2440, 1.442695
      %v2469 = vpow.pop %v2468
      %v2470 = vmul.f32 %v2441, 1.442695
      %v2471 = vpow.pop %v2470
      %v2472 = vmul.f32 %v2442, 1.442695
      %v2473 = vpow.pop %v2472
      %v2474 = vmul.f32 %v2443, 1.442695
      %v2475 = vpow.pop %v2474
      %v2476 = vsel %vm1775, %v2445, 0.0
      %2477 = vadd.xlane.f32.xlu0 %v2476
      %v2478 = vpop.xlane.xlu0 %2477
      %v2479 = vsel %vm1775, %v2447, 0.0
      %2480 = vadd.xlane.f32.xlu0 %v2479
      %v2481 = vpop.xlane.xlu0 %2480
      %v2482 = vsel %vm1775, %v2449, 0.0
      %2483 = vadd.xlane.f32.xlu0 %v2482
      %v2484 = vpop.xlane.xlu0 %2483
      %v2485 = vsel %vm1775, %v2451, 0.0
      %2486 = vadd.xlane.f32.xlu0 %v2485
      %v2487 = vpop.xlane.xlu0 %2486
      %v2488 = vsel %vm1775, %v2453, 0.0
      %2489 = vadd.xlane.f32.xlu0 %v2488
      %v2490 = vpop.xlane.xlu0 %2489
      %v2491 = vsel %vm1775, %v2455, 0.0
      %2492 = vadd.xlane.f32.xlu0 %v2491
      %v2493 = vpop.xlane.xlu0 %2492
      %v2494 = vsel %vm1775, %v2457, 0.0
      %2495 = vadd.xlane.f32.xlu0 %v2494
      %v2496 = vpop.xlane.xlu0 %2495
      %v2497 = vsel %vm1775, %v2459, 0.0
      %2498 = vadd.xlane.f32.xlu0 %v2497
      %v2499 = vpop.xlane.xlu0 %2498
      %v2500 = vsel %vm1775, %v2461, 0.0
      %2501 = vadd.xlane.f32.xlu0 %v2500
      %v2502 = vpop.xlane.xlu0 %2501
      %v2503 = vsel %vm1775, %v2463, 0.0
      %2504 = vadd.xlane.f32.xlu0 %v2503
      %v2505 = vpop.xlane.xlu0 %2504
      %v2506 = vsel %vm1775, %v2465, 0.0
      %2507 = vadd.xlane.f32.xlu0 %v2506
      %v2508 = vpop.xlane.xlu0 %2507
      %v2509 = vsel %vm1775, %v2467, 0.0
      %2510 = vadd.xlane.f32.xlu0 %v2509
      %v2511 = vpop.xlane.xlu0 %2510
      %v2512 = vsel %vm1775, %v2469, 0.0
      %2513 = vadd.xlane.f32.xlu0 %v2512
      %v2514 = vpop.xlane.xlu0 %2513
      %v2515 = vsel %vm1775, %v2471, 0.0
      %2516 = vadd.xlane.f32.xlu0 %v2515
      %v2517 = vpop.xlane.xlu0 %2516
      %v2518 = vsel %vm1775, %v2473, 0.0
      %2519 = vadd.xlane.f32.xlu0 %v2518
      %v2520 = vpop.xlane.xlu0 %2519
      %v2521 = vsel %vm1775, %v2475, 0.0
      %2522 = vadd.xlane.f32.xlu0 %v2521
      %v2523 = vpop.xlane.xlu0 %2522
      %v2524 = vrcp.pop %v2478
      %v2525 = vrcp.pop %v2481
      %v2526 = vrcp.pop %v2484
      %v2527 = vrcp.pop %v2487
      %v2528 = vrcp.pop %v2490
      %v2529 = vrcp.pop %v2493
      %v2530 = vrcp.pop %v2496
      %v2531 = vrcp.pop %v2499
      %v2532 = vrcp.pop %v2502
      %v2533 = vrcp.pop %v2505
      %v2534 = vrcp.pop %v2508
      %v2535 = vrcp.pop %v2511
      %v2536 = vrcp.pop %v2514
      %v2537 = vrcp.pop %v2517
      %v2538 = vrcp.pop %v2520
      %v2539 = vrcp.pop %v2523
      %v2540 = vmul.f32 %v2445, %v2524
      %v2541 = vmul.f32 %v2447, %v2525
      %v2542 = vmul.f32 %v2449, %v2526
      %v2543 = vmul.f32 %v2451, %v2527
      %v2544 = vmul.f32 %v2453, %v2528
      %v2545 = vmul.f32 %v2455, %v2529
      %v2546 = vmul.f32 %v2457, %v2530
      %v2547 = vmul.f32 %v2459, %v2531
      %v2548 = vmul.f32 %v2461, %v2532
      %v2549 = vmul.f32 %v2463, %v2533
      %v2550 = vmul.f32 %v2465, %v2534
      %v2551 = vmul.f32 %v2467, %v2535
      %v2552 = vmul.f32 %v2469, %v2536
      %v2553 = vmul.f32 %v2471, %v2537
      %v2554 = vmul.f32 %v2473, %v2538
      %v2555 = vmul.f32 %v2475, %v2539
      %v2556 = vpack.c.bf16 %v2541, %v2540
      %v2557 = vpack.c.bf16 %v2543, %v2542
      %v2558 = vpack.c.bf16 %v2545, %v2544
      %v2559 = vpack.c.bf16 %v2547, %v2546
      %v2560 = vpack.c.bf16 %v2549, %v2548
      %v2561 = vpack.c.bf16 %v2551, %v2550
      %v2562 = vpack.c.bf16 %v2553, %v2552
      %v2563 = vpack.c.bf16 %v2555, %v2554
      %2564 = vrot.lane.b32.xlu0 %v1588, 88
      %v2565 = vpop.permute.xlu0 %2564
      %2566 = vrot.lane.b32.xlu0 %v1589, 88
      %v2567 = vpop.permute.xlu0 %2566
      %2568 = vrot.lane.b32.xlu0 %v1590, 88
      %v2569 = vpop.permute.xlu0 %2568
      %2570 = vrot.lane.b32.xlu0 %v1591, 88
      %v2571 = vpop.permute.xlu0 %2570
      %v2577 = vsel %vm1775, %v2556, 0
      %v2580 = vsel %vm1775, %v2557, 0
      %v2583 = vsel %vm1775, %v2558, 0
      %v2586 = vsel %vm1775, %v2559, 0
      %2588 = vmatprep.subr.bf16.mxu0 0
      %2589 = vmatpush1.bf16.msra.mxu0 0
      %2590 = vmatprep.subr.bf16.mxu0 0
      %2591 = vmatpush1.bf16.msra.mxu0 0
      %2592 = vmatprep.subr.bf16.mxu0 0
      %2593 = vmatpush1.bf16.msra.mxu0 0
      %2594 = vmatprep.subr.bf16.mxu0 0
      %2595 = vmatpush1.bf16.msra.mxu0 0
      %2596 = vmatprep.subr.bf16.mxu0 0
      %2597 = vmatpush1.bf16.msra.mxu0 %v2571
      %2598 = vmatprep.subr.bf16.mxu0 0
      %2599 = vmatpush1.bf16.msra.mxu0 %v2569
      %2600 = vmatprep.subr.bf16.mxu0 0
      %2601 = vmatpush1.bf16.msra.mxu0 %v2567
      %2602 = vmatprep.subr.bf16.mxu0 0
      %2603 = vmatpush1.bf16.msra.mxu0 %v2565
      %2604 = vmatprep.subr.bf16.mxu0 0
      %2605 = vmatpush2.bf16.msra.mxu0 0
      %2606 = vmatprep.subr.bf16.mxu0 0
      %2607 = vmatpush2.bf16.msra.mxu0 0
      %2608 = vmatprep.subr.bf16.mxu0 0
      %2609 = vmatpush2.bf16.msra.mxu0 0
      %2610 = vmatprep.subr.bf16.mxu0 0
      %2611 = vmatpush2.bf16.msra.mxu0 0
      %2612 = vmatprep.subr.bf16.mxu0 0
      %2613 = vmatpush2.bf16.msra.mxu0 0
      %2614 = vmatprep.subr.bf16.mxu0 0
      %2615 = vmatpush2.bf16.msra.mxu0 0
      %2616 = vmatprep.subr.bf16.mxu0 0
      %2617 = vmatpush2.bf16.msra.mxu0 0
      %2618 = vmatprep.subr.bf16.mxu0 0
      %2619 = vmatpush2.bf16.msra.mxu0 0
      %2620 = vmatprep.mubr.bf16.mxu0 0
      %2621 = vmatmul.mubr.bf16.gmra.mxu0 %v2577
      %v2622 = vpop.f32.mrf.mxu0
      %v2623 = vadd.f32 0.0, %v2622
      %v2624 = vpop.f32.mrf.mxu0
      %v2625 = vpop.f32.mrf.mxu0
      %v2626 = vadd.f32 0.0, %v2625
      %v2627 = vpop.f32.mrf.mxu0
      %2628 = vmatprep.mubr.bf16.mxu0 0
      %2629 = vmatmul.mubr.bf16.gmra.mxu0 %v2580
      %v2630 = vpop.f32.mrf.mxu0
      %v2631 = vadd.f32 0.0, %v2630
      %v2632 = vpop.f32.mrf.mxu0
      %v2633 = vpop.f32.mrf.mxu0
      %v2634 = vadd.f32 0.0, %v2633
      %v2635 = vpop.f32.mrf.mxu0
      %2636 = vmatprep.mubr.bf16.mxu0 0
      %2637 = vmatmul.mubr.bf16.gmra.mxu0 %v2583
      %v2638 = vpop.f32.mrf.mxu0
      %v2639 = vadd.f32 0.0, %v2638
      %v2640 = vpop.f32.mrf.mxu0
      %v2641 = vpop.f32.mrf.mxu0
      %v2642 = vadd.f32 0.0, %v2641
      %v2643 = vpop.f32.mrf.mxu0
      %2644 = vmatprep.mubr.bf16.mxu0 0
      %2645 = vmatmul.mubr.bf16.gmra.mxu0 %v2586
      %v2646 = vpop.f32.mrf.mxu0
      %v2647 = vadd.f32 0.0, %v2646
      %v2648 = vpop.f32.mrf.mxu0
      %v2649 = vpop.f32.mrf.mxu0
      %v2650 = vadd.f32 0.0, %v2649
      %v2651 = vpop.f32.mrf.mxu0
      %2652 = vdwg.mxu0
      %2653 = vrot.lane.b32.xlu0 %v1592, 88
      %v2654 = vpop.permute.xlu0 %2653
      %2655 = vrot.lane.b32.xlu0 %v1593, 88
      %v2656 = vpop.permute.xlu0 %2655
      %2657 = vrot.lane.b32.xlu0 %v1594, 88
      %v2658 = vpop.permute.xlu0 %2657
      %2659 = vrot.lane.b32.xlu0 %v1595, 88
      %v2660 = vpop.permute.xlu0 %2659
      %v2666 = vsel %vm1775, %v2560, 0
      %v2669 = vsel %vm1775, %v2561, 0
      %v2672 = vsel %vm1775, %v2562, 0
      %v2675 = vsel %vm1775, %v2563, 0
      %2677 = vmatprep.subr.bf16.mxu0 0
      %2678 = vmatpush1.bf16.msra.mxu0 0
      %2679 = vmatprep.subr.bf16.mxu0 0
      %2680 = vmatpush1.bf16.msra.mxu0 0
      %2681 = vmatprep.subr.bf16.mxu0 0
      %2682 = vmatpush1.bf16.msra.mxu0 0
      %2683 = vmatprep.subr.bf16.mxu0 0
      %2684 = vmatpush1.bf16.msra.mxu0 0
      %2685 = vmatprep.subr.bf16.mxu0 0
      %2686 = vmatpush1.bf16.msra.mxu0 %v2660
      %2687 = vmatprep.subr.bf16.mxu0 0
      %2688 = vmatpush1.bf16.msra.mxu0 %v2658
      %2689 = vmatprep.subr.bf16.mxu0 0
      %2690 = vmatpush1.bf16.msra.mxu0 %v2656
      %2691 = vmatprep.subr.bf16.mxu0 0
      %2692 = vmatpush1.bf16.msra.mxu0 %v2654
      %2693 = vmatprep.subr.bf16.mxu0 0
      %2694 = vmatpush2.bf16.msra.mxu0 0
      %2695 = vmatprep.subr.bf16.mxu0 0
      %2696 = vmatpush2.bf16.msra.mxu0 0
      %2697 = vmatprep.subr.bf16.mxu0 0
      %2698 = vmatpush2.bf16.msra.mxu0 0
      %2699 = vmatprep.subr.bf16.mxu0 0
      %2700 = vmatpush2.bf16.msra.mxu0 0
      %2701 = vmatprep.subr.bf16.mxu0 0
      %2702 = vmatpush2.bf16.msra.mxu0 0
      %2703 = vmatprep.subr.bf16.mxu0 0
      %2704 = vmatpush2.bf16.msra.mxu0 0
      %2705 = vmatprep.subr.bf16.mxu0 0
      %2706 = vmatpush2.bf16.msra.mxu0 0
      %2707 = vmatprep.subr.bf16.mxu0 0
      %2708 = vmatpush2.bf16.msra.mxu0 0
      %2709 = vmatprep.mubr.bf16.mxu0 0
      %2710 = vmatmul.mubr.bf16.gmra.mxu0 %v2666
      %v2711 = vpop.f32.mrf.mxu0
      %v2712 = vadd.f32 0.0, %v2711
      %v2713 = vpop.f32.mrf.mxu0
      %v2714 = vpop.f32.mrf.mxu0
      %v2715 = vadd.f32 0.0, %v2714
      %v2716 = vpop.f32.mrf.mxu0
      %2717 = vmatprep.mubr.bf16.mxu0 0
      %2718 = vmatmul.mubr.bf16.gmra.mxu0 %v2669
      %v2719 = vpop.f32.mrf.mxu0
      %v2720 = vadd.f32 0.0, %v2719
      %v2721 = vpop.f32.mrf.mxu0
      %v2722 = vpop.f32.mrf.mxu0
      %v2723 = vadd.f32 0.0, %v2722
      %v2724 = vpop.f32.mrf.mxu0
      %2725 = vmatprep.mubr.bf16.mxu0 0
      %2726 = vmatmul.mubr.bf16.gmra.mxu0 %v2672
      %v2727 = vpop.f32.mrf.mxu0
      %v2728 = vadd.f32 0.0, %v2727
      %v2729 = vpop.f32.mrf.mxu0
      %v2730 = vpop.f32.mrf.mxu0
      %v2731 = vadd.f32 0.0, %v2730
      %v2732 = vpop.f32.mrf.mxu0
      %2733 = vmatprep.mubr.bf16.mxu0 0
      %2734 = vmatmul.mubr.bf16.gmra.mxu0 %v2675
      %v2735 = vpop.f32.mrf.mxu0
      %v2736 = vadd.f32 0.0, %v2735
      %v2737 = vpop.f32.mrf.mxu0
      %v2738 = vpop.f32.mrf.mxu0
      %v2739 = vadd.f32 0.0, %v2738
      %v2740 = vpop.f32.mrf.mxu0
      %2741 = vdwg.mxu0
      %2758 = vrot.lane.b32.xlu0 %v2623, 8
      %v2759 = vpop.permute.xlu0 %2758
      %2760 = vrot.lane.b32.xlu0 %v2626, 8
      %v2761 = vpop.permute.xlu0 %2760
      %2762 = vrot.lane.b32.xlu0 %v2631, 8
      %v2763 = vpop.permute.xlu0 %2762
      %2764 = vrot.lane.b32.xlu0 %v2634, 8
      %v2765 = vpop.permute.xlu0 %2764
      %2766 = vrot.lane.b32.xlu0 %v2639, 8
      %v2767 = vpop.permute.xlu0 %2766
      %2768 = vrot.lane.b32.xlu0 %v2642, 8
      %v2769 = vpop.permute.xlu0 %2768
      %2770 = vrot.lane.b32.xlu0 %v2647, 8
      %v2771 = vpop.permute.xlu0 %2770
      %2772 = vrot.lane.b32.xlu0 %v2650, 8
      %v2773 = vpop.permute.xlu0 %2772
      %2774 = vrot.lane.b32.xlu0 %v2712, 8
      %v2775 = vpop.permute.xlu0 %2774
      %2776 = vrot.lane.b32.xlu0 %v2715, 8
      %v2777 = vpop.permute.xlu0 %2776
      %2778 = vrot.lane.b32.xlu0 %v2720, 8
      %v2779 = vpop.permute.xlu0 %2778
      %2780 = vrot.lane.b32.xlu0 %v2723, 8
      %v2781 = vpop.permute.xlu0 %2780
      %2782 = vrot.lane.b32.xlu0 %v2728, 8
      %v2783 = vpop.permute.xlu0 %2782
      %2784 = vrot.lane.b32.xlu0 %v2731, 8
      %v2785 = vpop.permute.xlu0 %2784
      %2786 = vrot.lane.b32.xlu0 %v2736, 8
      %v2787 = vpop.permute.xlu0 %2786
      %2788 = vrot.lane.b32.xlu0 %v2739, 8
      %v2789 = vpop.permute.xlu0 %2788
      %vm2806 = vcmask 130112
      %2807 = vst.msk [vmem:[#allocation2] sm:$0xff] %vm2806, %v2759
      %2808 = vst.msk [vmem:[#allocation2 + $0x8] sm:$0xff] %vm2806, %v2761
      %2809 = vst.msk [vmem:[#allocation2 + $0x10] sm:$0xff] %vm2806, %v2763
      %2810 = vst.msk [vmem:[#allocation2 + $0x18] sm:$0xff] %vm2806, %v2765
      %2811 = vst.msk [vmem:[#allocation2 + $0x20] sm:$0xff] %vm2806, %v2767
      %2812 = vst.msk [vmem:[#allocation2 + $0x28] sm:$0xff] %vm2806, %v2769
      %2813 = vst.msk [vmem:[#allocation2 + $0x30] sm:$0xff] %vm2806, %v2771
      %2814 = vst.msk [vmem:[#allocation2 + $0x38] sm:$0xff] %vm2806, %v2773
      %2815 = vst.msk [vmem:[#allocation2 + $0x40] sm:$0xff] %vm2806, %v2775
      %2816 = vst.msk [vmem:[#allocation2 + $0x48] sm:$0xff] %vm2806, %v2777
      %2817 = vst.msk [vmem:[#allocation2 + $0x50] sm:$0xff] %vm2806, %v2779
      %2818 = vst.msk [vmem:[#allocation2 + $0x58] sm:$0xff] %vm2806, %v2781
      %2819 = vst.msk [vmem:[#allocation2 + $0x60] sm:$0xff] %vm2806, %v2783
      %2820 = vst.msk [vmem:[#allocation2 + $0x68] sm:$0xff] %vm2806, %v2785
      %2821 = vst.msk [vmem:[#allocation2 + $0x70] sm:$0xff] %vm2806, %v2787
      %2822 = vst.msk [vmem:[#allocation2 + $0x78] sm:$0xff] %vm2806, %v2789
      %2823 = vrot.lane.b32.xlu0 %v1443, 112
      %v2824 = vpop.permute.xlu0 %2823
      %2825 = vrot.lane.b32.xlu0 %v1444, 112
      %v2826 = vpop.permute.xlu0 %2825
      %2827 = vrot.lane.b32.xlu0 %v1445, 112
      %v2828 = vpop.permute.xlu0 %2827
      %2829 = vrot.lane.b32.xlu0 %v1446, 112
      %v2830 = vpop.permute.xlu0 %2829
      %2831 = vrot.lane.b32.xlu0 %v1588, 112
      %v2832 = vpop.permute.xlu0 %2831
      %2833 = vrot.lane.b32.xlu0 %v1589, 112
      %v2834 = vpop.permute.xlu0 %2833
      %2835 = vrot.lane.b32.xlu0 %v1590, 112
      %v2836 = vpop.permute.xlu0 %2835
      %2837 = vrot.lane.b32.xlu0 %v1591, 112
      %v2838 = vpop.permute.xlu0 %2837
      %v2840 = vsel %vm1596, %v2824, 0
      %v2843 = vsel %vm1596, %v2826, 0
      %v2846 = vsel %vm1596, %v2828, 0
      %v2849 = vsel %vm1596, %v2830, 0
      %v2852 = vsel %vm1596, %v2832, 0
      %v2855 = vsel %vm1596, %v2834, 0
      %v2858 = vsel %vm1596, %v2836, 0
      %v2861 = vsel %vm1596, %v2838, 0
      %2863 = vmatprep.subr.bf16.mxu0 0
      %2864 = vmatpush1.bf16.xpose.msra.mxu0 0
      %2865 = vmatprep.subr.bf16.mxu0 0
      %2866 = vmatpush1.bf16.xpose.msra.mxu0 0
      %2867 = vmatprep.subr.bf16.mxu0 0
      %2868 = vmatpush1.bf16.xpose.msra.mxu0 0
      %2869 = vmatprep.subr.bf16.mxu0 0
      %2870 = vmatpush1.bf16.xpose.msra.mxu0 0
      %2871 = vmatprep.subr.bf16.mxu0 0
      %2872 = vmatpush1.bf16.xpose.msra.mxu0 %v2861
      %2873 = vmatprep.subr.bf16.mxu0 0
      %2874 = vmatpush1.bf16.xpose.msra.mxu0 %v2858
      %2875 = vmatprep.subr.bf16.mxu0 0
      %2876 = vmatpush1.bf16.xpose.msra.mxu0 %v2855
      %2877 = vmatprep.subr.bf16.mxu0 0
      %2878 = vmatpush1.bf16.xpose.msra.mxu0 %v2852
      %2879 = vmatprep.subr.bf16.mxu0 0
      %2880 = vmatpush2.bf16.xpose.msra.mxu0 0
      %2881 = vmatprep.subr.bf16.mxu0 0
      %2882 = vmatpush2.bf16.xpose.msra.mxu0 0
      %2883 = vmatprep.subr.bf16.mxu0 0
      %2884 = vmatpush2.bf16.xpose.msra.mxu0 0
      %2885 = vmatprep.subr.bf16.mxu0 0
      %2886 = vmatpush2.bf16.xpose.msra.mxu0 0
      %2887 = vmatprep.subr.bf16.mxu0 0
      %2888 = vmatpush2.bf16.xpose.msra.mxu0 0
      %2889 = vmatprep.subr.bf16.mxu0 0
      %2890 = vmatpush2.bf16.xpose.msra.mxu0 0
      %2891 = vmatprep.subr.bf16.mxu0 0
      %2892 = vmatpush2.bf16.xpose.msra.mxu0 0
      %2893 = vmatprep.subr.bf16.mxu0 0
      %2894 = vmatpush2.bf16.xpose.msra.mxu0 0
      %2895 = vmatprep.mubr.bf16.mxu0 0
      %2896 = vmatmul.mubr.bf16.gmra.mxu0 %v2840
      %v2897 = vpop.f32.mrf.mxu0
      %v2898 = vadd.f32 0.0, %v2897
      %v2899 = vpop.f32.mrf.mxu0
      %v2900 = vpop.f32.mrf.mxu0
      %v2901 = vadd.f32 0.0, %v2900
      %v2902 = vpop.f32.mrf.mxu0
      %2903 = vmatprep.mubr.bf16.mxu0 0
      %2904 = vmatmul.mubr.bf16.gmra.mxu0 %v2843
      %v2905 = vpop.f32.mrf.mxu0
      %v2906 = vadd.f32 0.0, %v2905
      %v2907 = vpop.f32.mrf.mxu0
      %v2908 = vpop.f32.mrf.mxu0
      %v2909 = vadd.f32 0.0, %v2908
      %v2910 = vpop.f32.mrf.mxu0
      %2911 = vmatprep.mubr.bf16.mxu0 0
      %2912 = vmatmul.mubr.bf16.gmra.mxu0 %v2846
      %v2913 = vpop.f32.mrf.mxu0
      %v2914 = vadd.f32 0.0, %v2913
      %v2915 = vpop.f32.mrf.mxu0
      %v2916 = vpop.f32.mrf.mxu0
      %v2917 = vadd.f32 0.0, %v2916
      %v2918 = vpop.f32.mrf.mxu0
      %2919 = vmatprep.mubr.bf16.mxu0 0
      %2920 = vmatmul.mubr.bf16.gmra.mxu0 %v2849
      %v2921 = vpop.f32.mrf.mxu0
      %v2922 = vadd.f32 0.0, %v2921
      %v2923 = vpop.f32.mrf.mxu0
      %v2924 = vpop.f32.mrf.mxu0
      %v2925 = vadd.f32 0.0, %v2924
      %v2926 = vpop.f32.mrf.mxu0
      %2927 = vdwg.mxu0
      %2928 = vrot.lane.b32.xlu0 %v1447, 112
      %v2929 = vpop.permute.xlu0 %2928
      %2930 = vrot.lane.b32.xlu0 %v1448, 112
      %v2931 = vpop.permute.xlu0 %2930
      %2932 = vrot.lane.b32.xlu0 %v1449, 112
      %v2933 = vpop.permute.xlu0 %2932
      %2934 = vrot.lane.b32.xlu0 %v1450, 112
      %v2935 = vpop.permute.xlu0 %2934
      %2936 = vrot.lane.b32.xlu0 %v1592, 112
      %v2937 = vpop.permute.xlu0 %2936
      %2938 = vrot.lane.b32.xlu0 %v1593, 112
      %v2939 = vpop.permute.xlu0 %2938
      %2940 = vrot.lane.b32.xlu0 %v1594, 112
      %v2941 = vpop.permute.xlu0 %2940
      %2942 = vrot.lane.b32.xlu0 %v1595, 112
      %v2943 = vpop.permute.xlu0 %2942
      %v2945 = vsel %vm1596, %v2929, 0
      %v2948 = vsel %vm1596, %v2931, 0
      %v2951 = vsel %vm1596, %v2933, 0
      %v2954 = vsel %vm1596, %v2935, 0
      %v2957 = vsel %vm1596, %v2937, 0
      %v2960 = vsel %vm1596, %v2939, 0
      %v2963 = vsel %vm1596, %v2941, 0
      %v2966 = vsel %vm1596, %v2943, 0
      %2968 = vmatprep.subr.bf16.mxu0 0
      %2969 = vmatpush1.bf16.xpose.msra.mxu0 0
      %2970 = vmatprep.subr.bf16.mxu0 0
      %2971 = vmatpush1.bf16.xpose.msra.mxu0 0
      %2972 = vmatprep.subr.bf16.mxu0 0
      %2973 = vmatpush1.bf16.xpose.msra.mxu0 0
      %2974 = vmatprep.subr.bf16.mxu0 0
      %2975 = vmatpush1.bf16.xpose.msra.mxu0 0
      %2976 = vmatprep.subr.bf16.mxu0 0
      %2977 = vmatpush1.bf16.xpose.msra.mxu0 %v2966
      %2978 = vmatprep.subr.bf16.mxu0 0
      %2979 = vmatpush1.bf16.xpose.msra.mxu0 %v2963
      %2980 = vmatprep.subr.bf16.mxu0 0
      %2981 = vmatpush1.bf16.xpose.msra.mxu0 %v2960
      %2982 = vmatprep.subr.bf16.mxu0 0
      %2983 = vmatpush1.bf16.xpose.msra.mxu0 %v2957
      %2984 = vmatprep.subr.bf16.mxu0 0
      %2985 = vmatpush2.bf16.xpose.msra.mxu0 0
      %2986 = vmatprep.subr.bf16.mxu0 0
      %2987 = vmatpush2.bf16.xpose.msra.mxu0 0
      %2988 = vmatprep.subr.bf16.mxu0 0
      %2989 = vmatpush2.bf16.xpose.msra.mxu0 0
      %2990 = vmatprep.subr.bf16.mxu0 0
      %2991 = vmatpush2.bf16.xpose.msra.mxu0 0
      %2992 = vmatprep.subr.bf16.mxu0 0
      %2993 = vmatpush2.bf16.xpose.msra.mxu0 0
      %2994 = vmatprep.subr.bf16.mxu0 0
      %2995 = vmatpush2.bf16.xpose.msra.mxu0 0
      %2996 = vmatprep.subr.bf16.mxu0 0
      %2997 = vmatpush2.bf16.xpose.msra.mxu0 0
      %2998 = vmatprep.subr.bf16.mxu0 0
      %2999 = vmatpush2.bf16.xpose.msra.mxu0 0
      %3000 = vmatprep.mubr.bf16.mxu0 0
      %3001 = vmatmul.mubr.bf16.gmra.mxu0 %v2945
      %v3002 = vpop.f32.mrf.mxu0
      %v3003 = vadd.f32 0.0, %v3002
      %v3004 = vpop.f32.mrf.mxu0
      %v3005 = vpop.f32.mrf.mxu0
      %v3006 = vadd.f32 0.0, %v3005
      %v3007 = vpop.f32.mrf.mxu0
      %3008 = vmatprep.mubr.bf16.mxu0 0
      %3009 = vmatmul.mubr.bf16.gmra.mxu0 %v2948
      %v3010 = vpop.f32.mrf.mxu0
      %v3011 = vadd.f32 0.0, %v3010
      %v3012 = vpop.f32.mrf.mxu0
      %v3013 = vpop.f32.mrf.mxu0
      %v3014 = vadd.f32 0.0, %v3013
      %v3015 = vpop.f32.mrf.mxu0
      %3016 = vmatprep.mubr.bf16.mxu0 0
      %3017 = vmatmul.mubr.bf16.gmra.mxu0 %v2951
      %v3018 = vpop.f32.mrf.mxu0
      %v3019 = vadd.f32 0.0, %v3018
      %v3020 = vpop.f32.mrf.mxu0
      %v3021 = vpop.f32.mrf.mxu0
      %v3022 = vadd.f32 0.0, %v3021
      %v3023 = vpop.f32.mrf.mxu0
      %3024 = vmatprep.mubr.bf16.mxu0 0
      %3025 = vmatmul.mubr.bf16.gmra.mxu0 %v2954
      %v3026 = vpop.f32.mrf.mxu0
      %v3027 = vadd.f32 0.0, %v3026
      %v3028 = vpop.f32.mrf.mxu0
      %v3029 = vpop.f32.mrf.mxu0
      %v3030 = vadd.f32 0.0, %v3029
      %v3031 = vpop.f32.mrf.mxu0
      %3032 = vdwg.mxu0
      %v3033 = vsel %vm1775, %v2898, -inf
      %3034 = vmax.xlane.f32.xlu0 %v3033
      %v3035 = vpop.xlane.xlu0 %3034
      %v3036 = vsel %vm1775, %v2901, -inf
      %3037 = vmax.xlane.f32.xlu0 %v3036
      %v3038 = vpop.xlane.xlu0 %3037
      %v3039 = vsel %vm1775, %v2906, -inf
      %3040 = vmax.xlane.f32.xlu0 %v3039
      %v3041 = vpop.xlane.xlu0 %3040
      %v3042 = vsel %vm1775, %v2909, -inf
      %3043 = vmax.xlane.f32.xlu0 %v3042
      %v3044 = vpop.xlane.xlu0 %3043
      %v3045 = vsel %vm1775, %v2914, -inf
      %3046 = vmax.xlane.f32.xlu0 %v3045
      %v3047 = vpop.xlane.xlu0 %3046
      %v3048 = vsel %vm1775, %v2917, -inf
      %3049 = vmax.xlane.f32.xlu0 %v3048
      %v3050 = vpop.xlane.xlu0 %3049
      %v3051 = vsel %vm1775, %v2922, -inf
      %3052 = vmax.xlane.f32.xlu0 %v3051
      %v3053 = vpop.xlane.xlu0 %3052
      %v3054 = vsel %vm1775, %v2925, -inf
      %3055 = vmax.xlane.f32.xlu0 %v3054
      %v3056 = vpop.xlane.xlu0 %3055
      %v3057 = vsel %vm1775, %v3003, -inf
      %3058 = vmax.xlane.f32.xlu0 %v3057
      %v3059 = vpop.xlane.xlu0 %3058
      %v3060 = vsel %vm1775, %v3006, -inf
      %3061 = vmax.xlane.f32.xlu0 %v3060
      %v3062 = vpop.xlane.xlu0 %3061
      %v3063 = vsel %vm1775, %v3011, -inf
      %3064 = vmax.xlane.f32.xlu0 %v3063
      %v3065 = vpop.xlane.xlu0 %3064
      %v3066 = vsel %vm1775, %v3014, -inf
      %3067 = vmax.xlane.f32.xlu0 %v3066
      %v3068 = vpop.xlane.xlu0 %3067
      %v3069 = vsel %vm1775, %v3019, -inf
      %3070 = vmax.xlane.f32.xlu0 %v3069
      %v3071 = vpop.xlane.xlu0 %3070
      %v3072 = vsel %vm1775, %v3022, -inf
      %3073 = vmax.xlane.f32.xlu0 %v3072
      %v3074 = vpop.xlane.xlu0 %3073
      %v3075 = vsel %vm1775, %v3027, -inf
      %3076 = vmax.xlane.f32.xlu0 %v3075
      %v3077 = vpop.xlane.xlu0 %3076
      %v3078 = vsel %vm1775, %v3030, -inf
      %3079 = vmax.xlane.f32.xlu0 %v3078
      %v3080 = vpop.xlane.xlu0 %3079
      %v3081 = vsub.f32 %v2898, %v3035
      %v3082 = vsub.f32 %v2901, %v3038
      %v3083 = vsub.f32 %v2906, %v3041
      %v3084 = vsub.f32 %v2909, %v3044
      %v3085 = vsub.f32 %v2914, %v3047
      %v3086 = vsub.f32 %v2917, %v3050
      %v3087 = vsub.f32 %v2922, %v3053
      %v3088 = vsub.f32 %v2925, %v3056
      %v3089 = vsub.f32 %v3003, %v3059
      %v3090 = vsub.f32 %v3006, %v3062
      %v3091 = vsub.f32 %v3011, %v3065
      %v3092 = vsub.f32 %v3014, %v3068
      %v3093 = vsub.f32 %v3019, %v3071
      %v3094 = vsub.f32 %v3022, %v3074
      %v3095 = vsub.f32 %v3027, %v3077
      %v3096 = vsub.f32 %v3030, %v3080
      %v3097 = vmul.f32 %v3081, 1.442695
      %v3098 = vpow.pop %v3097
      %v3099 = vmul.f32 %v3082, 1.442695
      %v3100 = vpow.pop %v3099
      %v3101 = vmul.f32 %v3083, 1.442695
      %v3102 = vpow.pop %v3101
      %v3103 = vmul.f32 %v3084, 1.442695
      %v3104 = vpow.pop %v3103
      %v3105 = vmul.f32 %v3085, 1.442695
      %v3106 = vpow.pop %v3105
      %v3107 = vmul.f32 %v3086, 1.442695
      %v3108 = vpow.pop %v3107
      %v3109 = vmul.f32 %v3087, 1.442695
      %v3110 = vpow.pop %v3109
      %v3111 = vmul.f32 %v3088, 1.442695
      %v3112 = vpow.pop %v3111
      %v3113 = vmul.f32 %v3089, 1.442695
      %v3114 = vpow.pop %v3113
      %v3115 = vmul.f32 %v3090, 1.442695
      %v3116 = vpow.pop %v3115
      %v3117 = vmul.f32 %v3091, 1.442695
      %v3118 = vpow.pop %v3117
      %v3119 = vmul.f32 %v3092, 1.442695
      %v3120 = vpow.pop %v3119
      %v3121 = vmul.f32 %v3093, 1.442695
      %v3122 = vpow.pop %v3121
      %v3123 = vmul.f32 %v3094, 1.442695
      %v3124 = vpow.pop %v3123
      %v3125 = vmul.f32 %v3095, 1.442695
      %v3126 = vpow.pop %v3125
      %v3127 = vmul.f32 %v3096, 1.442695
      %v3128 = vpow.pop %v3127
      %v3129 = vsel %vm1775, %v3098, 0.0
      %3130 = vadd.xlane.f32.xlu0 %v3129
      %v3131 = vpop.xlane.xlu0 %3130
      %v3132 = vsel %vm1775, %v3100, 0.0
      %3133 = vadd.xlane.f32.xlu0 %v3132
      %v3134 = vpop.xlane.xlu0 %3133
      %v3135 = vsel %vm1775, %v3102, 0.0
      %3136 = vadd.xlane.f32.xlu0 %v3135
      %v3137 = vpop.xlane.xlu0 %3136
      %v3138 = vsel %vm1775, %v3104, 0.0
      %3139 = vadd.xlane.f32.xlu0 %v3138
      %v3140 = vpop.xlane.xlu0 %3139
      %v3141 = vsel %vm1775, %v3106, 0.0
      %3142 = vadd.xlane.f32.xlu0 %v3141
      %v3143 = vpop.xlane.xlu0 %3142
      %v3144 = vsel %vm1775, %v3108, 0.0
      %3145 = vadd.xlane.f32.xlu0 %v3144
      %v3146 = vpop.xlane.xlu0 %3145
      %v3147 = vsel %vm1775, %v3110, 0.0
      %3148 = vadd.xlane.f32.xlu0 %v3147
      %v3149 = vpop.xlane.xlu0 %3148
      %v3150 = vsel %vm1775, %v3112, 0.0
      %3151 = vadd.xlane.f32.xlu0 %v3150
      %v3152 = vpop.xlane.xlu0 %3151
      %v3153 = vsel %vm1775, %v3114, 0.0
      %3154 = vadd.xlane.f32.xlu0 %v3153
      %v3155 = vpop.xlane.xlu0 %3154
      %v3156 = vsel %vm1775, %v3116, 0.0
      %3157 = vadd.xlane.f32.xlu0 %v3156
      %v3158 = vpop.xlane.xlu0 %3157
      %v3159 = vsel %vm1775, %v3118, 0.0
      %3160 = vadd.xlane.f32.xlu0 %v3159
      %v3161 = vpop.xlane.xlu0 %3160
      %v3162 = vsel %vm1775, %v3120, 0.0
      %3163 = vadd.xlane.f32.xlu0 %v3162
      %v3164 = vpop.xlane.xlu0 %3163
      %v3165 = vsel %vm1775, %v3122, 0.0
      %3166 = vadd.xlane.f32.xlu0 %v3165
      %v3167 = vpop.xlane.xlu0 %3166
      %v3168 = vsel %vm1775, %v3124, 0.0
      %3169 = vadd.xlane.f32.xlu0 %v3168
      %v3170 = vpop.xlane.xlu0 %3169
      %v3171 = vsel %vm1775, %v3126, 0.0
      %3172 = vadd.xlane.f32.xlu0 %v3171
      %v3173 = vpop.xlane.xlu0 %3172
      %v3174 = vsel %vm1775, %v3128, 0.0
      %3175 = vadd.xlane.f32.xlu0 %v3174
      %v3176 = vpop.xlane.xlu0 %3175
      %v3177 = vrcp.pop %v3131
      %v3178 = vrcp.pop %v3134
      %v3179 = vrcp.pop %v3137
      %v3180 = vrcp.pop %v3140
      %v3181 = vrcp.pop %v3143
      %v3182 = vrcp.pop %v3146
      %v3183 = vrcp.pop %v3149
      %v3184 = vrcp.pop %v3152
      %v3185 = vrcp.pop %v3155
      %v3186 = vrcp.pop %v3158
      %v3187 = vrcp.pop %v3161
      %v3188 = vrcp.pop %v3164
      %v3189 = vrcp.pop %v3167
      %v3190 = vrcp.pop %v3170
      %v3191 = vrcp.pop %v3173
      %v3192 = vrcp.pop %v3176
      %v3193 = vmul.f32 %v3098, %v3177
      %v3194 = vmul.f32 %v3100, %v3178
      %v3195 = vmul.f32 %v3102, %v3179
      %v3196 = vmul.f32 %v3104, %v3180
      %v3197 = vmul.f32 %v3106, %v3181
      %v3198 = vmul.f32 %v3108, %v3182
      %v3199 = vmul.f32 %v3110, %v3183
      %v3200 = vmul.f32 %v3112, %v3184
      %v3201 = vmul.f32 %v3114, %v3185
      %v3202 = vmul.f32 %v3116, %v3186
      %v3203 = vmul.f32 %v3118, %v3187
      %v3204 = vmul.f32 %v3120, %v3188
      %v3205 = vmul.f32 %v3122, %v3189
      %v3206 = vmul.f32 %v3124, %v3190
      %v3207 = vmul.f32 %v3126, %v3191
      %v3208 = vmul.f32 %v3128, %v3192
      %v3209 = vpack.c.bf16 %v3194, %v3193
      %v3210 = vpack.c.bf16 %v3196, %v3195
      %v3211 = vpack.c.bf16 %v3198, %v3197
      %v3212 = vpack.c.bf16 %v3200, %v3199
      %v3213 = vpack.c.bf16 %v3202, %v3201
      %v3214 = vpack.c.bf16 %v3204, %v3203
      %v3215 = vpack.c.bf16 %v3206, %v3205
      %v3216 = vpack.c.bf16 %v3208, %v3207
      %3217 = vrot.lane.b32.xlu0 %v1588, 80
      %v3218 = vpop.permute.xlu0 %3217
      %3219 = vrot.lane.b32.xlu0 %v1589, 80
      %v3220 = vpop.permute.xlu0 %3219
      %3221 = vrot.lane.b32.xlu0 %v1590, 80
      %v3222 = vpop.permute.xlu0 %3221
      %3223 = vrot.lane.b32.xlu0 %v1591, 80
      %v3224 = vpop.permute.xlu0 %3223
      %v3230 = vsel %vm1775, %v3209, 0
      %v3233 = vsel %vm1775, %v3210, 0
      %v3236 = vsel %vm1775, %v3211, 0
      %v3239 = vsel %vm1775, %v3212, 0
      %3241 = vmatprep.subr.bf16.mxu0 0
      %3242 = vmatpush1.bf16.msra.mxu0 0
      %3243 = vmatprep.subr.bf16.mxu0 0
      %3244 = vmatpush1.bf16.msra.mxu0 0
      %3245 = vmatprep.subr.bf16.mxu0 0
      %3246 = vmatpush1.bf16.msra.mxu0 0
      %3247 = vmatprep.subr.bf16.mxu0 0
      %3248 = vmatpush1.bf16.msra.mxu0 0
      %3249 = vmatprep.subr.bf16.mxu0 0
      %3250 = vmatpush1.bf16.msra.mxu0 %v3224
      %3251 = vmatprep.subr.bf16.mxu0 0
      %3252 = vmatpush1.bf16.msra.mxu0 %v3222
      %3253 = vmatprep.subr.bf16.mxu0 0
      %3254 = vmatpush1.bf16.msra.mxu0 %v3220
      %3255 = vmatprep.subr.bf16.mxu0 0
      %3256 = vmatpush1.bf16.msra.mxu0 %v3218
      %3257 = vmatprep.subr.bf16.mxu0 0
      %3258 = vmatpush2.bf16.msra.mxu0 0
      %3259 = vmatprep.subr.bf16.mxu0 0
      %3260 = vmatpush2.bf16.msra.mxu0 0
      %3261 = vmatprep.subr.bf16.mxu0 0
      %3262 = vmatpush2.bf16.msra.mxu0 0
      %3263 = vmatprep.subr.bf16.mxu0 0
      %3264 = vmatpush2.bf16.msra.mxu0 0
      %3265 = vmatprep.subr.bf16.mxu0 0
      %3266 = vmatpush2.bf16.msra.mxu0 0
      %3267 = vmatprep.subr.bf16.mxu0 0
      %3268 = vmatpush2.bf16.msra.mxu0 0
      %3269 = vmatprep.subr.bf16.mxu0 0
      %3270 = vmatpush2.bf16.msra.mxu0 0
      %3271 = vmatprep.subr.bf16.mxu0 0
      %3272 = vmatpush2.bf16.msra.mxu0 0
      %3273 = vmatprep.mubr.bf16.mxu0 0
      %3274 = vmatmul.mubr.bf16.gmra.mxu0 %v3230
      %v3275 = vpop.f32.mrf.mxu0
      %v3276 = vadd.f32 0.0, %v3275
      %v3277 = vpop.f32.mrf.mxu0
      %v3278 = vpop.f32.mrf.mxu0
      %v3279 = vadd.f32 0.0, %v3278
      %v3280 = vpop.f32.mrf.mxu0
      %3281 = vmatprep.mubr.bf16.mxu0 0
      %3282 = vmatmul.mubr.bf16.gmra.mxu0 %v3233
      %v3283 = vpop.f32.mrf.mxu0
      %v3284 = vadd.f32 0.0, %v3283
      %v3285 = vpop.f32.mrf.mxu0
      %v3286 = vpop.f32.mrf.mxu0
      %v3287 = vadd.f32 0.0, %v3286
      %v3288 = vpop.f32.mrf.mxu0
      %3289 = vmatprep.mubr.bf16.mxu0 0
      %3290 = vmatmul.mubr.bf16.gmra.mxu0 %v3236
      %v3291 = vpop.f32.mrf.mxu0
      %v3292 = vadd.f32 0.0, %v3291
      %v3293 = vpop.f32.mrf.mxu0
      %v3294 = vpop.f32.mrf.mxu0
      %v3295 = vadd.f32 0.0, %v3294
      %v3296 = vpop.f32.mrf.mxu0
      %3297 = vmatprep.mubr.bf16.mxu0 0
      %3298 = vmatmul.mubr.bf16.gmra.mxu0 %v3239
      %v3299 = vpop.f32.mrf.mxu0
      %v3300 = vadd.f32 0.0, %v3299
      %v3301 = vpop.f32.mrf.mxu0
      %v3302 = vpop.f32.mrf.mxu0
      %v3303 = vadd.f32 0.0, %v3302
      %v3304 = vpop.f32.mrf.mxu0
      %3305 = vdwg.mxu0
      %3306 = vrot.lane.b32.xlu0 %v1592, 80
      %v3307 = vpop.permute.xlu0 %3306
      %3308 = vrot.lane.b32.xlu0 %v1593, 80
      %v3309 = vpop.permute.xlu0 %3308
      %3310 = vrot.lane.b32.xlu0 %v1594, 80
      %v3311 = vpop.permute.xlu0 %3310
      %3312 = vrot.lane.b32.xlu0 %v1595, 80
      %v3313 = vpop.permute.xlu0 %3312
      %v3319 = vsel %vm1775, %v3213, 0
      %v3322 = vsel %vm1775, %v3214, 0
      %v3325 = vsel %vm1775, %v3215, 0
      %v3328 = vsel %vm1775, %v3216, 0
      %3330 = vmatprep.subr.bf16.mxu0 0
      %3331 = vmatpush1.bf16.msra.mxu0 0
      %3332 = vmatprep.subr.bf16.mxu0 0
      %3333 = vmatpush1.bf16.msra.mxu0 0
      %3334 = vmatprep.subr.bf16.mxu0 0
      %3335 = vmatpush1.bf16.msra.mxu0 0
      %3336 = vmatprep.subr.bf16.mxu0 0
      %3337 = vmatpush1.bf16.msra.mxu0 0
      %3338 = vmatprep.subr.bf16.mxu0 0
      %3339 = vmatpush1.bf16.msra.mxu0 %v3313
      %3340 = vmatprep.subr.bf16.mxu0 0
      %3341 = vmatpush1.bf16.msra.mxu0 %v3311
      %3342 = vmatprep.subr.bf16.mxu0 0
      %3343 = vmatpush1.bf16.msra.mxu0 %v3309
      %3344 = vmatprep.subr.bf16.mxu0 0
      %3345 = vmatpush1.bf16.msra.mxu0 %v3307
      %3346 = vmatprep.subr.bf16.mxu0 0
      %3347 = vmatpush2.bf16.msra.mxu0 0
      %3348 = vmatprep.subr.bf16.mxu0 0
      %3349 = vmatpush2.bf16.msra.mxu0 0
      %3350 = vmatprep.subr.bf16.mxu0 0
      %3351 = vmatpush2.bf16.msra.mxu0 0
      %3352 = vmatprep.subr.bf16.mxu0 0
      %3353 = vmatpush2.bf16.msra.mxu0 0
      %3354 = vmatprep.subr.bf16.mxu0 0
      %3355 = vmatpush2.bf16.msra.mxu0 0
      %3356 = vmatprep.subr.bf16.mxu0 0
      %3357 = vmatpush2.bf16.msra.mxu0 0
      %3358 = vmatprep.subr.bf16.mxu0 0
      %3359 = vmatpush2.bf16.msra.mxu0 0
      %3360 = vmatprep.subr.bf16.mxu0 0
      %3361 = vmatpush2.bf16.msra.mxu0 0
      %3362 = vmatprep.mubr.bf16.mxu0 0
      %3363 = vmatmul.mubr.bf16.gmra.mxu0 %v3319
      %v3364 = vpop.f32.mrf.mxu0
      %v3365 = vadd.f32 0.0, %v3364
      %v3366 = vpop.f32.mrf.mxu0
      %v3367 = vpop.f32.mrf.mxu0
      %v3368 = vadd.f32 0.0, %v3367
      %v3369 = vpop.f32.mrf.mxu0
      %3370 = vmatprep.mubr.bf16.mxu0 0
      %3371 = vmatmul.mubr.bf16.gmra.mxu0 %v3322
      %v3372 = vpop.f32.mrf.mxu0
      %v3373 = vadd.f32 0.0, %v3372
      %v3374 = vpop.f32.mrf.mxu0
      %v3375 = vpop.f32.mrf.mxu0
      %v3376 = vadd.f32 0.0, %v3375
      %v3377 = vpop.f32.mrf.mxu0
      %3378 = vmatprep.mubr.bf16.mxu0 0
      %3379 = vmatmul.mubr.bf16.gmra.mxu0 %v3325
      %v3380 = vpop.f32.mrf.mxu0
      %v3381 = vadd.f32 0.0, %v3380
      %v3382 = vpop.f32.mrf.mxu0
      %v3383 = vpop.f32.mrf.mxu0
      %v3384 = vadd.f32 0.0, %v3383
      %v3385 = vpop.f32.mrf.mxu0
      %3386 = vmatprep.mubr.bf16.mxu0 0
      %3387 = vmatmul.mubr.bf16.gmra.mxu0 %v3328
      %v3388 = vpop.f32.mrf.mxu0
      %v3389 = vadd.f32 0.0, %v3388
      %v3390 = vpop.f32.mrf.mxu0
      %v3391 = vpop.f32.mrf.mxu0
      %v3392 = vadd.f32 0.0, %v3391
      %v3393 = vpop.f32.mrf.mxu0
      %3394 = vdwg.mxu0
      %3411 = vrot.lane.b32.xlu0 %v3276, 16
      %v3412 = vpop.permute.xlu0 %3411
      %3413 = vrot.lane.b32.xlu0 %v3279, 16
      %v3414 = vpop.permute.xlu0 %3413
      %3415 = vrot.lane.b32.xlu0 %v3284, 16
      %v3416 = vpop.permute.xlu0 %3415
      %3417 = vrot.lane.b32.xlu0 %v3287, 16
      %v3418 = vpop.permute.xlu0 %3417
      %3419 = vrot.lane.b32.xlu0 %v3292, 16
      %v3420 = vpop.permute.xlu0 %3419
      %3421 = vrot.lane.b32.xlu0 %v3295, 16
      %v3422 = vpop.permute.xlu0 %3421
      %3423 = vrot.lane.b32.xlu0 %v3300, 16
      %v3424 = vpop.permute.xlu0 %3423
      %3425 = vrot.lane.b32.xlu0 %v3303, 16
      %v3426 = vpop.permute.xlu0 %3425
      %3427 = vrot.lane.b32.xlu0 %v3365, 16
      %v3428 = vpop.permute.xlu0 %3427
      %3429 = vrot.lane.b32.xlu0 %v3368, 16
      %v3430 = vpop.permute.xlu0 %3429
      %3431 = vrot.lane.b32.xlu0 %v3373, 16
      %v3432 = vpop.permute.xlu0 %3431
      %3433 = vrot.lane.b32.xlu0 %v3376, 16
      %v3434 = vpop.permute.xlu0 %3433
      %3435 = vrot.lane.b32.xlu0 %v3381, 16
      %v3436 = vpop.permute.xlu0 %3435
      %3437 = vrot.lane.b32.xlu0 %v3384, 16
      %v3438 = vpop.permute.xlu0 %3437
      %3439 = vrot.lane.b32.xlu0 %v3389, 16
      %v3440 = vpop.permute.xlu0 %3439
      %3441 = vrot.lane.b32.xlu0 %v3392, 16
      %v3442 = vpop.permute.xlu0 %3441
      %vm3459 = vcmask 195712
      %3460 = vst.msk [vmem:[#allocation2] sm:$0xff] %vm3459, %v3412
      %3461 = vst.msk [vmem:[#allocation2 + $0x8] sm:$0xff] %vm3459, %v3414
      %3462 = vst.msk [vmem:[#allocation2 + $0x10] sm:$0xff] %vm3459, %v3416
      %3463 = vst.msk [vmem:[#allocation2 + $0x18] sm:$0xff] %vm3459, %v3418
      %3464 = vst.msk [vmem:[#allocation2 + $0x20] sm:$0xff] %vm3459, %v3420
      %3465 = vst.msk [vmem:[#allocation2 + $0x28] sm:$0xff] %vm3459, %v3422
      %3466 = vst.msk [vmem:[#allocation2 + $0x30] sm:$0xff] %vm3459, %v3424
      %3467 = vst.msk [vmem:[#allocation2 + $0x38] sm:$0xff] %vm3459, %v3426
      %3468 = vst.msk [vmem:[#allocation2 + $0x40] sm:$0xff] %vm3459, %v3428
      %3469 = vst.msk [vmem:[#allocation2 + $0x48] sm:$0xff] %vm3459, %v3430
      %3470 = vst.msk [vmem:[#allocation2 + $0x50] sm:$0xff] %vm3459, %v3432
      %3471 = vst.msk [vmem:[#allocation2 + $0x58] sm:$0xff] %vm3459, %v3434
      %3472 = vst.msk [vmem:[#allocation2 + $0x60] sm:$0xff] %vm3459, %v3436
      %3473 = vst.msk [vmem:[#allocation2 + $0x68] sm:$0xff] %vm3459, %v3438
      %3474 = vst.msk [vmem:[#allocation2 + $0x70] sm:$0xff] %vm3459, %v3440
      %3475 = vst.msk [vmem:[#allocation2 + $0x78] sm:$0xff] %vm3459, %v3442
      %3476 = vrot.lane.b32.xlu0 %v1443, 104
      %v3477 = vpop.permute.xlu0 %3476
      %3478 = vrot.lane.b32.xlu0 %v1444, 104
      %v3479 = vpop.permute.xlu0 %3478
      %3480 = vrot.lane.b32.xlu0 %v1445, 104
      %v3481 = vpop.permute.xlu0 %3480
      %3482 = vrot.lane.b32.xlu0 %v1446, 104
      %v3483 = vpop.permute.xlu0 %3482
      %3484 = vrot.lane.b32.xlu0 %v1588, 104
      %v3485 = vpop.permute.xlu0 %3484
      %3486 = vrot.lane.b32.xlu0 %v1589, 104
      %v3487 = vpop.permute.xlu0 %3486
      %3488 = vrot.lane.b32.xlu0 %v1590, 104
      %v3489 = vpop.permute.xlu0 %3488
      %3490 = vrot.lane.b32.xlu0 %v1591, 104
      %v3491 = vpop.permute.xlu0 %3490
      %v3493 = vsel %vm1596, %v3477, 0
      %v3496 = vsel %vm1596, %v3479, 0
      %v3499 = vsel %vm1596, %v3481, 0
      %v3502 = vsel %vm1596, %v3483, 0
      %v3505 = vsel %vm1596, %v3485, 0
      %v3508 = vsel %vm1596, %v3487, 0
      %v3511 = vsel %vm1596, %v3489, 0
      %v3514 = vsel %vm1596, %v3491, 0
      %3516 = vmatprep.subr.bf16.mxu0 0
      %3517 = vmatpush1.bf16.xpose.msra.mxu0 0
      %3518 = vmatprep.subr.bf16.mxu0 0
      %3519 = vmatpush1.bf16.xpose.msra.mxu0 0
      %3520 = vmatprep.subr.bf16.mxu0 0
      %3521 = vmatpush1.bf16.xpose.msra.mxu0 0
      %3522 = vmatprep.subr.bf16.mxu0 0
      %3523 = vmatpush1.bf16.xpose.msra.mxu0 0
      %3524 = vmatprep.subr.bf16.mxu0 0
      %3525 = vmatpush1.bf16.xpose.msra.mxu0 %v3514
      %3526 = vmatprep.subr.bf16.mxu0 0
      %3527 = vmatpush1.bf16.xpose.msra.mxu0 %v3511
      %3528 = vmatprep.subr.bf16.mxu0 0
      %3529 = vmatpush1.bf16.xpose.msra.mxu0 %v3508
      %3530 = vmatprep.subr.bf16.mxu0 0
      %3531 = vmatpush1.bf16.xpose.msra.mxu0 %v3505
      %3532 = vmatprep.subr.bf16.mxu0 0
      %3533 = vmatpush2.bf16.xpose.msra.mxu0 0
      %3534 = vmatprep.subr.bf16.mxu0 0
      %3535 = vmatpush2.bf16.xpose.msra.mxu0 0
      %3536 = vmatprep.subr.bf16.mxu0 0
      %3537 = vmatpush2.bf16.xpose.msra.mxu0 0
      %3538 = vmatprep.subr.bf16.mxu0 0
      %3539 = vmatpush2.bf16.xpose.msra.mxu0 0
      %3540 = vmatprep.subr.bf16.mxu0 0
      %3541 = vmatpush2.bf16.xpose.msra.mxu0 0
      %3542 = vmatprep.subr.bf16.mxu0 0
      %3543 = vmatpush2.bf16.xpose.msra.mxu0 0
      %3544 = vmatprep.subr.bf16.mxu0 0
      %3545 = vmatpush2.bf16.xpose.msra.mxu0 0
      %3546 = vmatprep.subr.bf16.mxu0 0
      %3547 = vmatpush2.bf16.xpose.msra.mxu0 0
      %3548 = vmatprep.mubr.bf16.mxu0 0
      %3549 = vmatmul.mubr.bf16.gmra.mxu0 %v3493
      %v3550 = vpop.f32.mrf.mxu0
      %v3551 = vadd.f32 0.0, %v3550
      %v3552 = vpop.f32.mrf.mxu0
      %v3553 = vpop.f32.mrf.mxu0
      %v3554 = vadd.f32 0.0, %v3553
      %v3555 = vpop.f32.mrf.mxu0
      %3556 = vmatprep.mubr.bf16.mxu0 0
      %3557 = vmatmul.mubr.bf16.gmra.mxu0 %v3496
      %v3558 = vpop.f32.mrf.mxu0
      %v3559 = vadd.f32 0.0, %v3558
      %v3560 = vpop.f32.mrf.mxu0
      %v3561 = vpop.f32.mrf.mxu0
      %v3562 = vadd.f32 0.0, %v3561
      %v3563 = vpop.f32.mrf.mxu0
      %3564 = vmatprep.mubr.bf16.mxu0 0
      %3565 = vmatmul.mubr.bf16.gmra.mxu0 %v3499
      %v3566 = vpop.f32.mrf.mxu0
      %v3567 = vadd.f32 0.0, %v3566
      %v3568 = vpop.f32.mrf.mxu0
      %v3569 = vpop.f32.mrf.mxu0
      %v3570 = vadd.f32 0.0, %v3569
      %v3571 = vpop.f32.mrf.mxu0
      %3572 = vmatprep.mubr.bf16.mxu0 0
      %3573 = vmatmul.mubr.bf16.gmra.mxu0 %v3502
      %v3574 = vpop.f32.mrf.mxu0
      %v3575 = vadd.f32 0.0, %v3574
      %v3576 = vpop.f32.mrf.mxu0
      %v3577 = vpop.f32.mrf.mxu0
      %v3578 = vadd.f32 0.0, %v3577
      %v3579 = vpop.f32.mrf.mxu0
      %3580 = vdwg.mxu0
      %3581 = vrot.lane.b32.xlu0 %v1447, 104
      %v3582 = vpop.permute.xlu0 %3581
      %3583 = vrot.lane.b32.xlu0 %v1448, 104
      %v3584 = vpop.permute.xlu0 %3583
      %3585 = vrot.lane.b32.xlu0 %v1449, 104
      %v3586 = vpop.permute.xlu0 %3585
      %3587 = vrot.lane.b32.xlu0 %v1450, 104
      %v3588 = vpop.permute.xlu0 %3587
      %3589 = vrot.lane.b32.xlu0 %v1592, 104
      %v3590 = vpop.permute.xlu0 %3589
      %3591 = vrot.lane.b32.xlu0 %v1593, 104
      %v3592 = vpop.permute.xlu0 %3591
      %3593 = vrot.lane.b32.xlu0 %v1594, 104
      %v3594 = vpop.permute.xlu0 %3593
      %3595 = vrot.lane.b32.xlu0 %v1595, 104
      %v3596 = vpop.permute.xlu0 %3595
      %v3598 = vsel %vm1596, %v3582, 0
      %v3601 = vsel %vm1596, %v3584, 0
      %v3604 = vsel %vm1596, %v3586, 0
      %v3607 = vsel %vm1596, %v3588, 0
      %v3610 = vsel %vm1596, %v3590, 0
      %v3613 = vsel %vm1596, %v3592, 0
      %v3616 = vsel %vm1596, %v3594, 0
      %v3619 = vsel %vm1596, %v3596, 0
      %3621 = vmatprep.subr.bf16.mxu0 0
      %3622 = vmatpush1.bf16.xpose.msra.mxu0 0
      %3623 = vmatprep.subr.bf16.mxu0 0
      %3624 = vmatpush1.bf16.xpose.msra.mxu0 0
      %3625 = vmatprep.subr.bf16.mxu0 0
      %3626 = vmatpush1.bf16.xpose.msra.mxu0 0
      %3627 = vmatprep.subr.bf16.mxu0 0
      %3628 = vmatpush1.bf16.xpose.msra.mxu0 0
      %3629 = vmatprep.subr.bf16.mxu0 0
      %3630 = vmatpush1.bf16.xpose.msra.mxu0 %v3619
      %3631 = vmatprep.subr.bf16.mxu0 0
      %3632 = vmatpush1.bf16.xpose.msra.mxu0 %v3616
      %3633 = vmatprep.subr.bf16.mxu0 0
      %3634 = vmatpush1.bf16.xpose.msra.mxu0 %v3613
      %3635 = vmatprep.subr.bf16.mxu0 0
      %3636 = vmatpush1.bf16.xpose.msra.mxu0 %v3610
      %3637 = vmatprep.subr.bf16.mxu0 0
      %3638 = vmatpush2.bf16.xpose.msra.mxu0 0
      %3639 = vmatprep.subr.bf16.mxu0 0
      %3640 = vmatpush2.bf16.xpose.msra.mxu0 0
      %3641 = vmatprep.subr.bf16.mxu0 0
      %3642 = vmatpush2.bf16.xpose.msra.mxu0 0
      %3643 = vmatprep.subr.bf16.mxu0 0
      %3644 = vmatpush2.bf16.xpose.msra.mxu0 0
      %3645 = vmatprep.subr.bf16.mxu0 0
      %3646 = vmatpush2.bf16.xpose.msra.mxu0 0
      %3647 = vmatprep.subr.bf16.mxu0 0
      %3648 = vmatpush2.bf16.xpose.msra.mxu0 0
      %3649 = vmatprep.subr.bf16.mxu0 0
      %3650 = vmatpush2.bf16.xpose.msra.mxu0 0
      %3651 = vmatprep.subr.bf16.mxu0 0
      %3652 = vmatpush2.bf16.xpose.msra.mxu0 0
      %3653 = vmatprep.mubr.bf16.mxu0 0
      %3654 = vmatmul.mubr.bf16.gmra.mxu0 %v3598
      %v3655 = vpop.f32.mrf.mxu0
      %v3656 = vadd.f32 0.0, %v3655
      %v3657 = vpop.f32.mrf.mxu0
      %v3658 = vpop.f32.mrf.mxu0
      %v3659 = vadd.f32 0.0, %v3658
      %v3660 = vpop.f32.mrf.mxu0
      %3661 = vmatprep.mubr.bf16.mxu0 0
      %3662 = vmatmul.mubr.bf16.gmra.mxu0 %v3601
      %v3663 = vpop.f32.mrf.mxu0
      %v3664 = vadd.f32 0.0, %v3663
      %v3665 = vpop.f32.mrf.mxu0
      %v3666 = vpop.f32.mrf.mxu0
      %v3667 = vadd.f32 0.0, %v3666
      %v3668 = vpop.f32.mrf.mxu0
      %3669 = vmatprep.mubr.bf16.mxu0 0
      %3670 = vmatmul.mubr.bf16.gmra.mxu0 %v3604
      %v3671 = vpop.f32.mrf.mxu0
      %v3672 = vadd.f32 0.0, %v3671
      %v3673 = vpop.f32.mrf.mxu0
      %v3674 = vpop.f32.mrf.mxu0
      %v3675 = vadd.f32 0.0, %v3674
      %v3676 = vpop.f32.mrf.mxu0
      %3677 = vmatprep.mubr.bf16.mxu0 0
      %3678 = vmatmul.mubr.bf16.gmra.mxu0 %v3607
      %v3679 = vpop.f32.mrf.mxu0
      %v3680 = vadd.f32 0.0, %v3679
      %v3681 = vpop.f32.mrf.mxu0
      %v3682 = vpop.f32.mrf.mxu0
      %v3683 = vadd.f32 0.0, %v3682
      %v3684 = vpop.f32.mrf.mxu0
      %3685 = vdwg.mxu0
      %v3686 = vsel %vm1775, %v3551, -inf
      %3687 = vmax.xlane.f32.xlu0 %v3686
      %v3688 = vpop.xlane.xlu0 %3687
      %v3689 = vsel %vm1775, %v3554, -inf
      %3690 = vmax.xlane.f32.xlu0 %v3689
      %v3691 = vpop.xlane.xlu0 %3690
      %v3692 = vsel %vm1775, %v3559, -inf
      %3693 = vmax.xlane.f32.xlu0 %v3692
      %v3694 = vpop.xlane.xlu0 %3693
      %v3695 = vsel %vm1775, %v3562, -inf
      %3696 = vmax.xlane.f32.xlu0 %v3695
      %v3697 = vpop.xlane.xlu0 %3696
      %v3698 = vsel %vm1775, %v3567, -inf
      %3699 = vmax.xlane.f32.xlu0 %v3698
      %v3700 = vpop.xlane.xlu0 %3699
      %v3701 = vsel %vm1775, %v3570, -inf
      %3702 = vmax.xlane.f32.xlu0 %v3701
      %v3703 = vpop.xlane.xlu0 %3702
      %v3704 = vsel %vm1775, %v3575, -inf
      %3705 = vmax.xlane.f32.xlu0 %v3704
      %v3706 = vpop.xlane.xlu0 %3705
      %v3707 = vsel %vm1775, %v3578, -inf
      %3708 = vmax.xlane.f32.xlu0 %v3707
      %v3709 = vpop.xlane.xlu0 %3708
      %v3710 = vsel %vm1775, %v3656, -inf
      %3711 = vmax.xlane.f32.xlu0 %v3710
      %v3712 = vpop.xlane.xlu0 %3711
      %v3713 = vsel %vm1775, %v3659, -inf
      %3714 = vmax.xlane.f32.xlu0 %v3713
      %v3715 = vpop.xlane.xlu0 %3714
      %v3716 = vsel %vm1775, %v3664, -inf
      %3717 = vmax.xlane.f32.xlu0 %v3716
      %v3718 = vpop.xlane.xlu0 %3717
      %v3719 = vsel %vm1775, %v3667, -inf
      %3720 = vmax.xlane.f32.xlu0 %v3719
      %v3721 = vpop.xlane.xlu0 %3720
      %v3722 = vsel %vm1775, %v3672, -inf
      %3723 = vmax.xlane.f32.xlu0 %v3722
      %v3724 = vpop.xlane.xlu0 %3723
      %v3725 = vsel %vm1775, %v3675, -inf
      %3726 = vmax.xlane.f32.xlu0 %v3725
      %v3727 = vpop.xlane.xlu0 %3726
      %v3728 = vsel %vm1775, %v3680, -inf
      %3729 = vmax.xlane.f32.xlu0 %v3728
      %v3730 = vpop.xlane.xlu0 %3729
      %v3731 = vsel %vm1775, %v3683, -inf
      %3732 = vmax.xlane.f32.xlu0 %v3731
      %v3733 = vpop.xlane.xlu0 %3732
      %v3734 = vsub.f32 %v3551, %v3688
      %v3735 = vsub.f32 %v3554, %v3691
      %v3736 = vsub.f32 %v3559, %v3694
      %v3737 = vsub.f32 %v3562, %v3697
      %v3738 = vsub.f32 %v3567, %v3700
      %v3739 = vsub.f32 %v3570, %v3703
      %v3740 = vsub.f32 %v3575, %v3706
      %v3741 = vsub.f32 %v3578, %v3709
      %v3742 = vsub.f32 %v3656, %v3712
      %v3743 = vsub.f32 %v3659, %v3715
      %v3744 = vsub.f32 %v3664, %v3718
      %v3745 = vsub.f32 %v3667, %v3721
      %v3746 = vsub.f32 %v3672, %v3724
      %v3747 = vsub.f32 %v3675, %v3727
      %v3748 = vsub.f32 %v3680, %v3730
      %v3749 = vsub.f32 %v3683, %v3733
      %v3750 = vmul.f32 %v3734, 1.442695
      %v3751 = vpow.pop %v3750
      %v3752 = vmul.f32 %v3735, 1.442695
      %v3753 = vpow.pop %v3752
      %v3754 = vmul.f32 %v3736, 1.442695
      %v3755 = vpow.pop %v3754
      %v3756 = vmul.f32 %v3737, 1.442695
      %v3757 = vpow.pop %v3756
      %v3758 = vmul.f32 %v3738, 1.442695
      %v3759 = vpow.pop %v3758
      %v3760 = vmul.f32 %v3739, 1.442695
      %v3761 = vpow.pop %v3760
      %v3762 = vmul.f32 %v3740, 1.442695
      %v3763 = vpow.pop %v3762
      %v3764 = vmul.f32 %v3741, 1.442695
      %v3765 = vpow.pop %v3764
      %v3766 = vmul.f32 %v3742, 1.442695
      %v3767 = vpow.pop %v3766
      %v3768 = vmul.f32 %v3743, 1.442695
      %v3769 = vpow.pop %v3768
      %v3770 = vmul.f32 %v3744, 1.442695
      %v3771 = vpow.pop %v3770
      %v3772 = vmul.f32 %v3745, 1.442695
      %v3773 = vpow.pop %v3772
      %v3774 = vmul.f32 %v3746, 1.442695
      %v3775 = vpow.pop %v3774
      %v3776 = vmul.f32 %v3747, 1.442695
      %v3777 = vpow.pop %v3776
      %v3778 = vmul.f32 %v3748, 1.442695
      %v3779 = vpow.pop %v3778
      %v3780 = vmul.f32 %v3749, 1.442695
      %v3781 = vpow.pop %v3780
      %v3782 = vsel %vm1775, %v3751, 0.0
      %3783 = vadd.xlane.f32.xlu0 %v3782
      %v3784 = vpop.xlane.xlu0 %3783
      %v3785 = vsel %vm1775, %v3753, 0.0
      %3786 = vadd.xlane.f32.xlu0 %v3785
      %v3787 = vpop.xlane.xlu0 %3786
      %v3788 = vsel %vm1775, %v3755, 0.0
      %3789 = vadd.xlane.f32.xlu0 %v3788
      %v3790 = vpop.xlane.xlu0 %3789
      %v3791 = vsel %vm1775, %v3757, 0.0
      %3792 = vadd.xlane.f32.xlu0 %v3791
      %v3793 = vpop.xlane.xlu0 %3792
      %v3794 = vsel %vm1775, %v3759, 0.0
      %3795 = vadd.xlane.f32.xlu0 %v3794
      %v3796 = vpop.xlane.xlu0 %3795
      %v3797 = vsel %vm1775, %v3761, 0.0
      %3798 = vadd.xlane.f32.xlu0 %v3797
      %v3799 = vpop.xlane.xlu0 %3798
      %v3800 = vsel %vm1775, %v3763, 0.0
      %3801 = vadd.xlane.f32.xlu0 %v3800
      %v3802 = vpop.xlane.xlu0 %3801
      %v3803 = vsel %vm1775, %v3765, 0.0
      %3804 = vadd.xlane.f32.xlu0 %v3803
      %v3805 = vpop.xlane.xlu0 %3804
      %v3806 = vsel %vm1775, %v3767, 0.0
      %3807 = vadd.xlane.f32.xlu0 %v3806
      %v3808 = vpop.xlane.xlu0 %3807
      %v3809 = vsel %vm1775, %v3769, 0.0
      %3810 = vadd.xlane.f32.xlu0 %v3809
      %v3811 = vpop.xlane.xlu0 %3810
      %v3812 = vsel %vm1775, %v3771, 0.0
      %3813 = vadd.xlane.f32.xlu0 %v3812
      %v3814 = vpop.xlane.xlu0 %3813
      %v3815 = vsel %vm1775, %v3773, 0.0
      %3816 = vadd.xlane.f32.xlu0 %v3815
      %v3817 = vpop.xlane.xlu0 %3816
      %v3818 = vsel %vm1775, %v3775, 0.0
      %3819 = vadd.xlane.f32.xlu0 %v3818
      %v3820 = vpop.xlane.xlu0 %3819
      %v3821 = vsel %vm1775, %v3777, 0.0
      %3822 = vadd.xlane.f32.xlu0 %v3821
      %v3823 = vpop.xlane.xlu0 %3822
      %v3824 = vsel %vm1775, %v3779, 0.0
      %3825 = vadd.xlane.f32.xlu0 %v3824
      %v3826 = vpop.xlane.xlu0 %3825
      %v3827 = vsel %vm1775, %v3781, 0.0
      %3828 = vadd.xlane.f32.xlu0 %v3827
      %v3829 = vpop.xlane.xlu0 %3828
      %v3830 = vrcp.pop %v3784
      %v3831 = vrcp.pop %v3787
      %v3832 = vrcp.pop %v3790
      %v3833 = vrcp.pop %v3793
      %v3834 = vrcp.pop %v3796
      %v3835 = vrcp.pop %v3799
      %v3836 = vrcp.pop %v3802
      %v3837 = vrcp.pop %v3805
      %v3838 = vrcp.pop %v3808
      %v3839 = vrcp.pop %v3811
      %v3840 = vrcp.pop %v3814
      %v3841 = vrcp.pop %v3817
      %v3842 = vrcp.pop %v3820
      %v3843 = vrcp.pop %v3823
      %v3844 = vrcp.pop %v3826
      %v3845 = vrcp.pop %v3829
      %v3846 = vmul.f32 %v3751, %v3830
      %v3847 = vmul.f32 %v3753, %v3831
      %v3848 = vmul.f32 %v3755, %v3832
      %v3849 = vmul.f32 %v3757, %v3833
      %v3850 = vmul.f32 %v3759, %v3834
      %v3851 = vmul.f32 %v3761, %v3835
      %v3852 = vmul.f32 %v3763, %v3836
      %v3853 = vmul.f32 %v3765, %v3837
      %v3854 = vmul.f32 %v3767, %v3838
      %v3855 = vmul.f32 %v3769, %v3839
      %v3856 = vmul.f32 %v3771, %v3840
      %v3857 = vmul.f32 %v3773, %v3841
      %v3858 = vmul.f32 %v3775, %v3842
      %v3859 = vmul.f32 %v3777, %v3843
      %v3860 = vmul.f32 %v3779, %v3844
      %v3861 = vmul.f32 %v3781, %v3845
      %v3862 = vpack.c.bf16 %v3847, %v3846
      %v3863 = vpack.c.bf16 %v3849, %v3848
      %v3864 = vpack.c.bf16 %v3851, %v3850
      %v3865 = vpack.c.bf16 %v3853, %v3852
      %v3866 = vpack.c.bf16 %v3855, %v3854
      %v3867 = vpack.c.bf16 %v3857, %v3856
      %v3868 = vpack.c.bf16 %v3859, %v3858
      %v3869 = vpack.c.bf16 %v3861, %v3860
      %3870 = vrot.lane.b32.xlu0 %v1588, 72
      %v3871 = vpop.permute.xlu0 %3870
      %3872 = vrot.lane.b32.xlu0 %v1589, 72
      %v3873 = vpop.permute.xlu0 %3872
      %3874 = vrot.lane.b32.xlu0 %v1590, 72
      %v3875 = vpop.permute.xlu0 %3874
      %3876 = vrot.lane.b32.xlu0 %v1591, 72
      %v3877 = vpop.permute.xlu0 %3876
      %v3883 = vsel %vm1775, %v3862, 0
      %v3886 = vsel %vm1775, %v3863, 0
      %v3889 = vsel %vm1775, %v3864, 0
      %v3892 = vsel %vm1775, %v3865, 0
      %3894 = vmatprep.subr.bf16.mxu0 0
      %3895 = vmatpush1.bf16.msra.mxu0 0
      %3896 = vmatprep.subr.bf16.mxu0 0
      %3897 = vmatpush1.bf16.msra.mxu0 0
      %3898 = vmatprep.subr.bf16.mxu0 0
      %3899 = vmatpush1.bf16.msra.mxu0 0
      %3900 = vmatprep.subr.bf16.mxu0 0
      %3901 = vmatpush1.bf16.msra.mxu0 0
      %3902 = vmatprep.subr.bf16.mxu0 0
      %3903 = vmatpush1.bf16.msra.mxu0 %v3877
      %3904 = vmatprep.subr.bf16.mxu0 0
      %3905 = vmatpush1.bf16.msra.mxu0 %v3875
      %3906 = vmatprep.subr.bf16.mxu0 0
      %3907 = vmatpush1.bf16.msra.mxu0 %v3873
      %3908 = vmatprep.subr.bf16.mxu0 0
      %3909 = vmatpush1.bf16.msra.mxu0 %v3871
      %3910 = vmatprep.subr.bf16.mxu0 0
      %3911 = vmatpush2.bf16.msra.mxu0 0
      %3912 = vmatprep.subr.bf16.mxu0 0
      %3913 = vmatpush2.bf16.msra.mxu0 0
      %3914 = vmatprep.subr.bf16.mxu0 0
      %3915 = vmatpush2.bf16.msra.mxu0 0
      %3916 = vmatprep.subr.bf16.mxu0 0
      %3917 = vmatpush2.bf16.msra.mxu0 0
      %3918 = vmatprep.subr.bf16.mxu0 0
      %3919 = vmatpush2.bf16.msra.mxu0 0
      %3920 = vmatprep.subr.bf16.mxu0 0
      %3921 = vmatpush2.bf16.msra.mxu0 0
      %3922 = vmatprep.subr.bf16.mxu0 0
      %3923 = vmatpush2.bf16.msra.mxu0 0
      %3924 = vmatprep.subr.bf16.mxu0 0
      %3925 = vmatpush2.bf16.msra.mxu0 0
      %3926 = vmatprep.mubr.bf16.mxu0 0
      %3927 = vmatmul.mubr.bf16.gmra.mxu0 %v3883
      %v3928 = vpop.f32.mrf.mxu0
      %v3929 = vadd.f32 0.0, %v3928
      %v3930 = vpop.f32.mrf.mxu0
      %v3931 = vpop.f32.mrf.mxu0
      %v3932 = vadd.f32 0.0, %v3931
      %v3933 = vpop.f32.mrf.mxu0
      %3934 = vmatprep.mubr.bf16.mxu0 0
      %3935 = vmatmul.mubr.bf16.gmra.mxu0 %v3886
      %v3936 = vpop.f32.mrf.mxu0
      %v3937 = vadd.f32 0.0, %v3936
      %v3938 = vpop.f32.mrf.mxu0
      %v3939 = vpop.f32.mrf.mxu0
      %v3940 = vadd.f32 0.0, %v3939
      %v3941 = vpop.f32.mrf.mxu0
      %3942 = vmatprep.mubr.bf16.mxu0 0
      %3943 = vmatmul.mubr.bf16.gmra.mxu0 %v3889
      %v3944 = vpop.f32.mrf.mxu0
      %v3945 = vadd.f32 0.0, %v3944
      %v3946 = vpop.f32.mrf.mxu0
      %v3947 = vpop.f32.mrf.mxu0
      %v3948 = vadd.f32 0.0, %v3947
      %v3949 = vpop.f32.mrf.mxu0
      %3950 = vmatprep.mubr.bf16.mxu0 0
      %3951 = vmatmul.mubr.bf16.gmra.mxu0 %v3892
      %v3952 = vpop.f32.mrf.mxu0
      %v3953 = vadd.f32 0.0, %v3952
      %v3954 = vpop.f32.mrf.mxu0
      %v3955 = vpop.f32.mrf.mxu0
      %v3956 = vadd.f32 0.0, %v3955
      %v3957 = vpop.f32.mrf.mxu0
      %3958 = vdwg.mxu0
      %3959 = vrot.lane.b32.xlu0 %v1592, 72
      %v3960 = vpop.permute.xlu0 %3959
      %3961 = vrot.lane.b32.xlu0 %v1593, 72
      %v3962 = vpop.permute.xlu0 %3961
      %3963 = vrot.lane.b32.xlu0 %v1594, 72
      %v3964 = vpop.permute.xlu0 %3963
      %3965 = vrot.lane.b32.xlu0 %v1595, 72
      %v3966 = vpop.permute.xlu0 %3965
      %v3972 = vsel %vm1775, %v3866, 0
      %v3975 = vsel %vm1775, %v3867, 0
      %v3978 = vsel %vm1775, %v3868, 0
      %v3981 = vsel %vm1775, %v3869, 0
      %3983 = vmatprep.subr.bf16.mxu0 0
      %3984 = vmatpush1.bf16.msra.mxu0 0
      %3985 = vmatprep.subr.bf16.mxu0 0
      %3986 = vmatpush1.bf16.msra.mxu0 0
      %3987 = vmatprep.subr.bf16.mxu0 0
      %3988 = vmatpush1.bf16.msra.mxu0 0
      %3989 = vmatprep.subr.bf16.mxu0 0
      %3990 = vmatpush1.bf16.msra.mxu0 0
      %3991 = vmatprep.subr.bf16.mxu0 0
      %3992 = vmatpush1.bf16.msra.mxu0 %v3966
      %3993 = vmatprep.subr.bf16.mxu0 0
      %3994 = vmatpush1.bf16.msra.mxu0 %v3964
      %3995 = vmatprep.subr.bf16.mxu0 0
      %3996 = vmatpush1.bf16.msra.mxu0 %v3962
      %3997 = vmatprep.subr.bf16.mxu0 0
      %3998 = vmatpush1.bf16.msra.mxu0 %v3960
      %3999 = vmatprep.subr.bf16.mxu0 0
      %4000 = vmatpush2.bf16.msra.mxu0 0
      %4001 = vmatprep.subr.bf16.mxu0 0
      %4002 = vmatpush2.bf16.msra.mxu0 0
      %4003 = vmatprep.subr.bf16.mxu0 0
      %4004 = vmatpush2.bf16.msra.mxu0 0
      %4005 = vmatprep.subr.bf16.mxu0 0
      %4006 = vmatpush2.bf16.msra.mxu0 0
      %4007 = vmatprep.subr.bf16.mxu0 0
      %4008 = vmatpush2.bf16.msra.mxu0 0
      %4009 = vmatprep.subr.bf16.mxu0 0
      %4010 = vmatpush2.bf16.msra.mxu0 0
      %4011 = vmatprep.subr.bf16.mxu0 0
      %4012 = vmatpush2.bf16.msra.mxu0 0
      %4013 = vmatprep.subr.bf16.mxu0 0
      %4014 = vmatpush2.bf16.msra.mxu0 0
      %4015 = vmatprep.mubr.bf16.mxu0 0
      %4016 = vmatmul.mubr.bf16.gmra.mxu0 %v3972
      %v4017 = vpop.f32.mrf.mxu0
      %v4018 = vadd.f32 0.0, %v4017
      %v4019 = vpop.f32.mrf.mxu0
      %v4020 = vpop.f32.mrf.mxu0
      %v4021 = vadd.f32 0.0, %v4020
      %v4022 = vpop.f32.mrf.mxu0
      %4023 = vmatprep.mubr.bf16.mxu0 0
      %4024 = vmatmul.mubr.bf16.gmra.mxu0 %v3975
      %v4025 = vpop.f32.mrf.mxu0
      %v4026 = vadd.f32 0.0, %v4025
      %v4027 = vpop.f32.mrf.mxu0
      %v4028 = vpop.f32.mrf.mxu0
      %v4029 = vadd.f32 0.0, %v4028
      %v4030 = vpop.f32.mrf.mxu0
      %4031 = vmatprep.mubr.bf16.mxu0 0
      %4032 = vmatmul.mubr.bf16.gmra.mxu0 %v3978
      %v4033 = vpop.f32.mrf.mxu0
      %v4034 = vadd.f32 0.0, %v4033
      %v4035 = vpop.f32.mrf.mxu0
      %v4036 = vpop.f32.mrf.mxu0
      %v4037 = vadd.f32 0.0, %v4036
      %v4038 = vpop.f32.mrf.mxu0
      %4039 = vmatprep.mubr.bf16.mxu0 0
      %4040 = vmatmul.mubr.bf16.gmra.mxu0 %v3981
      %v4041 = vpop.f32.mrf.mxu0
      %v4042 = vadd.f32 0.0, %v4041
      %v4043 = vpop.f32.mrf.mxu0
      %v4044 = vpop.f32.mrf.mxu0
      %v4045 = vadd.f32 0.0, %v4044
      %v4046 = vpop.f32.mrf.mxu0
      %4047 = vdwg.mxu0
      %4064 = vrot.lane.b32.xlu0 %v3929, 24
      %v4065 = vpop.permute.xlu0 %4064
      %4066 = vrot.lane.b32.xlu0 %v3932, 24
      %v4067 = vpop.permute.xlu0 %4066
      %4068 = vrot.lane.b32.xlu0 %v3937, 24
      %v4069 = vpop.permute.xlu0 %4068
      %4070 = vrot.lane.b32.xlu0 %v3940, 24
      %v4071 = vpop.permute.xlu0 %4070
      %4072 = vrot.lane.b32.xlu0 %v3945, 24
      %v4073 = vpop.permute.xlu0 %4072
      %4074 = vrot.lane.b32.xlu0 %v3948, 24
      %v4075 = vpop.permute.xlu0 %4074
      %4076 = vrot.lane.b32.xlu0 %v3953, 24
      %v4077 = vpop.permute.xlu0 %4076
      %4078 = vrot.lane.b32.xlu0 %v3956, 24
      %v4079 = vpop.permute.xlu0 %4078
      %4080 = vrot.lane.b32.xlu0 %v4018, 24
      %v4081 = vpop.permute.xlu0 %4080
      %4082 = vrot.lane.b32.xlu0 %v4021, 24
      %v4083 = vpop.permute.xlu0 %4082
      %4084 = vrot.lane.b32.xlu0 %v4026, 24
      %v4085 = vpop.permute.xlu0 %4084
      %4086 = vrot.lane.b32.xlu0 %v4029, 24
      %v4087 = vpop.permute.xlu0 %4086
      %4088 = vrot.lane.b32.xlu0 %v4034, 24
      %v4089 = vpop.permute.xlu0 %4088
      %4090 = vrot.lane.b32.xlu0 %v4037, 24
      %v4091 = vpop.permute.xlu0 %4090
      %4092 = vrot.lane.b32.xlu0 %v4042, 24
      %v4093 = vpop.permute.xlu0 %4092
      %4094 = vrot.lane.b32.xlu0 %v4045, 24
      %v4095 = vpop.permute.xlu0 %4094
      %vm4112 = vcmask 261312
      %4113 = vst.msk [vmem:[#allocation2] sm:$0xff] %vm4112, %v4065
      %4114 = vst.msk [vmem:[#allocation2 + $0x8] sm:$0xff] %vm4112, %v4067
      %4115 = vst.msk [vmem:[#allocation2 + $0x10] sm:$0xff] %vm4112, %v4069
      %4116 = vst.msk [vmem:[#allocation2 + $0x18] sm:$0xff] %vm4112, %v4071
      %4117 = vst.msk [vmem:[#allocation2 + $0x20] sm:$0xff] %vm4112, %v4073
      %4118 = vst.msk [vmem:[#allocation2 + $0x28] sm:$0xff] %vm4112, %v4075
      %4119 = vst.msk [vmem:[#allocation2 + $0x30] sm:$0xff] %vm4112, %v4077
      %4120 = vst.msk [vmem:[#allocation2 + $0x38] sm:$0xff] %vm4112, %v4079
      %4121 = vst.msk [vmem:[#allocation2 + $0x40] sm:$0xff] %vm4112, %v4081
      %4122 = vst.msk [vmem:[#allocation2 + $0x48] sm:$0xff] %vm4112, %v4083
      %4123 = vst.msk [vmem:[#allocation2 + $0x50] sm:$0xff] %vm4112, %v4085
      %4124 = vst.msk [vmem:[#allocation2 + $0x58] sm:$0xff] %vm4112, %v4087
      %4125 = vst.msk [vmem:[#allocation2 + $0x60] sm:$0xff] %vm4112, %v4089
      %4126 = vst.msk [vmem:[#allocation2 + $0x68] sm:$0xff] %vm4112, %v4091
      %4127 = vst.msk [vmem:[#allocation2 + $0x70] sm:$0xff] %vm4112, %v4093
      %4128 = vst.msk [vmem:[#allocation2 + $0x78] sm:$0xff] %vm4112, %v4095
      %v4129 = vld [vmem:[#allocation2] sm:$0xff]
      %v4130 = vld [vmem:[#allocation2 + $0x8] sm:$0xff]
      %v4131 = vld [vmem:[#allocation2 + $0x10] sm:$0xff]
      %v4132 = vld [vmem:[#allocation2 + $0x18] sm:$0xff]
      %v4133 = vld [vmem:[#allocation2 + $0x20] sm:$0xff]
      %v4134 = vld [vmem:[#allocation2 + $0x28] sm:$0xff]
      %v4135 = vld [vmem:[#allocation2 + $0x30] sm:$0xff]
      %v4136 = vld [vmem:[#allocation2 + $0x38] sm:$0xff]
      %v4137 = vld [vmem:[#allocation2 + $0x40] sm:$0xff]
      %v4138 = vld [vmem:[#allocation2 + $0x48] sm:$0xff]
      %v4139 = vld [vmem:[#allocation2 + $0x50] sm:$0xff]
      %v4140 = vld [vmem:[#allocation2 + $0x58] sm:$0xff]
      %v4141 = vld [vmem:[#allocation2 + $0x60] sm:$0xff]
      %v4142 = vld [vmem:[#allocation2 + $0x68] sm:$0xff]
      %v4143 = vld [vmem:[#allocation2 + $0x70] sm:$0xff]
      %v4144 = vld [vmem:[#allocation2 + $0x78] sm:$0xff]
      %v4145 = vpack.c.bf16 %v4130, %v4129
      %v4146 = vpack.c.bf16 %v4132, %v4131
      %v4147 = vpack.c.bf16 %v4134, %v4133
      %v4148 = vpack.c.bf16 %v4136, %v4135
      %v4149 = vpack.c.bf16 %v4138, %v4137
      %v4150 = vpack.c.bf16 %v4140, %v4139
      %v4151 = vpack.c.bf16 %v4142, %v4141
      %v4152 = vpack.c.bf16 %v4144, %v4143
      %v4153 = vld [vmem:[%s9] sm:$0xf]
      %v4154 = vld [vmem:[%s9 + $0x4] sm:$0xf]
      %v4155 = vld [vmem:[%s9 + $0x8] sm:$0xf]
      %v4156 = vld [vmem:[%s9 + $0xc] sm:$0xf]
      %v4157 = vld [vmem:[%s10] sm:$0x1]
      %v4159 = vlaneseq
      %v4160 = vshrl.u32 %v4159, 7
      %v4161 = vsub.s32 0, %v4160
      %v4162 = vrot.slane %v4157, %v4161
      %v4168 = vunpack.c.l.b16 %v4153
      %v4169 = vunpack.c.l.b16 %v4154
      %v4170 = vunpack.c.l.b16 %v4155
      %v4171 = vunpack.c.l.b16 %v4156
      %v4172 = vpack.c.b16 %v4169, %v4168
      %v4173 = vpack.c.b16 %v4171, %v4170
      %v4177 = vsel %vm469, %v4145, 0
      %v4180 = vsel %vm469, %v4146, 0
      %v4183 = vsel %vm469, %v4147, 0
      %v4186 = vsel %vm469, %v4148, 0
      %v4189 = vsel %vm469, %v4149, 0
      %v4192 = vsel %vm469, %v4150, 0
      %v4195 = vsel %vm469, %v4151, 0
      %v4198 = vsel %vm469, %v4152, 0
      %4200 = vmatprep.subr.bf16.mxu0 0
      %4201 = vmatpush1.bf16.msra.mxu0 0
      %4202 = vmatprep.subr.bf16.mxu0 0
      %4203 = vmatpush1.bf16.msra.mxu0 0
      %4204 = vmatprep.subr.bf16.mxu0 0
      %4205 = vmatpush1.bf16.msra.mxu0 0
      %4206 = vmatprep.subr.bf16.mxu0 0
      %4207 = vmatpush1.bf16.msra.mxu0 0
      %4208 = vmatprep.subr.bf16.mxu0 0
      %4209 = vmatpush1.bf16.msra.mxu0 0
      %4210 = vmatprep.subr.bf16.mxu0 0
      %4211 = vmatpush1.bf16.msra.mxu0 0
      %4212 = vmatprep.subr.bf16.mxu0 0
      %4213 = vmatpush1.bf16.msra.mxu0 %v4173
      %4214 = vmatprep.subr.bf16.mxu0 0
      %4215 = vmatpush1.bf16.msra.mxu0 %v4172
      %4216 = vmatprep.subr.bf16.mxu0 0
      %4217 = vmatpush2.bf16.msra.mxu0 0
      %4218 = vmatprep.subr.bf16.mxu0 0
      %4219 = vmatpush2.bf16.msra.mxu0 0
      %4220 = vmatprep.subr.bf16.mxu0 0
      %4221 = vmatpush2.bf16.msra.mxu0 0
      %4222 = vmatprep.subr.bf16.mxu0 0
      %4223 = vmatpush2.bf16.msra.mxu0 0
      %4224 = vmatprep.subr.bf16.mxu0 0
      %4225 = vmatpush2.bf16.msra.mxu0 0
      %4226 = vmatprep.subr.bf16.mxu0 0
      %4227 = vmatpush2.bf16.msra.mxu0 0
      %4228 = vmatprep.subr.bf16.mxu0 0
      %4229 = vmatpush2.bf16.msra.mxu0 0
      %4230 = vmatprep.subr.bf16.mxu0 0
      %4231 = vmatpush2.bf16.msra.mxu0 0
      %4232 = vmatprep.mubr.bf16.mxu0 0
      %4233 = vmatmul.mubr.bf16.gmra.mxu0 %v4177
      %v4234 = vpop.f32.mrf.mxu0
      %v4235 = vadd.f32 %v4162, %v4234
      %v4236 = vpop.f32.mrf.mxu0
      %v4237 = vpop.f32.mrf.mxu0
      %v4238 = vadd.f32 %v4162, %v4237
      %v4239 = vpop.f32.mrf.mxu0
      %4240 = vmatprep.mubr.bf16.mxu0 0
      %4241 = vmatmul.mubr.bf16.gmra.mxu0 %v4180
      %v4242 = vpop.f32.mrf.mxu0
      %v4243 = vadd.f32 %v4162, %v4242
      %v4244 = vpop.f32.mrf.mxu0
      %v4245 = vpop.f32.mrf.mxu0
      %v4246 = vadd.f32 %v4162, %v4245
      %v4247 = vpop.f32.mrf.mxu0
      %4248 = vmatprep.mubr.bf16.mxu0 0
      %4249 = vmatmul.mubr.bf16.gmra.mxu0 %v4183
      %v4250 = vpop.f32.mrf.mxu0
      %v4251 = vadd.f32 %v4162, %v4250
      %v4252 = vpop.f32.mrf.mxu0
      %v4253 = vpop.f32.mrf.mxu0
      %v4254 = vadd.f32 %v4162, %v4253
      %v4255 = vpop.f32.mrf.mxu0
      %4256 = vmatprep.mubr.bf16.mxu0 0
      %4257 = vmatmul.mubr.bf16.gmra.mxu0 %v4186
      %v4258 = vpop.f32.mrf.mxu0
      %v4259 = vadd.f32 %v4162, %v4258
      %v4260 = vpop.f32.mrf.mxu0
      %v4261 = vpop.f32.mrf.mxu0
      %v4262 = vadd.f32 %v4162, %v4261
      %v4263 = vpop.f32.mrf.mxu0
      %4264 = vmatprep.mubr.bf16.mxu0 0
      %4265 = vmatmul.mubr.bf16.gmra.mxu0 %v4189
      %v4266 = vpop.f32.mrf.mxu0
      %v4267 = vadd.f32 %v4162, %v4266
      %v4268 = vpop.f32.mrf.mxu0
      %v4269 = vpop.f32.mrf.mxu0
      %v4270 = vadd.f32 %v4162, %v4269
      %v4271 = vpop.f32.mrf.mxu0
      %4272 = vmatprep.mubr.bf16.mxu0 0
      %4273 = vmatmul.mubr.bf16.gmra.mxu0 %v4192
      %v4274 = vpop.f32.mrf.mxu0
      %v4275 = vadd.f32 %v4162, %v4274
      %v4276 = vpop.f32.mrf.mxu0
      %v4277 = vpop.f32.mrf.mxu0
      %v4278 = vadd.f32 %v4162, %v4277
      %v4279 = vpop.f32.mrf.mxu0
      %4280 = vmatprep.mubr.bf16.mxu0 0
      %4281 = vmatmul.mubr.bf16.gmra.mxu0 %v4195
      %v4282 = vpop.f32.mrf.mxu0
      %v4283 = vadd.f32 %v4162, %v4282
      %v4284 = vpop.f32.mrf.mxu0
      %v4285 = vpop.f32.mrf.mxu0
      %v4286 = vadd.f32 %v4162, %v4285
      %v4287 = vpop.f32.mrf.mxu0
      %4288 = vmatprep.mubr.bf16.mxu0 0
      %4289 = vmatmul.mubr.bf16.gmra.mxu0 %v4198
      %v4290 = vpop.f32.mrf.mxu0
      %v4291 = vadd.f32 %v4162, %v4290
      %v4292 = vpop.f32.mrf.mxu0
      %v4293 = vpop.f32.mrf.mxu0
      %v4294 = vadd.f32 %v4162, %v4293
      %v4295 = vpop.f32.mrf.mxu0
      %4296 = vdwg.mxu0
      %v4297 = vsub.f32 %v4235, %v421
      %v4298 = vsub.f32 %v4238, %v422
      %v4299 = vsub.f32 %v4243, %v423
      %v4300 = vsub.f32 %v4246, %v424
      %v4301 = vsub.f32 %v4251, %v425
      %v4302 = vsub.f32 %v4254, %v426
      %v4303 = vsub.f32 %v4259, %v427
      %v4304 = vsub.f32 %v4262, %v428
      %v4305 = vsub.f32 %v4267, %v429
      %v4306 = vsub.f32 %v4270, %v430
      %v4307 = vsub.f32 %v4275, %v431
      %v4308 = vsub.f32 %v4278, %v432
      %v4309 = vsub.f32 %v4283, %v433
      %v4310 = vsub.f32 %v4286, %v434
      %v4311 = vsub.f32 %v4291, %v435
      %v4312 = vsub.f32 %v4294, %v436
      %v4313 = vmul.f32 %v758, %v4297
      %v4314 = vmul.f32 %v759, %v4298
      %v4315 = vmul.f32 %v760, %v4299
      %v4316 = vmul.f32 %v761, %v4300
      %v4317 = vmul.f32 %v762, %v4301
      %v4318 = vmul.f32 %v763, %v4302
      %v4319 = vmul.f32 %v764, %v4303
      %v4320 = vmul.f32 %v765, %v4304
      %v4321 = vmul.f32 %v766, %v4305
      %v4322 = vmul.f32 %v767, %v4306
      %v4323 = vmul.f32 %v768, %v4307
      %v4324 = vmul.f32 %v769, %v4308
      %v4325 = vmul.f32 %v770, %v4309
      %v4326 = vmul.f32 %v771, %v4310
      %v4327 = vmul.f32 %v772, %v4311
      %v4328 = vmul.f32 %v773, %v4312
      %v4329 = vadd.f32 %v421, %v4313
      %v4330 = vadd.f32 %v422, %v4314
      %v4331 = vadd.f32 %v423, %v4315
      %v4332 = vadd.f32 %v424, %v4316
      %v4333 = vadd.f32 %v425, %v4317
      %v4334 = vadd.f32 %v426, %v4318
      %v4335 = vadd.f32 %v427, %v4319
      %v4336 = vadd.f32 %v428, %v4320
      %v4337 = vadd.f32 %v429, %v4321
      %v4338 = vadd.f32 %v430, %v4322
      %v4339 = vadd.f32 %v431, %v4323
      %v4340 = vadd.f32 %v432, %v4324
      %v4341 = vadd.f32 %v433, %v4325
      %v4342 = vadd.f32 %v434, %v4326
      %v4343 = vadd.f32 %v435, %v4327
      %v4344 = vadd.f32 %v436, %v4328
      %4345 = vst.msk [vmem:[%s418] sm:$0xff] %vm469, %v4329
      %4346 = vst.msk [vmem:[%s418 + $0x8] sm:$0xff] %vm469, %v4330
      %4347 = vst.msk [vmem:[%s418 + $0x10] sm:$0xff] %vm469, %v4331
      %4348 = vst.msk [vmem:[%s418 + $0x18] sm:$0xff] %vm469, %v4332
      %4349 = vst.msk [vmem:[%s418 + $0x20] sm:$0xff] %vm469, %v4333
      %4350 = vst.msk [vmem:[%s418 + $0x28] sm:$0xff] %vm469, %v4334
      %4351 = vst.msk [vmem:[%s418 + $0x30] sm:$0xff] %vm469, %v4335
      %4352 = vst.msk [vmem:[%s418 + $0x38] sm:$0xff] %vm469, %v4336
      %4353 = vst.msk [vmem:[%s418 + $0x40] sm:$0xff] %vm469, %v4337
      %4354 = vst.msk [vmem:[%s418 + $0x48] sm:$0xff] %vm469, %v4338
      %4355 = vst.msk [vmem:[%s418 + $0x50] sm:$0xff] %vm469, %v4339
      %4356 = vst.msk [vmem:[%s418 + $0x58] sm:$0xff] %vm469, %v4340
      %4357 = vst.msk [vmem:[%s418 + $0x60] sm:$0xff] %vm469, %v4341
      %4358 = vst.msk [vmem:[%s418 + $0x68] sm:$0xff] %vm469, %v4342
      %4359 = vst.msk [vmem:[%s418 + $0x70] sm:$0xff] %vm469, %v4343
      %4360 = vst.msk [vmem:[%s418 + $0x78] sm:$0xff] %vm469, %v4344
      %s4361 = smul.u32 2, %s22
      %p4362 = scmp.lt.s32.totalorder %s4361, 7
      %s4363 = scalar_select %p4362, %s4361, 7
      %s4364 = smul.addr %s4363, 8
      %s4365 = smul.addr %s4364, 8
      %s4366 = scalar_lea.vmem %s11, %s4365
      // Predicated region
      $region65: #{local_cross_attention.1} parent=63 // pred_check
        %p4367 = pneg %p281
      $region66: #{local_cross_attention.1} parent=63 // pred_check_branch
        %4369 = sbr.rel (%p4367) target = $region68
      $region67: #{local_cross_attention.1} parent=63 // pred_region
        %s4370 = smul.u32 2, %s22
      $region68: #{local_cross_attention.1} parent=63 // pred_fallthru
        _
    $region64: #{local_cross_attention.1} parent=5 // pred_fallthru
      _
    %p4371 = scmp.le.s32.totalorder 2, %s17
    // Predicated region
    $region69: #{local_cross_attention.1} parent=5 // pred_check
      %p4372 = pneg %p4371
    $region70: #{local_cross_attention.1} parent=5 // pred_check_branch
      %4374 = sbr.rel (%p4372) target = $region72
    $region71: #{local_cross_attention.1} parent=5 // pred_region
      %s4375 = ssub.s32 %s17, 2
      // Predicated region
      $region73: #{local_cross_attention.1} parent=71 // pred_check
        %p4376 = pneg %p287
      $region74: #{local_cross_attention.1} parent=71 // pred_check_branch
        %4378 = sbr.rel (%p4376) target = $region76
      $region75: #{local_cross_attention.1} parent=71 // pred_region
        %s4379 = smul.u32 2, %s23
        %p4380 = scmp.lt.s32.totalorder %s4379, 7
        %s4381 = scalar_select %p4380, %s4379, 7
        %s4382 = smul.addr %s4381, 8
        %s4383 = smul.addr %s4382, 8
        %s4384 = scalar_lea.vmem %s11, %s4383
      $region76: #{local_cross_attention.1} parent=71 // pred_fallthru
        _
    $region72: #{local_cross_attention.1} parent=5 // pred_fallthru
      _
  $region6: #{local_cross_attention.1} parent=0 // loop_footer
    %s21 = sadd.s32 1, %s17
  $region7: #{local_cross_attention.1} parent=0 // loop_footer_branch
    %16 = sbr.rel target = $region3
  $region8: #{local_cross_attention.1} parent=0 // loop_exit
    _

</llo_original>
